<compile_context>
chip_gen: v6e
topology: v6e:2x2x1
jax: 0.10.0
libtpu: 0.0.40
codegen_flags: <defaults>
</compile_context>

<pallas_src>
import jax
import jax.numpy as jnp
from jax.experimental import pallas as pl
from jax.experimental.pallas import tpu as pltpu

STATE_DIM = 4          # cartpole observation dim
ACTION_DIM = 2         # cartpole action dim
HIDDEN = 300           # logical hidden size (nn.Linear(state_dim, 300))
HIDDEN_PAD = 384       # padded to a lane multiple (3 * 128)
LN_EPS = 1e-5          # nn.LayerNorm default
MIN_BATCH_TILE = 128   # lower bound on rows per grid step
MAX_BATCH_TILE = 1024  # ~1.5 MiB per (TB, HIDDEN_PAD) f32 temporary -> VMEM-safe everywhere


def actor_kernel(s_ref, w1_ref, b1_ref, gamma_ref, beta_ref, mask_ref,
                 w2t_ref, b2_ref, out_ref):
    s = s_ref[...]                                   # (TB, STATE_DIM)

    # ---- fc1 + relu: K=4 is a degenerate MXU shape -> unrolled VPU FMAs ----
    h = s[:, 0:1] * w1_ref[0:1, :]                   # (TB, HIDDEN_PAD)
    for k in range(1, STATE_DIM):
        h = h + s[:, k:k + 1] * w1_ref[k:k + 1, :]
    h = h + b1_ref[...]
    h = jnp.maximum(h, 0.0)                          # padded cols stay exactly 0

    # ---- LayerNorm over the logical 300 hidden features (two-pass) ---------
    inv_n = 1.0 / float(HIDDEN)                      # divisor stays 300, not 384
    mean = jnp.sum(h, axis=-1, keepdims=True) * inv_n
    d = (h - mean) * mask_ref[...]                   # mask kills padded columns
    var = jnp.sum(d * d, axis=-1, keepdims=True) * inv_n
    inv_std = jax.lax.rsqrt(var + LN_EPS)            # EUP
    # gamma/beta are zero in padded columns -> hn padded columns are exactly 0.
    hn = d * inv_std * gamma_ref[...] + beta_ref[...]

    # ---- fc2 (N=2 -> VPU multiply + lane reduction) + softmax ---------------
    logits = []
    for j in range(ACTION_DIM):
        lj = jnp.sum(hn * w2t_ref[j:j + 1, :], axis=-1, keepdims=True)  # (TB, 1)
        logits.append(lj + b2_ref[:, j:j + 1])

    if ACTION_DIM == 2:
        # softmax of two logits == sigmoid of their difference: exact
        # normalization (p0 + p1 == 1 to ~1 ulp), one exp, no reciprocal approx.
        p0 = 1.0 / (1.0 + jnp.exp(logits[1] - logits[0]))
        probs = [p0, 1.0 - p0]
    else:
        m = logits[0]
        for lj in logits[1:]:
            m = jnp.maximum(m, lj)
        exps = [jnp.exp(lj - m) for lj in logits]
        denom = exps[0]
        for e in exps[1:]:
            denom = denom + e
        probs = [e / denom for e in exps]            # exact division

    out_ref[...] = jnp.concatenate(probs, axis=-1)   # one (TB, ACTION_DIM) store


def _choose_batch_tile(batch):
    """Rows per grid step: aim for >=2 steps (v7x megacore sharding) with large
    tiles (amortize the ~0.35us per-step cost); multiple of 128, <= 1024."""
    tile = -(-batch // 2)                            # cdiv(batch, 2)
    tile = max(MIN_BATCH_TILE, min(MAX_BATCH_TILE, tile))
    return ((tile + 127) // 128) * 128


def actor_forward(s, w1p, b1p, gammap, betap, maskp, w2t, b2p, *,
                  batch_tile=None):
    """s: (B, STATE_DIM) f32 -> (B, ACTION_DIM) f32 softmax probabilities.

    Parameters must already be in kernel layout (see prepare_params)."""
    B = s.shape[0]
    if batch_tile is None:
        batch_tile = _choose_batch_tile(B)
    num_tiles = pl.cdiv(B, batch_tile)
    Bp = num_tiles * batch_tile
    if Bp != B:
        s = jnp.pad(s, ((0, Bp - B), (0, 0)))        # padded rows are discarded

    resident = lambda i: (0, 0)                      # weights stay VMEM-resident
    out = pl.pallas_call(
        actor_kernel,
        out_shape=jax.ShapeDtypeStruct((Bp, ACTION_DIM), jnp.float32),
        grid_spec=pltpu.PrefetchScalarGridSpec(
            num_scalar_prefetch=0,
            grid=(num_tiles,),
            in_specs=[
                pl.BlockSpec((batch_tile, STATE_DIM), lambda i: (i, 0)),   # s
                pl.BlockSpec((STATE_DIM, HIDDEN_PAD), resident),           # w1
                pl.BlockSpec((1, HIDDEN_PAD), resident),                   # b1
                pl.BlockSpec((1, HIDDEN_PAD), resident),                   # gamma
                pl.BlockSpec((1, HIDDEN_PAD), resident),                   # beta
                pl.BlockSpec((1, HIDDEN_PAD), resident),                   # LN mask
                pl.BlockSpec((ACTION_DIM, HIDDEN_PAD), resident),          # w2^T
                pl.BlockSpec((1, ACTION_DIM), resident),                   # b2
            ],
            out_specs=pl.BlockSpec((batch_tile, ACTION_DIM), lambda i: (i, 0)),
        ),
        compiler_params=pltpu.CompilerParams(
            dimension_semantics=("parallel",)),
    )(s, w1p, b1p, gammap, betap, maskp, w2t, b2p)
    return out[:B]


def init_params(key):
    """PyTorch-Linear-style init; linear weights stored as (in, out)."""
    k1, k2, k3, k4 = jax.random.split(key, 4)
    bound1 = 1.0 / jnp.sqrt(STATE_DIM)
    bound2 = 1.0 / jnp.sqrt(HIDDEN)
    w1 = jax.random.uniform(k1, (STATE_DIM, HIDDEN), jnp.float32, -bound1, bound1)
    b1 = jax.random.uniform(k2, (HIDDEN,), jnp.float32, -bound1, bound1)
    w2 = jax.random.uniform(k3, (HIDDEN, ACTION_DIM), jnp.float32, -bound2, bound2)
    b2 = jax.random.uniform(k4, (ACTION_DIM,), jnp.float32, -bound2, bound2)
    gamma = jnp.ones((HIDDEN,), jnp.float32)   # LayerNorm weight init
    beta = jnp.zeros((HIDDEN,), jnp.float32)   # LayerNorm bias init
    return w1, b1, gamma, beta, w2, b2


def prepare_params(w1, b1, gamma, beta, w2, b2):
    """Kernel layout: zero-pad hidden 300->384, pre-transpose w2 to (A, H_pad),
    build the 0/1 column mask used by the LayerNorm statistics."""
    pad = HIDDEN_PAD - HIDDEN
    w1p = jnp.pad(w1, ((0, 0), (0, pad)))
    b1p = jnp.pad(b1, (0, pad)).reshape(1, HIDDEN_PAD)
    gammap = jnp.pad(gamma, (0, pad)).reshape(1, HIDDEN_PAD)
    betap = jnp.pad(beta, (0, pad)).reshape(1, HIDDEN_PAD)
    maskp = jnp.pad(jnp.ones((HIDDEN,), jnp.float32), (0, pad)).reshape(1, HIDDEN_PAD)
    w2t = jnp.pad(w2.T, ((0, 0), (0, pad)))           # (ACTION_DIM, HIDDEN_PAD)
    b2p = b2.reshape(1, ACTION_DIM)
    return w1p, b1p, gammap, betap, maskp, w2t, b2p


def actor_ref(s, w1, b1, gamma, beta, w2, b2):
    """Pure-JAX reference of the PyTorch forward (full-f32 matmuls)."""
    hp = jax.lax.Precision.HIGHEST
    h = jnp.maximum(jnp.dot(s, w1, precision=hp) + b1, 0.0)
    mean = jnp.mean(h, axis=-1, keepdims=True)
    var = jnp.mean((h - mean) ** 2, axis=-1, keepdims=True)
    hn = (h - mean) / jnp.sqrt(var + LN_EPS) * gamma + beta
    return jax.nn.softmax(jnp.dot(hn, w2, precision=hp) + b2, axis=-1)


if __name__ == "__main__":
    key = jax.random.PRNGKey(0)
    pkey, skey = jax.random.split(key)

    params = init_params(pkey)
    kparams = prepare_params(*params)

    # Many rollout states evaluated in ONE pallas_call (amortizes launch/DMA
    # overhead); 500 is deliberately not a multiple of the row tile to exercise
    # the batch-padding path.  Tile is chosen as ~B/2 -> 2 grid steps of 256.
    batch = 500
    s = jax.random.normal(skey, (batch, STATE_DIM), jnp.float32)

    out = jax.block_until_ready(actor_forward(s, *kparams))
    ref = actor_ref(s, *params)

    assert out.shape == (batch, ACTION_DIM)
    # sigmoid-form 2-way softmax: rows sum to 1 to ~1 ulp.
    assert jnp.allclose(jnp.sum(out, axis=-1), 1.0, atol=1e-6)
    assert jnp.allclose(out, ref, atol=1e-4, rtol=1e-4)

    print("KERNEL_OK")
</pallas_src>

<mosaic_0001>
module attributes {stable_mosaic.version = 11 : i64} {
  func.func @actor_kernel(%arg0: i32, %arg1: memref<256x4xf32, #tpu.memory_space<vmem>>, %arg2: memref<4x384xf32, #tpu.memory_space<vmem>>, %arg3: memref<1x384xf32, #tpu.memory_space<vmem>>, %arg4: memref<1x384xf32, #tpu.memory_space<vmem>>, %arg5: memref<1x384xf32, #tpu.memory_space<vmem>>, %arg6: memref<1x384xf32, #tpu.memory_space<vmem>>, %arg7: memref<2x384xf32, #tpu.memory_space<vmem>>, %arg8: memref<1x2xf32, #tpu.memory_space<vmem>>, %arg9: memref<256x2xf32, #tpu.memory_space<vmem>>) attributes {dimension_semantics = [#tpu.dimension_semantics<parallel>], iteration_bounds = array<i64: 2>, scalar_prefetch = 0 : i64, scratch_operands = 0 : i64, tpu.core_type = #tpu.core_type<tc>, window_params = [{transform_indices = @transform_0, window_bounds = array<i64: 256, 4>}, {pipeline_mode = #tpu.pipeline_mode<synchronous>, transform_indices = @transform_1, window_bounds = array<i64: 4, 384>}, {pipeline_mode = #tpu.pipeline_mode<synchronous>, transform_indices = @transform_2, window_bounds = array<i64: 1, 384>}, {pipeline_mode = #tpu.pipeline_mode<synchronous>, transform_indices = @transform_3, window_bounds = array<i64: 1, 384>}, {pipeline_mode = #tpu.pipeline_mode<synchronous>, transform_indices = @transform_4, window_bounds = array<i64: 1, 384>}, {pipeline_mode = #tpu.pipeline_mode<synchronous>, transform_indices = @transform_5, window_bounds = array<i64: 1, 384>}, {pipeline_mode = #tpu.pipeline_mode<synchronous>, transform_indices = @transform_6, window_bounds = array<i64: 2, 384>}, {pipeline_mode = #tpu.pipeline_mode<synchronous>, transform_indices = @transform_7, window_bounds = array<i64: 1, 2>}, {transform_indices = @transform_8, window_bounds = array<i64: 256, 2>}]} {
    %c0 = arith.constant 0 : index
    %c0_0 = arith.constant 0 : index
    %0 = vector.load %arg1[%c0, %c0_0] : memref<256x4xf32, #tpu.memory_space<vmem>>, vector<256x4xf32>
    %1 = vector.extract_strided_slice %0 {offsets = [0, 0], sizes = [256, 1], strides = [1, 1]} : vector<256x4xf32> to vector<256x1xf32>
    %c0_1 = arith.constant 0 : index
    %c0_2 = arith.constant 0 : index
    %2 = vector.load %arg2[%c0_1, %c0_2] : memref<4x384xf32, #tpu.memory_space<vmem>>, vector<1x384xf32>
    %3 = vector.broadcast %1 : vector<256x1xf32> to vector<256x384xf32>
    %4 = vector.broadcast %2 : vector<1x384xf32> to vector<256x384xf32>
    %5 = arith.mulf %3, %4 : vector<256x384xf32>
    %6 = vector.extract_strided_slice %0 {offsets = [0, 1], sizes = [256, 1], strides = [1, 1]} : vector<256x4xf32> to vector<256x1xf32>
    %c1 = arith.constant 1 : index
    %c0_3 = arith.constant 0 : index
    %7 = vector.load %arg2[%c1, %c0_3] : memref<4x384xf32, #tpu.memory_space<vmem>>, vector<1x384xf32>
    %8 = vector.broadcast %6 : vector<256x1xf32> to vector<256x384xf32>
    %9 = vector.broadcast %7 : vector<1x384xf32> to vector<256x384xf32>
    %10 = arith.mulf %8, %9 : vector<256x384xf32>
    %11 = arith.addf %5, %10 : vector<256x384xf32>
    %12 = vector.extract_strided_slice %0 {offsets = [0, 2], sizes = [256, 1], strides = [1, 1]} : vector<256x4xf32> to vector<256x1xf32>
    %c2 = arith.constant 2 : index
    %c0_4 = arith.constant 0 : index
    %13 = vector.load %arg2[%c2, %c0_4] : memref<4x384xf32, #tpu.memory_space<vmem>>, vector<1x384xf32>
    %14 = vector.broadcast %12 : vector<256x1xf32> to vector<256x384xf32>
    %15 = vector.broadcast %13 : vector<1x384xf32> to vector<256x384xf32>
    %16 = arith.mulf %14, %15 : vector<256x384xf32>
    %17 = arith.addf %11, %16 : vector<256x384xf32>
    %18 = vector.extract_strided_slice %0 {offsets = [0, 3], sizes = [256, 1], strides = [1, 1]} : vector<256x4xf32> to vector<256x1xf32>
    %c3 = arith.constant 3 : index
    %c0_5 = arith.constant 0 : index
    %19 = vector.load %arg2[%c3, %c0_5] : memref<4x384xf32, #tpu.memory_space<vmem>>, vector<1x384xf32>
    %20 = vector.broadcast %18 : vector<256x1xf32> to vector<256x384xf32>
    %21 = vector.broadcast %19 : vector<1x384xf32> to vector<256x384xf32>
    %22 = arith.mulf %20, %21 : vector<256x384xf32>
    %23 = arith.addf %17, %22 : vector<256x384xf32>
    %c0_6 = arith.constant 0 : index
    %c0_7 = arith.constant 0 : index
    %24 = vector.load %arg3[%c0_6, %c0_7] : memref<1x384xf32, #tpu.memory_space<vmem>>, vector<1x384xf32>
    %25 = vector.broadcast %24 : vector<1x384xf32> to vector<256x384xf32>
    %26 = arith.addf %23, %25 : vector<256x384xf32>
    %cst = arith.constant 0.000000e+00 : f32
    %27 = vector.broadcast %cst : f32 to vector<256x384xf32>
    %28 = arith.maximumf %26, %27 : vector<256x384xf32>
    %cst_8 = arith.constant dense<0.000000e+00> : vector<256xf32>
    %29 = vector.multi_reduction <add>, %28, %cst_8 [1] : vector<256x384xf32> to vector<256xf32>
    %30 = vector.shape_cast %29 : vector<256xf32> to vector<256x1xf32>
    %cst_9 = arith.constant 0.00333333341 : f32
    %31 = vector.broadcast %cst_9 : f32 to vector<256x1xf32>
    %32 = arith.mulf %30, %31 : vector<256x1xf32>
    %33 = vector.broadcast %32 : vector<256x1xf32> to vector<256x384xf32>
    %34 = arith.subf %28, %33 : vector<256x384xf32>
    %c0_10 = arith.constant 0 : index
    %c0_11 = arith.constant 0 : index
    %35 = vector.load %arg6[%c0_10, %c0_11] : memref<1x384xf32, #tpu.memory_space<vmem>>, vector<1x384xf32>
    %36 = vector.broadcast %35 : vector<1x384xf32> to vector<256x384xf32>
    %37 = arith.mulf %34, %36 : vector<256x384xf32>
    %38 = arith.mulf %37, %37 : vector<256x384xf32>
    %cst_12 = arith.constant dense<0.000000e+00> : vector<256xf32>
    %39 = vector.multi_reduction <add>, %38, %cst_12 [1] : vector<256x384xf32> to vector<256xf32>
    %40 = vector.shape_cast %39 : vector<256xf32> to vector<256x1xf32>
    %cst_13 = arith.constant 0.00333333341 : f32
    %41 = vector.broadcast %cst_13 : f32 to vector<256x1xf32>
    %42 = arith.mulf %40, %41 : vector<256x1xf32>
    %cst_14 = arith.constant 9.99999974E-6 : f32
    %43 = vector.broadcast %cst_14 : f32 to vector<256x1xf32>
    %44 = arith.addf %42, %43 : vector<256x1xf32>
    %45 = math.rsqrt %44 : vector<256x1xf32>
    %46 = vector.broadcast %45 : vector<256x1xf32> to vector<256x384xf32>
    %47 = arith.mulf %37, %46 : vector<256x384xf32>
    %c0_15 = arith.constant 0 : index
    %c0_16 = arith.constant 0 : index
    %48 = vector.load %arg4[%c0_15, %c0_16] : memref<1x384xf32, #tpu.memory_space<vmem>>, vector<1x384xf32>
    %49 = vector.broadcast %48 : vector<1x384xf32> to vector<256x384xf32>
    %50 = arith.mulf %47, %49 : vector<256x384xf32>
    %c0_17 = arith.constant 0 : index
    %c0_18 = arith.constant 0 : index
    %51 = vector.load %arg5[%c0_17, %c0_18] : memref<1x384xf32, #tpu.memory_space<vmem>>, vector<1x384xf32>
    %52 = vector.broadcast %51 : vector<1x384xf32> to vector<256x384xf32>
    %53 = arith.addf %50, %52 : vector<256x384xf32>
    %c0_19 = arith.constant 0 : index
    %c0_20 = arith.constant 0 : index
    %54 = vector.load %arg7[%c0_19, %c0_20] : memref<2x384xf32, #tpu.memory_space<vmem>>, vector<1x384xf32>
    %55 = vector.broadcast %54 : vector<1x384xf32> to vector<256x384xf32>
    %56 = arith.mulf %53, %55 : vector<256x384xf32>
    %cst_21 = arith.constant dense<0.000000e+00> : vector<256xf32>
    %57 = vector.multi_reduction <add>, %56, %cst_21 [1] : vector<256x384xf32> to vector<256xf32>
    %58 = vector.shape_cast %57 : vector<256xf32> to vector<256x1xf32>
    %c0_22 = arith.constant 0 : index
    %c0_23 = arith.constant 0 : index
    %59 = vector.load %arg8[%c0_22, %c0_23] : memref<1x2xf32, #tpu.memory_space<vmem>>, vector<1x1xf32>
    %60 = vector.broadcast %59 : vector<1x1xf32> to vector<256x1xf32>
    %61 = arith.addf %58, %60 : vector<256x1xf32>
    %c1_24 = arith.constant 1 : index
    %c0_25 = arith.constant 0 : index
    %62 = vector.load %arg7[%c1_24, %c0_25] : memref<2x384xf32, #tpu.memory_space<vmem>>, vector<1x384xf32>
    %63 = vector.broadcast %62 : vector<1x384xf32> to vector<256x384xf32>
    %64 = arith.mulf %53, %63 : vector<256x384xf32>
    %cst_26 = arith.constant dense<0.000000e+00> : vector<256xf32>
    %65 = vector.multi_reduction <add>, %64, %cst_26 [1] : vector<256x384xf32> to vector<256xf32>
    %66 = vector.shape_cast %65 : vector<256xf32> to vector<256x1xf32>
    %c0_27 = arith.constant 0 : index
    %c1_28 = arith.constant 1 : index
    %67 = vector.load %arg8[%c0_27, %c1_28] : memref<1x2xf32, #tpu.memory_space<vmem>>, vector<1x1xf32>
    %68 = vector.broadcast %67 : vector<1x1xf32> to vector<256x1xf32>
    %69 = arith.addf %66, %68 : vector<256x1xf32>
    %70 = arith.subf %69, %61 : vector<256x1xf32>
    %71 = math.exp %70 : vector<256x1xf32>
    %cst_29 = arith.constant 1.000000e+00 : f32
    %72 = vector.broadcast %cst_29 : f32 to vector<256x1xf32>
    %73 = arith.addf %72, %71 : vector<256x1xf32>
    %cst_30 = arith.constant 1.000000e+00 : f32
    %74 = vector.broadcast %cst_30 : f32 to vector<256x1xf32>
    %75 = arith.divf %74, %73 : vector<256x1xf32>
    %cst_31 = arith.constant 1.000000e+00 : f32
    %76 = vector.broadcast %cst_31 : f32 to vector<256x1xf32>
    %77 = arith.subf %76, %75 : vector<256x1xf32>
    %78 = tpu.concatenate %75, %77 in 1 : vector<256x1xf32>, vector<256x1xf32> -> vector<256x2xf32>
    %c0_32 = arith.constant 0 : index
    %c0_33 = arith.constant 0 : index
    %79 = vector.load %arg9[%c0_32, %c0_33] : memref<256x2xf32, #tpu.memory_space<vmem>>, vector<256x2xf32>
    tpu.vector_store %arg9[%c0_32, %c0_33], %78 {strides = array<i32>} : memref<256x2xf32, #tpu.memory_space<vmem>>, vector<256x2xf32>,
    return
  }
  func.func @transform_0(%arg0: i32) -> (i32, i32) {
    %c0_i32 = arith.constant 0 : i32
    %c0_i32_0 = arith.constant 0 : i32
    return %arg0, %c0_i32 : i32, i32
  }
  func.func @transform_1(%arg0: i32) -> (i32, i32) {
    %c0_i32 = arith.constant 0 : i32
    %c0_i32_0 = arith.constant 0 : i32
    %c0_i32_1 = arith.constant 0 : i32
    return %c0_i32, %c0_i32_0 : i32, i32
  }
  func.func @transform_2(%arg0: i32) -> (i32, i32) {
    %c0_i32 = arith.constant 0 : i32
    %c0_i32_0 = arith.constant 0 : i32
    %c0_i32_1 = arith.constant 0 : i32
    return %c0_i32, %c0_i32_0 : i32, i32
  }
  func.func @transform_3(%arg0: i32) -> (i32, i32) {
    %c0_i32 = arith.constant 0 : i32
    %c0_i32_0 = arith.constant 0 : i32
    %c0_i32_1 = arith.constant 0 : i32
    return %c0_i32, %c0_i32_0 : i32, i32
  }
  func.func @transform_4(%arg0: i32) -> (i32, i32) {
    %c0_i32 = arith.constant 0 : i32
    %c0_i32_0 = arith.constant 0 : i32
    %c0_i32_1 = arith.constant 0 : i32
    return %c0_i32, %c0_i32_0 : i32, i32
  }
  func.func @transform_5(%arg0: i32) -> (i32, i32) {
    %c0_i32 = arith.constant 0 : i32
    %c0_i32_0 = arith.constant 0 : i32
    %c0_i32_1 = arith.constant 0 : i32
    return %c0_i32, %c0_i32_0 : i32, i32
  }
  func.func @transform_6(%arg0: i32) -> (i32, i32) {
    %c0_i32 = arith.constant 0 : i32
    %c0_i32_0 = arith.constant 0 : i32
    %c0_i32_1 = arith.constant 0 : i32
    return %c0_i32, %c0_i32_0 : i32, i32
  }
  func.func @transform_7(%arg0: i32) -> (i32, i32) {
    %c0_i32 = arith.constant 0 : i32
    %c0_i32_0 = arith.constant 0 : i32
    %c0_i32_1 = arith.constant 0 : i32
    return %c0_i32, %c0_i32_0 : i32, i32
  }
  func.func @transform_8(%arg0: i32) -> (i32, i32) {
    %c0_i32 = arith.constant 0 : i32
    %c0_i32_0 = arith.constant 0 : i32
    return %arg0, %c0_i32 : i32, i32
  }
}

</mosaic_0001>

<llo_original>
// kernel: tpu_custom_call.1
$region0: #{tpu_custom_call.1}
  #allocation0 [shape = 'u32[]', space=smem, size = 0x4, offset = 0x4, fixed_abs, tag = 'smem constant byte address 0x4 - core index']
  #allocation1 [shape = 'u32[144,128]{1,0:T(1,128)}', space=vmem, size = 0x12000, scoped, tag = 'internal scratch']
  %s0 = inlined_call_operand.vmem [shape: f32[512,4], index: 0, kind: input, shape index: {}]
  %s1 = inlined_call_operand.vmem [shape: f32[4,384], index: 1, kind: input, shape index: {}]
  %s2 = inlined_call_operand.vmem [shape: f32[1,384], index: 2, kind: input, shape index: {}]
  %s3 = inlined_call_operand.vmem [shape: f32[1,384], index: 3, kind: input, shape index: {}]
  %s4 = inlined_call_operand.vmem [shape: f32[1,384], index: 4, kind: input, shape index: {}]
  %s5 = inlined_call_operand.vmem [shape: f32[1,384], index: 5, kind: input, shape index: {}]
  %s6 = inlined_call_operand.vmem [shape: f32[2,384], index: 6, kind: input, shape index: {}]
  %s7 = inlined_call_operand.vmem [shape: f32[1,2], index: 7, kind: input, shape index: {}]
  %s8 = inlined_call_operand.vmem [shape: f32[512,2], index: 8, kind: output, shape index: {}]
  %s9 = sld [smem:[#allocation0]]
  $region65: #{tpu_custom_call.1} parent=0
    _
  %s11 = ssub.s32 1, %s9
  %s12 = scalar_select 0, %s11, %s9
  loop: start=0, step=1, limit=4
  $region2: #{tpu_custom_call.1} parent=0 // loop_pre_header
    _
  $region3: #{tpu_custom_call.1} parent=0 // loop_header
    %s14 = sphi 0, %s18
    %p15 = scmp.ge.s32.totalorder %s14, 4
    %s24 = sphi 0, %s26
    %s27 = sphi 0, %s24
    %s28 = sphi 0, %s27
    %s44 = sphi 0, %s28
    %s48 = sphi 0, %s48
    %s50 = sphi 0, %s48
    %s51 = sphi 0, %s50
    %s65 = sphi 0, %s51
    %s69 = sphi 0, %s69
    %s71 = sphi 0, %s69
    %s72 = sphi 0, %s71
    %s86 = sphi 0, %s72
    %s90 = sphi 0, %s90
    %s92 = sphi 0, %s90
    %s93 = sphi 0, %s92
    %s107 = sphi 0, %s93
    %s111 = sphi 0, %s111
    %s113 = sphi 0, %s111
    %s114 = sphi 0, %s113
    %s128 = sphi 0, %s114
    %s132 = sphi 0, %s132
    %s134 = sphi 0, %s132
    %s135 = sphi 0, %s134
    %s149 = sphi 0, %s135
    %s153 = sphi 0, %s153
    %s155 = sphi 0, %s153
    %s156 = sphi 0, %s155
    %s170 = sphi 0, %s156
    %s174 = sphi 0, %s174
    %s176 = sphi 0, %s174
    %s177 = sphi 0, %s176
    %s191 = sphi 0, %s177
    %s197 = sphi 0, %s199
    %s200 = sphi 0, %s197
    %s201 = sphi 0, %s200
    %s217 = sphi 0, %s201
  $region4: #{tpu_custom_call.1} parent=0 // loop_header_branch
    %17 = sbr.rel (%p15) target = $region8
  $region5: #{tpu_custom_call.1} parent=0 // loop_body
    %s19 = ssub.s32 %s14, 1
    %s20 = ssub.s32 %s14, 2
    %s21 = sadd.s32 %s14, 1
    %s22 = ssub.s32 %s14, %s21
    %p23 = scmp.eq.s32.totalorder %s22, 0
    %s25 = sadd.s32 %s24, 1
    %s26 = scalar_select %p23, %s24, %s25
    %p29 = pneg %p23
    %p30 = scmp.eq.s32.totalorder %s14, 1
    %p31 = por %p29, %p30
    %p32 = scmp.ne.s32.totalorder %s24, %s27
    %p33 = scmp.eq.s32.totalorder %s14, 0
    %p34 = por %p32, %p33
    %p35 = scmp.ne.s32.totalorder %s24, %s27
    %p36 = scmp.eq.s32.totalorder %s19, 1
    %p37 = por %p35, %p36
    %p38 = scmp.ne.s32.totalorder %s27, %s28
    %p39 = scmp.eq.s32.totalorder %s19, 0
    %p40 = por %p38, %p39
    %p41 = scmp.ne.s32.totalorder %s27, %s28
    %p42 = scmp.eq.s32.totalorder %s20, 1
    %p43 = por %p41, %p42
    %p45 = scmp.ne.s32.totalorder %s28, %s44
    %p46 = scmp.eq.s32.totalorder %s20, 0
    %p47 = por %p45, %p46
    %s49 = sadd.s32 %s48, 1
    %p52 = scmp.eq.s32.totalorder %s14, 1
    %p53 = scmp.ne.s32.totalorder %s48, %s50
    %p54 = scmp.eq.s32.totalorder %s14, 0
    %p55 = por %p53, %p54
    %p56 = scmp.ne.s32.totalorder %s48, %s50
    %p57 = scmp.eq.s32.totalorder %s19, 1
    %p58 = por %p56, %p57
    %p59 = scmp.ne.s32.totalorder %s50, %s51
    %p60 = scmp.eq.s32.totalorder %s19, 0
    %p61 = por %p59, %p60
    %p62 = scmp.ne.s32.totalorder %s50, %s51
    %p63 = scmp.eq.s32.totalorder %s20, 1
    %p64 = por %p62, %p63
    %p66 = scmp.ne.s32.totalorder %s51, %s65
    %p67 = scmp.eq.s32.totalorder %s20, 0
    %p68 = por %p66, %p67
    %s70 = sadd.s32 %s69, 1
    %p73 = scmp.eq.s32.totalorder %s14, 1
    %p74 = scmp.ne.s32.totalorder %s69, %s71
    %p75 = scmp.eq.s32.totalorder %s14, 0
    %p76 = por %p74, %p75
    %p77 = scmp.ne.s32.totalorder %s69, %s71
    %p78 = scmp.eq.s32.totalorder %s19, 1
    %p79 = por %p77, %p78
    %p80 = scmp.ne.s32.totalorder %s71, %s72
    %p81 = scmp.eq.s32.totalorder %s19, 0
    %p82 = por %p80, %p81
    %p83 = scmp.ne.s32.totalorder %s71, %s72
    %p84 = scmp.eq.s32.totalorder %s20, 1
    %p85 = por %p83, %p84
    %p87 = scmp.ne.s32.totalorder %s72, %s86
    %p88 = scmp.eq.s32.totalorder %s20, 0
    %p89 = por %p87, %p88
    %s91 = sadd.s32 %s90, 1
    %p94 = scmp.eq.s32.totalorder %s14, 1
    %p95 = scmp.ne.s32.totalorder %s90, %s92
    %p96 = scmp.eq.s32.totalorder %s14, 0
    %p97 = por %p95, %p96
    %p98 = scmp.ne.s32.totalorder %s90, %s92
    %p99 = scmp.eq.s32.totalorder %s19, 1
    %p100 = por %p98, %p99
    %p101 = scmp.ne.s32.totalorder %s92, %s93
    %p102 = scmp.eq.s32.totalorder %s19, 0
    %p103 = por %p101, %p102
    %p104 = scmp.ne.s32.totalorder %s92, %s93
    %p105 = scmp.eq.s32.totalorder %s20, 1
    %p106 = por %p104, %p105
    %p108 = scmp.ne.s32.totalorder %s93, %s107
    %p109 = scmp.eq.s32.totalorder %s20, 0
    %p110 = por %p108, %p109
    %s112 = sadd.s32 %s111, 1
    %p115 = scmp.eq.s32.totalorder %s14, 1
    %p116 = scmp.ne.s32.totalorder %s111, %s113
    %p117 = scmp.eq.s32.totalorder %s14, 0
    %p118 = por %p116, %p117
    %p119 = scmp.ne.s32.totalorder %s111, %s113
    %p120 = scmp.eq.s32.totalorder %s19, 1
    %p121 = por %p119, %p120
    %p122 = scmp.ne.s32.totalorder %s113, %s114
    %p123 = scmp.eq.s32.totalorder %s19, 0
    %p124 = por %p122, %p123
    %p125 = scmp.ne.s32.totalorder %s113, %s114
    %p126 = scmp.eq.s32.totalorder %s20, 1
    %p127 = por %p125, %p126
    %p129 = scmp.ne.s32.totalorder %s114, %s128
    %p130 = scmp.eq.s32.totalorder %s20, 0
    %p131 = por %p129, %p130
    %s133 = sadd.s32 %s132, 1
    %p136 = scmp.eq.s32.totalorder %s14, 1
    %p137 = scmp.ne.s32.totalorder %s132, %s134
    %p138 = scmp.eq.s32.totalorder %s14, 0
    %p139 = por %p137, %p138
    %p140 = scmp.ne.s32.totalorder %s132, %s134
    %p141 = scmp.eq.s32.totalorder %s19, 1
    %p142 = por %p140, %p141
    %p143 = scmp.ne.s32.totalorder %s134, %s135
    %p144 = scmp.eq.s32.totalorder %s19, 0
    %p145 = por %p143, %p144
    %p146 = scmp.ne.s32.totalorder %s134, %s135
    %p147 = scmp.eq.s32.totalorder %s20, 1
    %p148 = por %p146, %p147
    %p150 = scmp.ne.s32.totalorder %s135, %s149
    %p151 = scmp.eq.s32.totalorder %s20, 0
    %p152 = por %p150, %p151
    %s154 = sadd.s32 %s153, 1
    %p157 = scmp.eq.s32.totalorder %s14, 1
    %p158 = scmp.ne.s32.totalorder %s153, %s155
    %p159 = scmp.eq.s32.totalorder %s14, 0
    %p160 = por %p158, %p159
    %p161 = scmp.ne.s32.totalorder %s153, %s155
    %p162 = scmp.eq.s32.totalorder %s19, 1
    %p163 = por %p161, %p162
    %p164 = scmp.ne.s32.totalorder %s155, %s156
    %p165 = scmp.eq.s32.totalorder %s19, 0
    %p166 = por %p164, %p165
    %p167 = scmp.ne.s32.totalorder %s155, %s156
    %p168 = scmp.eq.s32.totalorder %s20, 1
    %p169 = por %p167, %p168
    %p171 = scmp.ne.s32.totalorder %s156, %s170
    %p172 = scmp.eq.s32.totalorder %s20, 0
    %p173 = por %p171, %p172
    %s175 = sadd.s32 %s174, 1
    %p178 = scmp.eq.s32.totalorder %s14, 1
    %p179 = scmp.ne.s32.totalorder %s174, %s176
    %p180 = scmp.eq.s32.totalorder %s14, 0
    %p181 = por %p179, %p180
    %p182 = scmp.ne.s32.totalorder %s174, %s176
    %p183 = scmp.eq.s32.totalorder %s19, 1
    %p184 = por %p182, %p183
    %p185 = scmp.ne.s32.totalorder %s176, %s177
    %p186 = scmp.eq.s32.totalorder %s19, 0
    %p187 = por %p185, %p186
    %p188 = scmp.ne.s32.totalorder %s176, %s177
    %p189 = scmp.eq.s32.totalorder %s20, 1
    %p190 = por %p188, %p189
    %p192 = scmp.ne.s32.totalorder %s177, %s191
    %p193 = scmp.eq.s32.totalorder %s20, 0
    %p194 = por %p192, %p193
    %s195 = ssub.s32 %s14, %s21
    %p196 = scmp.eq.s32.totalorder %s195, 0
    %s198 = sadd.s32 %s197, 1
    %s199 = scalar_select %p196, %s197, %s198
    %p202 = pneg %p196
    %p203 = scmp.eq.s32.totalorder %s14, 1
    %p204 = por %p202, %p203
    %p205 = scmp.ne.s32.totalorder %s197, %s200
    %p206 = scmp.eq.s32.totalorder %s14, 0
    %p207 = por %p205, %p206
    %p208 = scmp.ne.s32.totalorder %s197, %s200
    %p209 = scmp.eq.s32.totalorder %s19, 1
    %p210 = por %p208, %p209
    %p211 = scmp.ne.s32.totalorder %s200, %s201
    %p212 = scmp.eq.s32.totalorder %s19, 0
    %p213 = por %p211, %p212
    %p214 = scmp.ne.s32.totalorder %s200, %s201
    %p215 = scmp.eq.s32.totalorder %s20, 1
    %p216 = por %p214, %p215
    %p218 = scmp.ne.s32.totalorder %s201, %s217
    %p219 = scmp.eq.s32.totalorder %s20, 0
    %p220 = por %p218, %p219
    %p221 = scmp.le.s32.totalorder 1, %s14
    %p222 = scmp.lt.s32.totalorder %s14, 3
    %p223 = pnand %p221, %p222
    %p224 = pneg %p223
    // Predicated region
    $region9: #{tpu_custom_call.1} parent=5 // pred_check
      _
    $region10: #{tpu_custom_call.1} parent=5 // pred_check_branch
      %226 = sbr.rel (%p223) target = $region12
    $region11: #{tpu_custom_call.1} parent=5 // pred_region
      %s227 = ssub.s32 %s14, 1
      // Predicated region
      $region13: #{tpu_custom_call.1} parent=11 // pred_check
        %p228 = pneg %p61
      $region14: #{tpu_custom_call.1} parent=11 // pred_check_branch
        %230 = sbr.rel (%p228) target = $region16
      $region15: #{tpu_custom_call.1} parent=11 // pred_region
        _
      $region16: #{tpu_custom_call.1} parent=11 // pred_fallthru
        _
      // Predicated region
      $region17: #{tpu_custom_call.1} parent=11 // pred_check
        %p231 = pneg %p82
      $region18: #{tpu_custom_call.1} parent=11 // pred_check_branch
        %233 = sbr.rel (%p231) target = $region20
      $region19: #{tpu_custom_call.1} parent=11 // pred_region
        _
      $region20: #{tpu_custom_call.1} parent=11 // pred_fallthru
        _
      // Predicated region
      $region21: #{tpu_custom_call.1} parent=11 // pred_check
        %p234 = pneg %p103
      $region22: #{tpu_custom_call.1} parent=11 // pred_check_branch
        %236 = sbr.rel (%p234) target = $region24
      $region23: #{tpu_custom_call.1} parent=11 // pred_region
        _
      $region24: #{tpu_custom_call.1} parent=11 // pred_fallthru
        _
      // Predicated region
      $region25: #{tpu_custom_call.1} parent=11 // pred_check
        %p237 = pneg %p124
      $region26: #{tpu_custom_call.1} parent=11 // pred_check_branch
        %239 = sbr.rel (%p237) target = $region28
      $region27: #{tpu_custom_call.1} parent=11 // pred_region
        _
      $region28: #{tpu_custom_call.1} parent=11 // pred_fallthru
        _
      // Predicated region
      $region29: #{tpu_custom_call.1} parent=11 // pred_check
        %p240 = pneg %p145
      $region30: #{tpu_custom_call.1} parent=11 // pred_check_branch
        %242 = sbr.rel (%p240) target = $region32
      $region31: #{tpu_custom_call.1} parent=11 // pred_region
        _
      $region32: #{tpu_custom_call.1} parent=11 // pred_fallthru
        _
      // Predicated region
      $region33: #{tpu_custom_call.1} parent=11 // pred_check
        %p243 = pneg %p166
      $region34: #{tpu_custom_call.1} parent=11 // pred_check_branch
        %245 = sbr.rel (%p243) target = $region36
      $region35: #{tpu_custom_call.1} parent=11 // pred_region
        _
      $region36: #{tpu_custom_call.1} parent=11 // pred_fallthru
        _
      // Predicated region
      $region37: #{tpu_custom_call.1} parent=11 // pred_check
        %p246 = pneg %p187
      $region38: #{tpu_custom_call.1} parent=11 // pred_check_branch
        %248 = sbr.rel (%p246) target = $region40
      $region39: #{tpu_custom_call.1} parent=11 // pred_region
        _
      $region40: #{tpu_custom_call.1} parent=11 // pred_fallthru
        _
    $region12: #{tpu_custom_call.1} parent=5 // pred_fallthru
      _
    %p249 = scmp.lt.s32.totalorder %s14, 2
    // Predicated region
    $region41: #{tpu_custom_call.1} parent=5 // pred_check
      %p250 = pneg %p249
    $region42: #{tpu_custom_call.1} parent=5 // pred_check_branch
      %252 = sbr.rel (%p250) target = $region44
    $region43: #{tpu_custom_call.1} parent=5 // pred_region
      // Predicated region
      $region45: #{tpu_custom_call.1} parent=43 // pred_check
        %p253 = pneg %p34
      $region46: #{tpu_custom_call.1} parent=43 // pred_check_branch
        %255 = sbr.rel (%p253) target = $region48
      $region47: #{tpu_custom_call.1} parent=43 // pred_region
        %s256 = smul.u32 32, %s14
        %p257 = scmp.lt.s32.totalorder %s256, 63
        %s258 = scalar_select %p257, %s256, 63
        %s259 = smul.addr %s258, 8
        %s260 = scalar_lea.vmem %s0, %s259
        %s261 = smul.u32 32, %s14
      $region48: #{tpu_custom_call.1} parent=43 // pred_fallthru
        _
    $region44: #{tpu_custom_call.1} parent=5 // pred_fallthru
      _
    %p262 = scmp.le.s32.totalorder 1, %s14
    %p263 = scmp.lt.s32.totalorder %s14, 3
    %p264 = pnand %p262, %p263
    %p265 = pneg %p264
    // Predicated region
    $region49: #{tpu_custom_call.1} parent=5 // pred_check
      _
    $region50: #{tpu_custom_call.1} parent=5 // pred_check_branch
      %267 = sbr.rel (%p264) target = $region52
    $region51: #{tpu_custom_call.1} parent=5 // pred_region
      %s268 = ssub.s32 %s14, 1
      %s269 = smul.u32 32, %s19
      %p270 = scmp.lt.s32.totalorder %s269, 63
      %s271 = scalar_select %p270, %s269, 63
      %s272 = smul.addr %s271, 8
      %s273 = scalar_lea.vmem %s0, %s272
      %p274 = pneg %p40
      %p275 = pneg %p37
      %p276 = pneg %p61
      %p277 = pneg %p58
      %p278 = pneg %p82
      %p279 = pneg %p79
      %p280 = pneg %p103
      %p281 = pneg %p100
      %p282 = pneg %p124
      %p283 = pneg %p121
      %p284 = pneg %p145
      %p285 = pneg %p142
      %p286 = pneg %p166
      %p287 = pneg %p163
      %p288 = pneg %p187
      %p289 = pneg %p184
      %p290 = pneg %p213
      %p291 = pneg %p210
      %s292 = smul.u32 32, %s19
      %p293 = scmp.lt.s32.totalorder %s292, 63
      %s294 = scalar_select %p293, %s292, 63
      %s295 = smul.addr %s294, 8
      %s296 = scalar_lea.vmem %s8, %s295
      %s297 = smul.u32 32, %s19
      %p298 = scmp.lt.s32.totalorder %s297, 63
      %s299 = scalar_select %p298, %s297, 63
      %s300 = smul.addr %s299, 8
      %s301 = scalar_lea.vmem %s0, %s300
      %s302 = smul.u32 32, %s19
      %s303 = smul.u32 32, %s19
      %p304 = scmp.lt.s32.totalorder %s303, 63
      %s305 = scalar_select %p304, %s303, 63
      %s306 = smul.addr %s305, 8
      %s307 = scalar_lea.vmem %s8, %s306
      %s308 = smul.u32 32, %s19
      %v309 = vld [vmem:[%s301] sm:$0xff]
      %v310 = vld [vmem:[%s301 + $0x8] sm:$0xff]
      %v311 = vld [vmem:[%s301 + $0x10] sm:$0xff]
      %v312 = vld [vmem:[%s301 + $0x18] sm:$0xff]
      %v313 = vld [vmem:[%s301 + $0x20] sm:$0xff]
      %v314 = vld [vmem:[%s301 + $0x28] sm:$0xff]
      %v315 = vld [vmem:[%s301 + $0x30] sm:$0xff]
      %v316 = vld [vmem:[%s301 + $0x38] sm:$0xff]
      %v317 = vld [vmem:[%s301 + $0x40] sm:$0xff]
      %v318 = vld [vmem:[%s301 + $0x48] sm:$0xff]
      %v319 = vld [vmem:[%s301 + $0x50] sm:$0xff]
      %v320 = vld [vmem:[%s301 + $0x58] sm:$0xff]
      %v321 = vld [vmem:[%s301 + $0x60] sm:$0xff]
      %v322 = vld [vmem:[%s301 + $0x68] sm:$0xff]
      %v323 = vld [vmem:[%s301 + $0x70] sm:$0xff]
      %v324 = vld [vmem:[%s301 + $0x78] sm:$0xff]
      %v325 = vld [vmem:[%s301 + $0x80] sm:$0xff]
      %v326 = vld [vmem:[%s301 + $0x88] sm:$0xff]
      %v327 = vld [vmem:[%s301 + $0x90] sm:$0xff]
      %v328 = vld [vmem:[%s301 + $0x98] sm:$0xff]
      %v329 = vld [vmem:[%s301 + $0xa0] sm:$0xff]
      %v330 = vld [vmem:[%s301 + $0xa8] sm:$0xff]
      %v331 = vld [vmem:[%s301 + $0xb0] sm:$0xff]
      %v332 = vld [vmem:[%s301 + $0xb8] sm:$0xff]
      %v333 = vld [vmem:[%s301 + $0xc0] sm:$0xff]
      %v334 = vld [vmem:[%s301 + $0xc8] sm:$0xff]
      %v335 = vld [vmem:[%s301 + $0xd0] sm:$0xff]
      %v336 = vld [vmem:[%s301 + $0xd8] sm:$0xff]
      %v337 = vld [vmem:[%s301 + $0xe0] sm:$0xff]
      %v338 = vld [vmem:[%s301 + $0xe8] sm:$0xff]
      %v339 = vld [vmem:[%s301 + $0xf0] sm:$0xff]
      %v340 = vld [vmem:[%s301 + $0xf8] sm:$0xff]
      %v341 = vld [vmem:[%s1] ss:$4 sm:$0x7]
      %343 = vset.pattern.permute.xlu0 0
      %344 = vperm.xlu0 %343, %v309
      %v345 = vpop.permute.xlu0 %344
      %348 = vset.pattern.permute.xlu0 0
      %349 = vperm.xlu0 %348, %v310
      %v350 = vpop.permute.xlu0 %349
      %353 = vset.pattern.permute.xlu0 0
      %354 = vperm.xlu0 %353, %v311
      %v355 = vpop.permute.xlu0 %354
      %358 = vset.pattern.permute.xlu0 0
      %359 = vperm.xlu0 %358, %v312
      %v360 = vpop.permute.xlu0 %359
      %363 = vset.pattern.permute.xlu0 0
      %364 = vperm.xlu0 %363, %v313
      %v365 = vpop.permute.xlu0 %364
      %368 = vset.pattern.permute.xlu0 0
      %369 = vperm.xlu0 %368, %v314
      %v370 = vpop.permute.xlu0 %369
      %373 = vset.pattern.permute.xlu0 0
      %374 = vperm.xlu0 %373, %v315
      %v375 = vpop.permute.xlu0 %374
      %378 = vset.pattern.permute.xlu0 0
      %379 = vperm.xlu0 %378, %v316
      %v380 = vpop.permute.xlu0 %379
      %383 = vset.pattern.permute.xlu0 0
      %384 = vperm.xlu0 %383, %v317
      %v385 = vpop.permute.xlu0 %384
      %388 = vset.pattern.permute.xlu0 0
      %389 = vperm.xlu0 %388, %v318
      %v390 = vpop.permute.xlu0 %389
      %393 = vset.pattern.permute.xlu0 0
      %394 = vperm.xlu0 %393, %v319
      %v395 = vpop.permute.xlu0 %394
      %398 = vset.pattern.permute.xlu0 0
      %399 = vperm.xlu0 %398, %v320
      %v400 = vpop.permute.xlu0 %399
      %403 = vset.pattern.permute.xlu0 0
      %404 = vperm.xlu0 %403, %v321
      %v405 = vpop.permute.xlu0 %404
      %408 = vset.pattern.permute.xlu0 0
      %409 = vperm.xlu0 %408, %v322
      %v410 = vpop.permute.xlu0 %409
      %413 = vset.pattern.permute.xlu0 0
      %414 = vperm.xlu0 %413, %v323
      %v415 = vpop.permute.xlu0 %414
      %418 = vset.pattern.permute.xlu0 0
      %419 = vperm.xlu0 %418, %v324
      %v420 = vpop.permute.xlu0 %419
      %423 = vset.pattern.permute.xlu0 0
      %424 = vperm.xlu0 %423, %v325
      %v425 = vpop.permute.xlu0 %424
      %428 = vset.pattern.permute.xlu0 0
      %429 = vperm.xlu0 %428, %v326
      %v430 = vpop.permute.xlu0 %429
      %433 = vset.pattern.permute.xlu0 0
      %434 = vperm.xlu0 %433, %v327
      %v435 = vpop.permute.xlu0 %434
      %438 = vset.pattern.permute.xlu0 0
      %439 = vperm.xlu0 %438, %v328
      %v440 = vpop.permute.xlu0 %439
      %443 = vset.pattern.permute.xlu0 0
      %444 = vperm.xlu0 %443, %v329
      %v445 = vpop.permute.xlu0 %444
      %448 = vset.pattern.permute.xlu0 0
      %449 = vperm.xlu0 %448, %v330
      %v450 = vpop.permute.xlu0 %449
      %453 = vset.pattern.permute.xlu0 0
      %454 = vperm.xlu0 %453, %v331
      %v455 = vpop.permute.xlu0 %454
      %458 = vset.pattern.permute.xlu0 0
      %459 = vperm.xlu0 %458, %v332
      %v460 = vpop.permute.xlu0 %459
      %463 = vset.pattern.permute.xlu0 0
      %464 = vperm.xlu0 %463, %v333
      %v465 = vpop.permute.xlu0 %464
      %468 = vset.pattern.permute.xlu0 0
      %469 = vperm.xlu0 %468, %v334
      %v470 = vpop.permute.xlu0 %469
      %473 = vset.pattern.permute.xlu0 0
      %474 = vperm.xlu0 %473, %v335
      %v475 = vpop.permute.xlu0 %474
      %478 = vset.pattern.permute.xlu0 0
      %479 = vperm.xlu0 %478, %v336
      %v480 = vpop.permute.xlu0 %479
      %483 = vset.pattern.permute.xlu0 0
      %484 = vperm.xlu0 %483, %v337
      %v485 = vpop.permute.xlu0 %484
      %488 = vset.pattern.permute.xlu0 0
      %489 = vperm.xlu0 %488, %v338
      %v490 = vpop.permute.xlu0 %489
      %493 = vset.pattern.permute.xlu0 0
      %494 = vperm.xlu0 %493, %v339
      %v495 = vpop.permute.xlu0 %494
      %498 = vset.pattern.permute.xlu0 0
      %499 = vperm.xlu0 %498, %v340
      %v500 = vpop.permute.xlu0 %499
      %v503 = vlaneseq
      %v504 = vshrl.u32 %v503, 7
      %v505 = vsub.s32 0, %v504
      %v506 = vrot.slane %v341, %v505
      %v507 = vlaneseq
      %v508 = vshrl.u32 %v507, 7
      %v509 = vsub.s32 1, %v508
      %v510 = vrot.slane %v341, %v509
      %v511 = vlaneseq
      %v512 = vshrl.u32 %v511, 7
      %v513 = vsub.s32 2, %v512
      %v514 = vrot.slane %v341, %v513
      %v518 = vmul.f32 %v345, %v506
      %v519 = vmul.f32 %v345, %v510
      %v520 = vmul.f32 %v345, %v514
      %v521 = vmul.f32 %v350, %v506
      %v522 = vmul.f32 %v350, %v510
      %v523 = vmul.f32 %v350, %v514
      %v524 = vmul.f32 %v355, %v506
      %v525 = vmul.f32 %v355, %v510
      %v526 = vmul.f32 %v355, %v514
      %v527 = vmul.f32 %v360, %v506
      %v528 = vmul.f32 %v360, %v510
      %v529 = vmul.f32 %v360, %v514
      %v530 = vmul.f32 %v365, %v506
      %v531 = vmul.f32 %v365, %v510
      %v532 = vmul.f32 %v365, %v514
      %v533 = vmul.f32 %v370, %v506
      %v534 = vmul.f32 %v370, %v510
      %v535 = vmul.f32 %v370, %v514
      %v536 = vmul.f32 %v375, %v506
      %v537 = vmul.f32 %v375, %v510
      %v538 = vmul.f32 %v375, %v514
      %v539 = vmul.f32 %v380, %v506
      %v540 = vmul.f32 %v380, %v510
      %v541 = vmul.f32 %v380, %v514
      %v542 = vmul.f32 %v385, %v506
      %v543 = vmul.f32 %v385, %v510
      %v544 = vmul.f32 %v385, %v514
      %v545 = vmul.f32 %v390, %v506
      %v546 = vmul.f32 %v390, %v510
      %v547 = vmul.f32 %v390, %v514
      %v548 = vmul.f32 %v395, %v506
      %v549 = vmul.f32 %v395, %v510
      %v550 = vmul.f32 %v395, %v514
      %v551 = vmul.f32 %v400, %v506
      %v552 = vmul.f32 %v400, %v510
      %v553 = vmul.f32 %v400, %v514
      %v554 = vmul.f32 %v405, %v506
      %v555 = vmul.f32 %v405, %v510
      %v556 = vmul.f32 %v405, %v514
      %v557 = vmul.f32 %v410, %v506
      %v558 = vmul.f32 %v410, %v510
      %v559 = vmul.f32 %v410, %v514
      %v560 = vmul.f32 %v415, %v506
      %v561 = vmul.f32 %v415, %v510
      %v562 = vmul.f32 %v415, %v514
      %v563 = vmul.f32 %v420, %v506
      %v564 = vmul.f32 %v420, %v510
      %v565 = vmul.f32 %v420, %v514
      %v566 = vmul.f32 %v425, %v506
      %v567 = vmul.f32 %v425, %v510
      %v568 = vmul.f32 %v425, %v514
      %v569 = vmul.f32 %v430, %v506
      %v570 = vmul.f32 %v430, %v510
      %v571 = vmul.f32 %v430, %v514
      %v572 = vmul.f32 %v435, %v506
      %v573 = vmul.f32 %v435, %v510
      %v574 = vmul.f32 %v435, %v514
      %v575 = vmul.f32 %v440, %v506
      %v576 = vmul.f32 %v440, %v510
      %v577 = vmul.f32 %v440, %v514
      %v578 = vmul.f32 %v445, %v506
      %v579 = vmul.f32 %v445, %v510
      %v580 = vmul.f32 %v445, %v514
      %v581 = vmul.f32 %v450, %v506
      %v582 = vmul.f32 %v450, %v510
      %v583 = vmul.f32 %v450, %v514
      %v584 = vmul.f32 %v455, %v506
      %v585 = vmul.f32 %v455, %v510
      %v586 = vmul.f32 %v455, %v514
      %v587 = vmul.f32 %v460, %v506
      %v588 = vmul.f32 %v460, %v510
      %v589 = vmul.f32 %v460, %v514
      %v590 = vmul.f32 %v465, %v506
      %v591 = vmul.f32 %v465, %v510
      %v592 = vmul.f32 %v465, %v514
      %v593 = vmul.f32 %v470, %v506
      %v594 = vmul.f32 %v470, %v510
      %v595 = vmul.f32 %v470, %v514
      %v596 = vmul.f32 %v475, %v506
      %v597 = vmul.f32 %v475, %v510
      %v598 = vmul.f32 %v475, %v514
      %v599 = vmul.f32 %v480, %v506
      %v600 = vmul.f32 %v480, %v510
      %v601 = vmul.f32 %v480, %v514
      %v602 = vmul.f32 %v485, %v506
      %v603 = vmul.f32 %v485, %v510
      %v604 = vmul.f32 %v485, %v514
      %v605 = vmul.f32 %v490, %v506
      %v606 = vmul.f32 %v490, %v510
      %v607 = vmul.f32 %v490, %v514
      %v608 = vmul.f32 %v495, %v506
      %v609 = vmul.f32 %v495, %v510
      %v610 = vmul.f32 %v495, %v514
      %v611 = vmul.f32 %v500, %v506
      %v612 = vmul.f32 %v500, %v510
      %v613 = vmul.f32 %v500, %v514
      %s614 = scalar_lea.vmem %s1, 1
      %v615 = vld [vmem:[%s614] ss:$4 sm:$0x7]
      %616 = vset.pattern.permute.xlu0 1
      %617 = vperm.xlu0 %616, %v309
      %v618 = vpop.permute.xlu0 %617
      %620 = vset.pattern.permute.xlu0 1
      %621 = vperm.xlu0 %620, %v310
      %v622 = vpop.permute.xlu0 %621
      %624 = vset.pattern.permute.xlu0 1
      %625 = vperm.xlu0 %624, %v311
      %v626 = vpop.permute.xlu0 %625
      %628 = vset.pattern.permute.xlu0 1
      %629 = vperm.xlu0 %628, %v312
      %v630 = vpop.permute.xlu0 %629
      %632 = vset.pattern.permute.xlu0 1
      %633 = vperm.xlu0 %632, %v313
      %v634 = vpop.permute.xlu0 %633
      %636 = vset.pattern.permute.xlu0 1
      %637 = vperm.xlu0 %636, %v314
      %v638 = vpop.permute.xlu0 %637
      %640 = vset.pattern.permute.xlu0 1
      %641 = vperm.xlu0 %640, %v315
      %v642 = vpop.permute.xlu0 %641
      %644 = vset.pattern.permute.xlu0 1
      %645 = vperm.xlu0 %644, %v316
      %v646 = vpop.permute.xlu0 %645
      %648 = vset.pattern.permute.xlu0 1
      %649 = vperm.xlu0 %648, %v317
      %v650 = vpop.permute.xlu0 %649
      %652 = vset.pattern.permute.xlu0 1
      %653 = vperm.xlu0 %652, %v318
      %v654 = vpop.permute.xlu0 %653
      %656 = vset.pattern.permute.xlu0 1
      %657 = vperm.xlu0 %656, %v319
      %v658 = vpop.permute.xlu0 %657
      %660 = vset.pattern.permute.xlu0 1
      %661 = vperm.xlu0 %660, %v320
      %v662 = vpop.permute.xlu0 %661
      %664 = vset.pattern.permute.xlu0 1
      %665 = vperm.xlu0 %664, %v321
      %v666 = vpop.permute.xlu0 %665
      %668 = vset.pattern.permute.xlu0 1
      %669 = vperm.xlu0 %668, %v322
      %v670 = vpop.permute.xlu0 %669
      %672 = vset.pattern.permute.xlu0 1
      %673 = vperm.xlu0 %672, %v323
      %v674 = vpop.permute.xlu0 %673
      %676 = vset.pattern.permute.xlu0 1
      %677 = vperm.xlu0 %676, %v324
      %v678 = vpop.permute.xlu0 %677
      %680 = vset.pattern.permute.xlu0 1
      %681 = vperm.xlu0 %680, %v325
      %v682 = vpop.permute.xlu0 %681
      %684 = vset.pattern.permute.xlu0 1
      %685 = vperm.xlu0 %684, %v326
      %v686 = vpop.permute.xlu0 %685
      %688 = vset.pattern.permute.xlu0 1
      %689 = vperm.xlu0 %688, %v327
      %v690 = vpop.permute.xlu0 %689
      %692 = vset.pattern.permute.xlu0 1
      %693 = vperm.xlu0 %692, %v328
      %v694 = vpop.permute.xlu0 %693
      %696 = vset.pattern.permute.xlu0 1
      %697 = vperm.xlu0 %696, %v329
      %v698 = vpop.permute.xlu0 %697
      %700 = vset.pattern.permute.xlu0 1
      %701 = vperm.xlu0 %700, %v330
      %v702 = vpop.permute.xlu0 %701
      %704 = vset.pattern.permute.xlu0 1
      %705 = vperm.xlu0 %704, %v331
      %v706 = vpop.permute.xlu0 %705
      %708 = vset.pattern.permute.xlu0 1
      %709 = vperm.xlu0 %708, %v332
      %v710 = vpop.permute.xlu0 %709
      %712 = vset.pattern.permute.xlu0 1
      %713 = vperm.xlu0 %712, %v333
      %v714 = vpop.permute.xlu0 %713
      %716 = vset.pattern.permute.xlu0 1
      %717 = vperm.xlu0 %716, %v334
      %v718 = vpop.permute.xlu0 %717
      %720 = vset.pattern.permute.xlu0 1
      %721 = vperm.xlu0 %720, %v335
      %v722 = vpop.permute.xlu0 %721
      %724 = vset.pattern.permute.xlu0 1
      %725 = vperm.xlu0 %724, %v336
      %v726 = vpop.permute.xlu0 %725
      %728 = vset.pattern.permute.xlu0 1
      %729 = vperm.xlu0 %728, %v337
      %v730 = vpop.permute.xlu0 %729
      %732 = vset.pattern.permute.xlu0 1
      %733 = vperm.xlu0 %732, %v338
      %v734 = vpop.permute.xlu0 %733
      %736 = vset.pattern.permute.xlu0 1
      %737 = vperm.xlu0 %736, %v339
      %v738 = vpop.permute.xlu0 %737
      %740 = vset.pattern.permute.xlu0 1
      %741 = vperm.xlu0 %740, %v340
      %v742 = vpop.permute.xlu0 %741
      %v745 = vlaneseq
      %v746 = vshrl.u32 %v745, 7
      %v747 = vsub.s32 0, %v746
      %v748 = vrot.slane %v615, %v747
      %v749 = vlaneseq
      %v750 = vshrl.u32 %v749, 7
      %v751 = vsub.s32 1, %v750
      %v752 = vrot.slane %v615, %v751
      %v753 = vlaneseq
      %v754 = vshrl.u32 %v753, 7
      %v755 = vsub.s32 2, %v754
      %v756 = vrot.slane %v615, %v755
      %v760 = vmul.f32 %v618, %v748
      %v761 = vmul.f32 %v618, %v752
      %v762 = vmul.f32 %v618, %v756
      %v763 = vmul.f32 %v622, %v748
      %v764 = vmul.f32 %v622, %v752
      %v765 = vmul.f32 %v622, %v756
      %v766 = vmul.f32 %v626, %v748
      %v767 = vmul.f32 %v626, %v752
      %v768 = vmul.f32 %v626, %v756
      %v769 = vmul.f32 %v630, %v748
      %v770 = vmul.f32 %v630, %v752
      %v771 = vmul.f32 %v630, %v756
      %v772 = vmul.f32 %v634, %v748
      %v773 = vmul.f32 %v634, %v752
      %v774 = vmul.f32 %v634, %v756
      %v775 = vmul.f32 %v638, %v748
      %v776 = vmul.f32 %v638, %v752
      %v777 = vmul.f32 %v638, %v756
      %v778 = vmul.f32 %v642, %v748
      %v779 = vmul.f32 %v642, %v752
      %v780 = vmul.f32 %v642, %v756
      %v781 = vmul.f32 %v646, %v748
      %v782 = vmul.f32 %v646, %v752
      %v783 = vmul.f32 %v646, %v756
      %v784 = vmul.f32 %v650, %v748
      %v785 = vmul.f32 %v650, %v752
      %v786 = vmul.f32 %v650, %v756
      %v787 = vmul.f32 %v654, %v748
      %v788 = vmul.f32 %v654, %v752
      %v789 = vmul.f32 %v654, %v756
      %v790 = vmul.f32 %v658, %v748
      %v791 = vmul.f32 %v658, %v752
      %v792 = vmul.f32 %v658, %v756
      %v793 = vmul.f32 %v662, %v748
      %v794 = vmul.f32 %v662, %v752
      %v795 = vmul.f32 %v662, %v756
      %v796 = vmul.f32 %v666, %v748
      %v797 = vmul.f32 %v666, %v752
      %v798 = vmul.f32 %v666, %v756
      %v799 = vmul.f32 %v670, %v748
      %v800 = vmul.f32 %v670, %v752
      %v801 = vmul.f32 %v670, %v756
      %v802 = vmul.f32 %v674, %v748
      %v803 = vmul.f32 %v674, %v752
      %v804 = vmul.f32 %v674, %v756
      %v805 = vmul.f32 %v678, %v748
      %v806 = vmul.f32 %v678, %v752
      %v807 = vmul.f32 %v678, %v756
      %v808 = vmul.f32 %v682, %v748
      %v809 = vmul.f32 %v682, %v752
      %v810 = vmul.f32 %v682, %v756
      %v811 = vmul.f32 %v686, %v748
      %v812 = vmul.f32 %v686, %v752
      %v813 = vmul.f32 %v686, %v756
      %v814 = vmul.f32 %v690, %v748
      %v815 = vmul.f32 %v690, %v752
      %v816 = vmul.f32 %v690, %v756
      %v817 = vmul.f32 %v694, %v748
      %v818 = vmul.f32 %v694, %v752
      %v819 = vmul.f32 %v694, %v756
      %v820 = vmul.f32 %v698, %v748
      %v821 = vmul.f32 %v698, %v752
      %v822 = vmul.f32 %v698, %v756
      %v823 = vmul.f32 %v702, %v748
      %v824 = vmul.f32 %v702, %v752
      %v825 = vmul.f32 %v702, %v756
      %v826 = vmul.f32 %v706, %v748
      %v827 = vmul.f32 %v706, %v752
      %v828 = vmul.f32 %v706, %v756
      %v829 = vmul.f32 %v710, %v748
      %v830 = vmul.f32 %v710, %v752
      %v831 = vmul.f32 %v710, %v756
      %v832 = vmul.f32 %v714, %v748
      %v833 = vmul.f32 %v714, %v752
      %v834 = vmul.f32 %v714, %v756
      %v835 = vmul.f32 %v718, %v748
      %v836 = vmul.f32 %v718, %v752
      %v837 = vmul.f32 %v718, %v756
      %v838 = vmul.f32 %v722, %v748
      %v839 = vmul.f32 %v722, %v752
      %v840 = vmul.f32 %v722, %v756
      %v841 = vmul.f32 %v726, %v748
      %v842 = vmul.f32 %v726, %v752
      %v843 = vmul.f32 %v726, %v756
      %v844 = vmul.f32 %v730, %v748
      %v845 = vmul.f32 %v730, %v752
      %v846 = vmul.f32 %v730, %v756
      %v847 = vmul.f32 %v734, %v748
      %v848 = vmul.f32 %v734, %v752
      %v849 = vmul.f32 %v734, %v756
      %v850 = vmul.f32 %v738, %v748
      %v851 = vmul.f32 %v738, %v752
      %v852 = vmul.f32 %v738, %v756
      %v853 = vmul.f32 %v742, %v748
      %v854 = vmul.f32 %v742, %v752
      %v855 = vmul.f32 %v742, %v756
      %v856 = vadd.f32 %v518, %v760
      %v857 = vadd.f32 %v519, %v761
      %v858 = vadd.f32 %v520, %v762
      %v859 = vadd.f32 %v521, %v763
      %v860 = vadd.f32 %v522, %v764
      %v861 = vadd.f32 %v523, %v765
      %v862 = vadd.f32 %v524, %v766
      %v863 = vadd.f32 %v525, %v767
      %v864 = vadd.f32 %v526, %v768
      %v865 = vadd.f32 %v527, %v769
      %v866 = vadd.f32 %v528, %v770
      %v867 = vadd.f32 %v529, %v771
      %v868 = vadd.f32 %v530, %v772
      %v869 = vadd.f32 %v531, %v773
      %v870 = vadd.f32 %v532, %v774
      %v871 = vadd.f32 %v533, %v775
      %v872 = vadd.f32 %v534, %v776
      %v873 = vadd.f32 %v535, %v777
      %v874 = vadd.f32 %v536, %v778
      %v875 = vadd.f32 %v537, %v779
      %v876 = vadd.f32 %v538, %v780
      %v877 = vadd.f32 %v539, %v781
      %v878 = vadd.f32 %v540, %v782
      %v879 = vadd.f32 %v541, %v783
      %v880 = vadd.f32 %v542, %v784
      %v881 = vadd.f32 %v543, %v785
      %v882 = vadd.f32 %v544, %v786
      %v883 = vadd.f32 %v545, %v787
      %v884 = vadd.f32 %v546, %v788
      %v885 = vadd.f32 %v547, %v789
      %v886 = vadd.f32 %v548, %v790
      %v887 = vadd.f32 %v549, %v791
      %v888 = vadd.f32 %v550, %v792
      %v889 = vadd.f32 %v551, %v793
      %v890 = vadd.f32 %v552, %v794
      %v891 = vadd.f32 %v553, %v795
      %v892 = vadd.f32 %v554, %v796
      %v893 = vadd.f32 %v555, %v797
      %v894 = vadd.f32 %v556, %v798
      %v895 = vadd.f32 %v557, %v799
      %v896 = vadd.f32 %v558, %v800
      %v897 = vadd.f32 %v559, %v801
      %v898 = vadd.f32 %v560, %v802
      %v899 = vadd.f32 %v561, %v803
      %v900 = vadd.f32 %v562, %v804
      %v901 = vadd.f32 %v563, %v805
      %v902 = vadd.f32 %v564, %v806
      %v903 = vadd.f32 %v565, %v807
      %v904 = vadd.f32 %v566, %v808
      %v905 = vadd.f32 %v567, %v809
      %v906 = vadd.f32 %v568, %v810
      %v907 = vadd.f32 %v569, %v811
      %v908 = vadd.f32 %v570, %v812
      %v909 = vadd.f32 %v571, %v813
      %v910 = vadd.f32 %v572, %v814
      %v911 = vadd.f32 %v573, %v815
      %v912 = vadd.f32 %v574, %v816
      %v913 = vadd.f32 %v575, %v817
      %v914 = vadd.f32 %v576, %v818
      %v915 = vadd.f32 %v577, %v819
      %v916 = vadd.f32 %v578, %v820
      %v917 = vadd.f32 %v579, %v821
      %v918 = vadd.f32 %v580, %v822
      %v919 = vadd.f32 %v581, %v823
      %v920 = vadd.f32 %v582, %v824
      %v921 = vadd.f32 %v583, %v825
      %v922 = vadd.f32 %v584, %v826
      %v923 = vadd.f32 %v585, %v827
      %v924 = vadd.f32 %v586, %v828
      %v925 = vadd.f32 %v587, %v829
      %v926 = vadd.f32 %v588, %v830
      %v927 = vadd.f32 %v589, %v831
      %v928 = vadd.f32 %v590, %v832
      %v929 = vadd.f32 %v591, %v833
      %v930 = vadd.f32 %v592, %v834
      %v931 = vadd.f32 %v593, %v835
      %v932 = vadd.f32 %v594, %v836
      %v933 = vadd.f32 %v595, %v837
      %v934 = vadd.f32 %v596, %v838
      %v935 = vadd.f32 %v597, %v839
      %v936 = vadd.f32 %v598, %v840
      %v937 = vadd.f32 %v599, %v841
      %v938 = vadd.f32 %v600, %v842
      %v939 = vadd.f32 %v601, %v843
      %v940 = vadd.f32 %v602, %v844
      %v941 = vadd.f32 %v603, %v845
      %v942 = vadd.f32 %v604, %v846
      %v943 = vadd.f32 %v605, %v847
      %v944 = vadd.f32 %v606, %v848
      %v945 = vadd.f32 %v607, %v849
      %v946 = vadd.f32 %v608, %v850
      %v947 = vadd.f32 %v609, %v851
      %v948 = vadd.f32 %v610, %v852
      %v949 = vadd.f32 %v611, %v853
      %v950 = vadd.f32 %v612, %v854
      %v951 = vadd.f32 %v613, %v855
      %s952 = scalar_lea.vmem %s1, 2
      %v953 = vld [vmem:[%s952] ss:$4 sm:$0x7]
      %954 = vset.pattern.permute.xlu0 2
      %955 = vperm.xlu0 %954, %v309
      %v956 = vpop.permute.xlu0 %955
      %958 = vset.pattern.permute.xlu0 2
      %959 = vperm.xlu0 %958, %v310
      %v960 = vpop.permute.xlu0 %959
      %962 = vset.pattern.permute.xlu0 2
      %963 = vperm.xlu0 %962, %v311
      %v964 = vpop.permute.xlu0 %963
      %966 = vset.pattern.permute.xlu0 2
      %967 = vperm.xlu0 %966, %v312
      %v968 = vpop.permute.xlu0 %967
      %970 = vset.pattern.permute.xlu0 2
      %971 = vperm.xlu0 %970, %v313
      %v972 = vpop.permute.xlu0 %971
      %974 = vset.pattern.permute.xlu0 2
      %975 = vperm.xlu0 %974, %v314
      %v976 = vpop.permute.xlu0 %975
      %978 = vset.pattern.permute.xlu0 2
      %979 = vperm.xlu0 %978, %v315
      %v980 = vpop.permute.xlu0 %979
      %982 = vset.pattern.permute.xlu0 2
      %983 = vperm.xlu0 %982, %v316
      %v984 = vpop.permute.xlu0 %983
      %986 = vset.pattern.permute.xlu0 2
      %987 = vperm.xlu0 %986, %v317
      %v988 = vpop.permute.xlu0 %987
      %990 = vset.pattern.permute.xlu0 2
      %991 = vperm.xlu0 %990, %v318
      %v992 = vpop.permute.xlu0 %991
      %994 = vset.pattern.permute.xlu0 2
      %995 = vperm.xlu0 %994, %v319
      %v996 = vpop.permute.xlu0 %995
      %998 = vset.pattern.permute.xlu0 2
      %999 = vperm.xlu0 %998, %v320
      %v1000 = vpop.permute.xlu0 %999
      %1002 = vset.pattern.permute.xlu0 2
      %1003 = vperm.xlu0 %1002, %v321
      %v1004 = vpop.permute.xlu0 %1003
      %1006 = vset.pattern.permute.xlu0 2
      %1007 = vperm.xlu0 %1006, %v322
      %v1008 = vpop.permute.xlu0 %1007
      %1010 = vset.pattern.permute.xlu0 2
      %1011 = vperm.xlu0 %1010, %v323
      %v1012 = vpop.permute.xlu0 %1011
      %1014 = vset.pattern.permute.xlu0 2
      %1015 = vperm.xlu0 %1014, %v324
      %v1016 = vpop.permute.xlu0 %1015
      %1018 = vset.pattern.permute.xlu0 2
      %1019 = vperm.xlu0 %1018, %v325
      %v1020 = vpop.permute.xlu0 %1019
      %1022 = vset.pattern.permute.xlu0 2
      %1023 = vperm.xlu0 %1022, %v326
      %v1024 = vpop.permute.xlu0 %1023
      %1026 = vset.pattern.permute.xlu0 2
      %1027 = vperm.xlu0 %1026, %v327
      %v1028 = vpop.permute.xlu0 %1027
      %1030 = vset.pattern.permute.xlu0 2
      %1031 = vperm.xlu0 %1030, %v328
      %v1032 = vpop.permute.xlu0 %1031
      %1034 = vset.pattern.permute.xlu0 2
      %1035 = vperm.xlu0 %1034, %v329
      %v1036 = vpop.permute.xlu0 %1035
      %1038 = vset.pattern.permute.xlu0 2
      %1039 = vperm.xlu0 %1038, %v330
      %v1040 = vpop.permute.xlu0 %1039
      %1042 = vset.pattern.permute.xlu0 2
      %1043 = vperm.xlu0 %1042, %v331
      %v1044 = vpop.permute.xlu0 %1043
      %1046 = vset.pattern.permute.xlu0 2
      %1047 = vperm.xlu0 %1046, %v332
      %v1048 = vpop.permute.xlu0 %1047
      %1050 = vset.pattern.permute.xlu0 2
      %1051 = vperm.xlu0 %1050, %v333
      %v1052 = vpop.permute.xlu0 %1051
      %1054 = vset.pattern.permute.xlu0 2
      %1055 = vperm.xlu0 %1054, %v334
      %v1056 = vpop.permute.xlu0 %1055
      %1058 = vset.pattern.permute.xlu0 2
      %1059 = vperm.xlu0 %1058, %v335
      %v1060 = vpop.permute.xlu0 %1059
      %1062 = vset.pattern.permute.xlu0 2
      %1063 = vperm.xlu0 %1062, %v336
      %v1064 = vpop.permute.xlu0 %1063
      %1066 = vset.pattern.permute.xlu0 2
      %1067 = vperm.xlu0 %1066, %v337
      %v1068 = vpop.permute.xlu0 %1067
      %1070 = vset.pattern.permute.xlu0 2
      %1071 = vperm.xlu0 %1070, %v338
      %v1072 = vpop.permute.xlu0 %1071
      %1074 = vset.pattern.permute.xlu0 2
      %1075 = vperm.xlu0 %1074, %v339
      %v1076 = vpop.permute.xlu0 %1075
      %1078 = vset.pattern.permute.xlu0 2
      %1079 = vperm.xlu0 %1078, %v340
      %v1080 = vpop.permute.xlu0 %1079
      %v1083 = vlaneseq
      %v1084 = vshrl.u32 %v1083, 7
      %v1085 = vsub.s32 0, %v1084
      %v1086 = vrot.slane %v953, %v1085
      %v1087 = vlaneseq
      %v1088 = vshrl.u32 %v1087, 7
      %v1089 = vsub.s32 1, %v1088
      %v1090 = vrot.slane %v953, %v1089
      %v1091 = vlaneseq
      %v1092 = vshrl.u32 %v1091, 7
      %v1093 = vsub.s32 2, %v1092
      %v1094 = vrot.slane %v953, %v1093
      %v1098 = vmul.f32 %v956, %v1086
      %v1099 = vmul.f32 %v956, %v1090
      %v1100 = vmul.f32 %v956, %v1094
      %v1101 = vmul.f32 %v960, %v1086
      %v1102 = vmul.f32 %v960, %v1090
      %v1103 = vmul.f32 %v960, %v1094
      %v1104 = vmul.f32 %v964, %v1086
      %v1105 = vmul.f32 %v964, %v1090
      %v1106 = vmul.f32 %v964, %v1094
      %v1107 = vmul.f32 %v968, %v1086
      %v1108 = vmul.f32 %v968, %v1090
      %v1109 = vmul.f32 %v968, %v1094
      %v1110 = vmul.f32 %v972, %v1086
      %v1111 = vmul.f32 %v972, %v1090
      %v1112 = vmul.f32 %v972, %v1094
      %v1113 = vmul.f32 %v976, %v1086
      %v1114 = vmul.f32 %v976, %v1090
      %v1115 = vmul.f32 %v976, %v1094
      %v1116 = vmul.f32 %v980, %v1086
      %v1117 = vmul.f32 %v980, %v1090
      %v1118 = vmul.f32 %v980, %v1094
      %v1119 = vmul.f32 %v984, %v1086
      %v1120 = vmul.f32 %v984, %v1090
      %v1121 = vmul.f32 %v984, %v1094
      %v1122 = vmul.f32 %v988, %v1086
      %v1123 = vmul.f32 %v988, %v1090
      %v1124 = vmul.f32 %v988, %v1094
      %v1125 = vmul.f32 %v992, %v1086
      %v1126 = vmul.f32 %v992, %v1090
      %v1127 = vmul.f32 %v992, %v1094
      %v1128 = vmul.f32 %v996, %v1086
      %v1129 = vmul.f32 %v996, %v1090
      %v1130 = vmul.f32 %v996, %v1094
      %v1131 = vmul.f32 %v1000, %v1086
      %v1132 = vmul.f32 %v1000, %v1090
      %v1133 = vmul.f32 %v1000, %v1094
      %v1134 = vmul.f32 %v1004, %v1086
      %v1135 = vmul.f32 %v1004, %v1090
      %v1136 = vmul.f32 %v1004, %v1094
      %v1137 = vmul.f32 %v1008, %v1086
      %v1138 = vmul.f32 %v1008, %v1090
      %v1139 = vmul.f32 %v1008, %v1094
      %v1140 = vmul.f32 %v1012, %v1086
      %v1141 = vmul.f32 %v1012, %v1090
      %v1142 = vmul.f32 %v1012, %v1094
      %v1143 = vmul.f32 %v1016, %v1086
      %v1144 = vmul.f32 %v1016, %v1090
      %v1145 = vmul.f32 %v1016, %v1094
      %v1146 = vmul.f32 %v1020, %v1086
      %v1147 = vmul.f32 %v1020, %v1090
      %v1148 = vmul.f32 %v1020, %v1094
      %v1149 = vmul.f32 %v1024, %v1086
      %v1150 = vmul.f32 %v1024, %v1090
      %v1151 = vmul.f32 %v1024, %v1094
      %v1152 = vmul.f32 %v1028, %v1086
      %v1153 = vmul.f32 %v1028, %v1090
      %v1154 = vmul.f32 %v1028, %v1094
      %v1155 = vmul.f32 %v1032, %v1086
      %v1156 = vmul.f32 %v1032, %v1090
      %v1157 = vmul.f32 %v1032, %v1094
      %v1158 = vmul.f32 %v1036, %v1086
      %v1159 = vmul.f32 %v1036, %v1090
      %v1160 = vmul.f32 %v1036, %v1094
      %v1161 = vmul.f32 %v1040, %v1086
      %v1162 = vmul.f32 %v1040, %v1090
      %v1163 = vmul.f32 %v1040, %v1094
      %v1164 = vmul.f32 %v1044, %v1086
      %v1165 = vmul.f32 %v1044, %v1090
      %v1166 = vmul.f32 %v1044, %v1094
      %v1167 = vmul.f32 %v1048, %v1086
      %v1168 = vmul.f32 %v1048, %v1090
      %v1169 = vmul.f32 %v1048, %v1094
      %v1170 = vmul.f32 %v1052, %v1086
      %v1171 = vmul.f32 %v1052, %v1090
      %v1172 = vmul.f32 %v1052, %v1094
      %v1173 = vmul.f32 %v1056, %v1086
      %v1174 = vmul.f32 %v1056, %v1090
      %v1175 = vmul.f32 %v1056, %v1094
      %v1176 = vmul.f32 %v1060, %v1086
      %v1177 = vmul.f32 %v1060, %v1090
      %v1178 = vmul.f32 %v1060, %v1094
      %v1179 = vmul.f32 %v1064, %v1086
      %v1180 = vmul.f32 %v1064, %v1090
      %v1181 = vmul.f32 %v1064, %v1094
      %v1182 = vmul.f32 %v1068, %v1086
      %v1183 = vmul.f32 %v1068, %v1090
      %v1184 = vmul.f32 %v1068, %v1094
      %v1185 = vmul.f32 %v1072, %v1086
      %v1186 = vmul.f32 %v1072, %v1090
      %v1187 = vmul.f32 %v1072, %v1094
      %v1188 = vmul.f32 %v1076, %v1086
      %v1189 = vmul.f32 %v1076, %v1090
      %v1190 = vmul.f32 %v1076, %v1094
      %v1191 = vmul.f32 %v1080, %v1086
      %v1192 = vmul.f32 %v1080, %v1090
      %v1193 = vmul.f32 %v1080, %v1094
      %v1194 = vadd.f32 %v856, %v1098
      %v1195 = vadd.f32 %v857, %v1099
      %v1196 = vadd.f32 %v858, %v1100
      %v1197 = vadd.f32 %v859, %v1101
      %v1198 = vadd.f32 %v860, %v1102
      %v1199 = vadd.f32 %v861, %v1103
      %v1200 = vadd.f32 %v862, %v1104
      %v1201 = vadd.f32 %v863, %v1105
      %v1202 = vadd.f32 %v864, %v1106
      %v1203 = vadd.f32 %v865, %v1107
      %v1204 = vadd.f32 %v866, %v1108
      %v1205 = vadd.f32 %v867, %v1109
      %v1206 = vadd.f32 %v868, %v1110
      %v1207 = vadd.f32 %v869, %v1111
      %v1208 = vadd.f32 %v870, %v1112
      %v1209 = vadd.f32 %v871, %v1113
      %v1210 = vadd.f32 %v872, %v1114
      %v1211 = vadd.f32 %v873, %v1115
      %v1212 = vadd.f32 %v874, %v1116
      %v1213 = vadd.f32 %v875, %v1117
      %v1214 = vadd.f32 %v876, %v1118
      %v1215 = vadd.f32 %v877, %v1119
      %v1216 = vadd.f32 %v878, %v1120
      %v1217 = vadd.f32 %v879, %v1121
      %v1218 = vadd.f32 %v880, %v1122
      %v1219 = vadd.f32 %v881, %v1123
      %v1220 = vadd.f32 %v882, %v1124
      %v1221 = vadd.f32 %v883, %v1125
      %v1222 = vadd.f32 %v884, %v1126
      %v1223 = vadd.f32 %v885, %v1127
      %v1224 = vadd.f32 %v886, %v1128
      %v1225 = vadd.f32 %v887, %v1129
      %v1226 = vadd.f32 %v888, %v1130
      %v1227 = vadd.f32 %v889, %v1131
      %v1228 = vadd.f32 %v890, %v1132
      %v1229 = vadd.f32 %v891, %v1133
      %v1230 = vadd.f32 %v892, %v1134
      %v1231 = vadd.f32 %v893, %v1135
      %v1232 = vadd.f32 %v894, %v1136
      %v1233 = vadd.f32 %v895, %v1137
      %v1234 = vadd.f32 %v896, %v1138
      %v1235 = vadd.f32 %v897, %v1139
      %v1236 = vadd.f32 %v898, %v1140
      %v1237 = vadd.f32 %v899, %v1141
      %v1238 = vadd.f32 %v900, %v1142
      %v1239 = vadd.f32 %v901, %v1143
      %v1240 = vadd.f32 %v902, %v1144
      %v1241 = vadd.f32 %v903, %v1145
      %v1242 = vadd.f32 %v904, %v1146
      %v1243 = vadd.f32 %v905, %v1147
      %v1244 = vadd.f32 %v906, %v1148
      %v1245 = vadd.f32 %v907, %v1149
      %v1246 = vadd.f32 %v908, %v1150
      %v1247 = vadd.f32 %v909, %v1151
      %v1248 = vadd.f32 %v910, %v1152
      %v1249 = vadd.f32 %v911, %v1153
      %v1250 = vadd.f32 %v912, %v1154
      %v1251 = vadd.f32 %v913, %v1155
      %v1252 = vadd.f32 %v914, %v1156
      %v1253 = vadd.f32 %v915, %v1157
      %v1254 = vadd.f32 %v916, %v1158
      %v1255 = vadd.f32 %v917, %v1159
      %v1256 = vadd.f32 %v918, %v1160
      %v1257 = vadd.f32 %v919, %v1161
      %v1258 = vadd.f32 %v920, %v1162
      %v1259 = vadd.f32 %v921, %v1163
      %v1260 = vadd.f32 %v922, %v1164
      %v1261 = vadd.f32 %v923, %v1165
      %v1262 = vadd.f32 %v924, %v1166
      %v1263 = vadd.f32 %v925, %v1167
      %v1264 = vadd.f32 %v926, %v1168
      %v1265 = vadd.f32 %v927, %v1169
      %v1266 = vadd.f32 %v928, %v1170
      %v1267 = vadd.f32 %v929, %v1171
      %v1268 = vadd.f32 %v930, %v1172
      %v1269 = vadd.f32 %v931, %v1173
      %v1270 = vadd.f32 %v932, %v1174
      %v1271 = vadd.f32 %v933, %v1175
      %v1272 = vadd.f32 %v934, %v1176
      %v1273 = vadd.f32 %v935, %v1177
      %v1274 = vadd.f32 %v936, %v1178
      %v1275 = vadd.f32 %v937, %v1179
      %v1276 = vadd.f32 %v938, %v1180
      %v1277 = vadd.f32 %v939, %v1181
      %v1278 = vadd.f32 %v940, %v1182
      %v1279 = vadd.f32 %v941, %v1183
      %v1280 = vadd.f32 %v942, %v1184
      %v1281 = vadd.f32 %v943, %v1185
      %v1282 = vadd.f32 %v944, %v1186
      %v1283 = vadd.f32 %v945, %v1187
      %v1284 = vadd.f32 %v946, %v1188
      %v1285 = vadd.f32 %v947, %v1189
      %v1286 = vadd.f32 %v948, %v1190
      %v1287 = vadd.f32 %v949, %v1191
      %v1288 = vadd.f32 %v950, %v1192
      %v1289 = vadd.f32 %v951, %v1193
      %s1290 = scalar_lea.vmem %s1, 3
      %v1291 = vld [vmem:[%s1290] ss:$4 sm:$0x7]
      %1292 = vset.pattern.permute.xlu0 3
      %1293 = vperm.xlu0 %1292, %v309
      %v1294 = vpop.permute.xlu0 %1293
      %1296 = vset.pattern.permute.xlu0 3
      %1297 = vperm.xlu0 %1296, %v310
      %v1298 = vpop.permute.xlu0 %1297
      %1300 = vset.pattern.permute.xlu0 3
      %1301 = vperm.xlu0 %1300, %v311
      %v1302 = vpop.permute.xlu0 %1301
      %1304 = vset.pattern.permute.xlu0 3
      %1305 = vperm.xlu0 %1304, %v312
      %v1306 = vpop.permute.xlu0 %1305
      %1308 = vset.pattern.permute.xlu0 3
      %1309 = vperm.xlu0 %1308, %v313
      %v1310 = vpop.permute.xlu0 %1309
      %1312 = vset.pattern.permute.xlu0 3
      %1313 = vperm.xlu0 %1312, %v314
      %v1314 = vpop.permute.xlu0 %1313
      %1316 = vset.pattern.permute.xlu0 3
      %1317 = vperm.xlu0 %1316, %v315
      %v1318 = vpop.permute.xlu0 %1317
      %1320 = vset.pattern.permute.xlu0 3
      %1321 = vperm.xlu0 %1320, %v316
      %v1322 = vpop.permute.xlu0 %1321
      %1324 = vset.pattern.permute.xlu0 3
      %1325 = vperm.xlu0 %1324, %v317
      %v1326 = vpop.permute.xlu0 %1325
      %1328 = vset.pattern.permute.xlu0 3
      %1329 = vperm.xlu0 %1328, %v318
      %v1330 = vpop.permute.xlu0 %1329
      %1332 = vset.pattern.permute.xlu0 3
      %1333 = vperm.xlu0 %1332, %v319
      %v1334 = vpop.permute.xlu0 %1333
      %1336 = vset.pattern.permute.xlu0 3
      %1337 = vperm.xlu0 %1336, %v320
      %v1338 = vpop.permute.xlu0 %1337
      %1340 = vset.pattern.permute.xlu0 3
      %1341 = vperm.xlu0 %1340, %v321
      %v1342 = vpop.permute.xlu0 %1341
      %1344 = vset.pattern.permute.xlu0 3
      %1345 = vperm.xlu0 %1344, %v322
      %v1346 = vpop.permute.xlu0 %1345
      %1348 = vset.pattern.permute.xlu0 3
      %1349 = vperm.xlu0 %1348, %v323
      %v1350 = vpop.permute.xlu0 %1349
      %1352 = vset.pattern.permute.xlu0 3
      %1353 = vperm.xlu0 %1352, %v324
      %v1354 = vpop.permute.xlu0 %1353
      %1356 = vset.pattern.permute.xlu0 3
      %1357 = vperm.xlu0 %1356, %v325
      %v1358 = vpop.permute.xlu0 %1357
      %1360 = vset.pattern.permute.xlu0 3
      %1361 = vperm.xlu0 %1360, %v326
      %v1362 = vpop.permute.xlu0 %1361
      %1364 = vset.pattern.permute.xlu0 3
      %1365 = vperm.xlu0 %1364, %v327
      %v1366 = vpop.permute.xlu0 %1365
      %1368 = vset.pattern.permute.xlu0 3
      %1369 = vperm.xlu0 %1368, %v328
      %v1370 = vpop.permute.xlu0 %1369
      %1372 = vset.pattern.permute.xlu0 3
      %1373 = vperm.xlu0 %1372, %v329
      %v1374 = vpop.permute.xlu0 %1373
      %1376 = vset.pattern.permute.xlu0 3
      %1377 = vperm.xlu0 %1376, %v330
      %v1378 = vpop.permute.xlu0 %1377
      %1380 = vset.pattern.permute.xlu0 3
      %1381 = vperm.xlu0 %1380, %v331
      %v1382 = vpop.permute.xlu0 %1381
      %1384 = vset.pattern.permute.xlu0 3
      %1385 = vperm.xlu0 %1384, %v332
      %v1386 = vpop.permute.xlu0 %1385
      %1388 = vset.pattern.permute.xlu0 3
      %1389 = vperm.xlu0 %1388, %v333
      %v1390 = vpop.permute.xlu0 %1389
      %1392 = vset.pattern.permute.xlu0 3
      %1393 = vperm.xlu0 %1392, %v334
      %v1394 = vpop.permute.xlu0 %1393
      %1396 = vset.pattern.permute.xlu0 3
      %1397 = vperm.xlu0 %1396, %v335
      %v1398 = vpop.permute.xlu0 %1397
      %1400 = vset.pattern.permute.xlu0 3
      %1401 = vperm.xlu0 %1400, %v336
      %v1402 = vpop.permute.xlu0 %1401
      %1404 = vset.pattern.permute.xlu0 3
      %1405 = vperm.xlu0 %1404, %v337
      %v1406 = vpop.permute.xlu0 %1405
      %1408 = vset.pattern.permute.xlu0 3
      %1409 = vperm.xlu0 %1408, %v338
      %v1410 = vpop.permute.xlu0 %1409
      %1412 = vset.pattern.permute.xlu0 3
      %1413 = vperm.xlu0 %1412, %v339
      %v1414 = vpop.permute.xlu0 %1413
      %1416 = vset.pattern.permute.xlu0 3
      %1417 = vperm.xlu0 %1416, %v340
      %v1418 = vpop.permute.xlu0 %1417
      %v1421 = vlaneseq
      %v1422 = vshrl.u32 %v1421, 7
      %v1423 = vsub.s32 0, %v1422
      %v1424 = vrot.slane %v1291, %v1423
      %v1425 = vlaneseq
      %v1426 = vshrl.u32 %v1425, 7
      %v1427 = vsub.s32 1, %v1426
      %v1428 = vrot.slane %v1291, %v1427
      %v1429 = vlaneseq
      %v1430 = vshrl.u32 %v1429, 7
      %v1431 = vsub.s32 2, %v1430
      %v1432 = vrot.slane %v1291, %v1431
      %v1436 = vmul.f32 %v1294, %v1424
      %v1437 = vmul.f32 %v1294, %v1428
      %v1438 = vmul.f32 %v1294, %v1432
      %v1439 = vmul.f32 %v1298, %v1424
      %v1440 = vmul.f32 %v1298, %v1428
      %v1441 = vmul.f32 %v1298, %v1432
      %v1442 = vmul.f32 %v1302, %v1424
      %v1443 = vmul.f32 %v1302, %v1428
      %v1444 = vmul.f32 %v1302, %v1432
      %v1445 = vmul.f32 %v1306, %v1424
      %v1446 = vmul.f32 %v1306, %v1428
      %v1447 = vmul.f32 %v1306, %v1432
      %v1448 = vmul.f32 %v1310, %v1424
      %v1449 = vmul.f32 %v1310, %v1428
      %v1450 = vmul.f32 %v1310, %v1432
      %v1451 = vmul.f32 %v1314, %v1424
      %v1452 = vmul.f32 %v1314, %v1428
      %v1453 = vmul.f32 %v1314, %v1432
      %v1454 = vmul.f32 %v1318, %v1424
      %v1455 = vmul.f32 %v1318, %v1428
      %v1456 = vmul.f32 %v1318, %v1432
      %v1457 = vmul.f32 %v1322, %v1424
      %v1458 = vmul.f32 %v1322, %v1428
      %v1459 = vmul.f32 %v1322, %v1432
      %v1460 = vmul.f32 %v1326, %v1424
      %v1461 = vmul.f32 %v1326, %v1428
      %v1462 = vmul.f32 %v1326, %v1432
      %v1463 = vmul.f32 %v1330, %v1424
      %v1464 = vmul.f32 %v1330, %v1428
      %v1465 = vmul.f32 %v1330, %v1432
      %v1466 = vmul.f32 %v1334, %v1424
      %v1467 = vmul.f32 %v1334, %v1428
      %v1468 = vmul.f32 %v1334, %v1432
      %v1469 = vmul.f32 %v1338, %v1424
      %v1470 = vmul.f32 %v1338, %v1428
      %v1471 = vmul.f32 %v1338, %v1432
      %v1472 = vmul.f32 %v1342, %v1424
      %v1473 = vmul.f32 %v1342, %v1428
      %v1474 = vmul.f32 %v1342, %v1432
      %v1475 = vmul.f32 %v1346, %v1424
      %v1476 = vmul.f32 %v1346, %v1428
      %v1477 = vmul.f32 %v1346, %v1432
      %v1478 = vmul.f32 %v1350, %v1424
      %v1479 = vmul.f32 %v1350, %v1428
      %v1480 = vmul.f32 %v1350, %v1432
      %v1481 = vmul.f32 %v1354, %v1424
      %v1482 = vmul.f32 %v1354, %v1428
      %v1483 = vmul.f32 %v1354, %v1432
      %v1484 = vmul.f32 %v1358, %v1424
      %v1485 = vmul.f32 %v1358, %v1428
      %v1486 = vmul.f32 %v1358, %v1432
      %v1487 = vmul.f32 %v1362, %v1424
      %v1488 = vmul.f32 %v1362, %v1428
      %v1489 = vmul.f32 %v1362, %v1432
      %v1490 = vmul.f32 %v1366, %v1424
      %v1491 = vmul.f32 %v1366, %v1428
      %v1492 = vmul.f32 %v1366, %v1432
      %v1493 = vmul.f32 %v1370, %v1424
      %v1494 = vmul.f32 %v1370, %v1428
      %v1495 = vmul.f32 %v1370, %v1432
      %v1496 = vmul.f32 %v1374, %v1424
      %v1497 = vmul.f32 %v1374, %v1428
      %v1498 = vmul.f32 %v1374, %v1432
      %v1499 = vmul.f32 %v1378, %v1424
      %v1500 = vmul.f32 %v1378, %v1428
      %v1501 = vmul.f32 %v1378, %v1432
      %v1502 = vmul.f32 %v1382, %v1424
      %v1503 = vmul.f32 %v1382, %v1428
      %v1504 = vmul.f32 %v1382, %v1432
      %v1505 = vmul.f32 %v1386, %v1424
      %v1506 = vmul.f32 %v1386, %v1428
      %v1507 = vmul.f32 %v1386, %v1432
      %v1508 = vmul.f32 %v1390, %v1424
      %v1509 = vmul.f32 %v1390, %v1428
      %v1510 = vmul.f32 %v1390, %v1432
      %v1511 = vmul.f32 %v1394, %v1424
      %v1512 = vmul.f32 %v1394, %v1428
      %v1513 = vmul.f32 %v1394, %v1432
      %v1514 = vmul.f32 %v1398, %v1424
      %v1515 = vmul.f32 %v1398, %v1428
      %v1516 = vmul.f32 %v1398, %v1432
      %v1517 = vmul.f32 %v1402, %v1424
      %v1518 = vmul.f32 %v1402, %v1428
      %v1519 = vmul.f32 %v1402, %v1432
      %v1520 = vmul.f32 %v1406, %v1424
      %v1521 = vmul.f32 %v1406, %v1428
      %v1522 = vmul.f32 %v1406, %v1432
      %v1523 = vmul.f32 %v1410, %v1424
      %v1524 = vmul.f32 %v1410, %v1428
      %v1525 = vmul.f32 %v1410, %v1432
      %v1526 = vmul.f32 %v1414, %v1424
      %v1527 = vmul.f32 %v1414, %v1428
      %v1528 = vmul.f32 %v1414, %v1432
      %v1529 = vmul.f32 %v1418, %v1424
      %v1530 = vmul.f32 %v1418, %v1428
      %v1531 = vmul.f32 %v1418, %v1432
      %v1532 = vadd.f32 %v1194, %v1436
      %v1533 = vadd.f32 %v1195, %v1437
      %v1534 = vadd.f32 %v1196, %v1438
      %v1535 = vadd.f32 %v1197, %v1439
      %v1536 = vadd.f32 %v1198, %v1440
      %v1537 = vadd.f32 %v1199, %v1441
      %v1538 = vadd.f32 %v1200, %v1442
      %v1539 = vadd.f32 %v1201, %v1443
      %v1540 = vadd.f32 %v1202, %v1444
      %v1541 = vadd.f32 %v1203, %v1445
      %v1542 = vadd.f32 %v1204, %v1446
      %v1543 = vadd.f32 %v1205, %v1447
      %v1544 = vadd.f32 %v1206, %v1448
      %v1545 = vadd.f32 %v1207, %v1449
      %v1546 = vadd.f32 %v1208, %v1450
      %v1547 = vadd.f32 %v1209, %v1451
      %v1548 = vadd.f32 %v1210, %v1452
      %v1549 = vadd.f32 %v1211, %v1453
      %v1550 = vadd.f32 %v1212, %v1454
      %v1551 = vadd.f32 %v1213, %v1455
      %v1552 = vadd.f32 %v1214, %v1456
      %v1553 = vadd.f32 %v1215, %v1457
      %v1554 = vadd.f32 %v1216, %v1458
      %v1555 = vadd.f32 %v1217, %v1459
      %v1556 = vadd.f32 %v1218, %v1460
      %v1557 = vadd.f32 %v1219, %v1461
      %v1558 = vadd.f32 %v1220, %v1462
      %v1559 = vadd.f32 %v1221, %v1463
      %v1560 = vadd.f32 %v1222, %v1464
      %v1561 = vadd.f32 %v1223, %v1465
      %v1562 = vadd.f32 %v1224, %v1466
      %v1563 = vadd.f32 %v1225, %v1467
      %v1564 = vadd.f32 %v1226, %v1468
      %v1565 = vadd.f32 %v1227, %v1469
      %v1566 = vadd.f32 %v1228, %v1470
      %v1567 = vadd.f32 %v1229, %v1471
      %v1568 = vadd.f32 %v1230, %v1472
      %v1569 = vadd.f32 %v1231, %v1473
      %v1570 = vadd.f32 %v1232, %v1474
      %v1571 = vadd.f32 %v1233, %v1475
      %v1572 = vadd.f32 %v1234, %v1476
      %v1573 = vadd.f32 %v1235, %v1477
      %v1574 = vadd.f32 %v1236, %v1478
      %v1575 = vadd.f32 %v1237, %v1479
      %v1576 = vadd.f32 %v1238, %v1480
      %v1577 = vadd.f32 %v1239, %v1481
      %v1578 = vadd.f32 %v1240, %v1482
      %v1579 = vadd.f32 %v1241, %v1483
      %v1580 = vadd.f32 %v1242, %v1484
      %v1581 = vadd.f32 %v1243, %v1485
      %v1582 = vadd.f32 %v1244, %v1486
      %v1583 = vadd.f32 %v1245, %v1487
      %v1584 = vadd.f32 %v1246, %v1488
      %v1585 = vadd.f32 %v1247, %v1489
      %v1586 = vadd.f32 %v1248, %v1490
      %v1587 = vadd.f32 %v1249, %v1491
      %v1588 = vadd.f32 %v1250, %v1492
      %v1589 = vadd.f32 %v1251, %v1493
      %v1590 = vadd.f32 %v1252, %v1494
      %v1591 = vadd.f32 %v1253, %v1495
      %v1592 = vadd.f32 %v1254, %v1496
      %v1593 = vadd.f32 %v1255, %v1497
      %v1594 = vadd.f32 %v1256, %v1498
      %v1595 = vadd.f32 %v1257, %v1499
      %v1596 = vadd.f32 %v1258, %v1500
      %v1597 = vadd.f32 %v1259, %v1501
      %v1598 = vadd.f32 %v1260, %v1502
      %v1599 = vadd.f32 %v1261, %v1503
      %v1600 = vadd.f32 %v1262, %v1504
      %v1601 = vadd.f32 %v1263, %v1505
      %v1602 = vadd.f32 %v1264, %v1506
      %v1603 = vadd.f32 %v1265, %v1507
      %v1604 = vadd.f32 %v1266, %v1508
      %v1605 = vadd.f32 %v1267, %v1509
      %v1606 = vadd.f32 %v1268, %v1510
      %v1607 = vadd.f32 %v1269, %v1511
      %v1608 = vadd.f32 %v1270, %v1512
      %v1609 = vadd.f32 %v1271, %v1513
      %v1610 = vadd.f32 %v1272, %v1514
      %v1611 = vadd.f32 %v1273, %v1515
      %v1612 = vadd.f32 %v1274, %v1516
      %v1613 = vadd.f32 %v1275, %v1517
      %v1614 = vadd.f32 %v1276, %v1518
      %v1615 = vadd.f32 %v1277, %v1519
      %v1616 = vadd.f32 %v1278, %v1520
      %v1617 = vadd.f32 %v1279, %v1521
      %v1618 = vadd.f32 %v1280, %v1522
      %v1619 = vadd.f32 %v1281, %v1523
      %v1620 = vadd.f32 %v1282, %v1524
      %v1621 = vadd.f32 %v1283, %v1525
      %v1622 = vadd.f32 %v1284, %v1526
      %v1623 = vadd.f32 %v1285, %v1527
      %v1624 = vadd.f32 %v1286, %v1528
      %v1625 = vadd.f32 %v1287, %v1529
      %v1626 = vadd.f32 %v1288, %v1530
      %v1627 = vadd.f32 %v1289, %v1531
      %v1628 = vld [vmem:[%s2] sm:$0x7]
      %v1630 = vlaneseq
      %v1631 = vshrl.u32 %v1630, 7
      %v1632 = vsub.s32 0, %v1631
      %v1633 = vrot.slane %v1628, %v1632
      %v1634 = vlaneseq
      %v1635 = vshrl.u32 %v1634, 7
      %v1636 = vsub.s32 1, %v1635
      %v1637 = vrot.slane %v1628, %v1636
      %v1638 = vlaneseq
      %v1639 = vshrl.u32 %v1638, 7
      %v1640 = vsub.s32 2, %v1639
      %v1641 = vrot.slane %v1628, %v1640
      %v1645 = vadd.f32 %v1532, %v1633
      %v1646 = vadd.f32 %v1533, %v1637
      %v1647 = vadd.f32 %v1534, %v1641
      %v1648 = vadd.f32 %v1535, %v1633
      %v1649 = vadd.f32 %v1536, %v1637
      %v1650 = vadd.f32 %v1537, %v1641
      %v1651 = vadd.f32 %v1538, %v1633
      %v1652 = vadd.f32 %v1539, %v1637
      %v1653 = vadd.f32 %v1540, %v1641
      %v1654 = vadd.f32 %v1541, %v1633
      %v1655 = vadd.f32 %v1542, %v1637
      %v1656 = vadd.f32 %v1543, %v1641
      %v1657 = vadd.f32 %v1544, %v1633
      %v1658 = vadd.f32 %v1545, %v1637
      %v1659 = vadd.f32 %v1546, %v1641
      %v1660 = vadd.f32 %v1547, %v1633
      %v1661 = vadd.f32 %v1548, %v1637
      %v1662 = vadd.f32 %v1549, %v1641
      %v1663 = vadd.f32 %v1550, %v1633
      %v1664 = vadd.f32 %v1551, %v1637
      %v1665 = vadd.f32 %v1552, %v1641
      %v1666 = vadd.f32 %v1553, %v1633
      %v1667 = vadd.f32 %v1554, %v1637
      %v1668 = vadd.f32 %v1555, %v1641
      %v1669 = vadd.f32 %v1556, %v1633
      %v1670 = vadd.f32 %v1557, %v1637
      %v1671 = vadd.f32 %v1558, %v1641
      %v1672 = vadd.f32 %v1559, %v1633
      %v1673 = vadd.f32 %v1560, %v1637
      %v1674 = vadd.f32 %v1561, %v1641
      %v1675 = vadd.f32 %v1562, %v1633
      %v1676 = vadd.f32 %v1563, %v1637
      %v1677 = vadd.f32 %v1564, %v1641
      %v1678 = vadd.f32 %v1565, %v1633
      %v1679 = vadd.f32 %v1566, %v1637
      %v1680 = vadd.f32 %v1567, %v1641
      %v1681 = vadd.f32 %v1568, %v1633
      %v1682 = vadd.f32 %v1569, %v1637
      %v1683 = vadd.f32 %v1570, %v1641
      %v1684 = vadd.f32 %v1571, %v1633
      %v1685 = vadd.f32 %v1572, %v1637
      %v1686 = vadd.f32 %v1573, %v1641
      %v1687 = vadd.f32 %v1574, %v1633
      %v1688 = vadd.f32 %v1575, %v1637
      %v1689 = vadd.f32 %v1576, %v1641
      %v1690 = vadd.f32 %v1577, %v1633
      %v1691 = vadd.f32 %v1578, %v1637
      %v1692 = vadd.f32 %v1579, %v1641
      %v1693 = vadd.f32 %v1580, %v1633
      %v1694 = vadd.f32 %v1581, %v1637
      %v1695 = vadd.f32 %v1582, %v1641
      %v1696 = vadd.f32 %v1583, %v1633
      %v1697 = vadd.f32 %v1584, %v1637
      %v1698 = vadd.f32 %v1585, %v1641
      %v1699 = vadd.f32 %v1586, %v1633
      %v1700 = vadd.f32 %v1587, %v1637
      %v1701 = vadd.f32 %v1588, %v1641
      %v1702 = vadd.f32 %v1589, %v1633
      %v1703 = vadd.f32 %v1590, %v1637
      %v1704 = vadd.f32 %v1591, %v1641
      %v1705 = vadd.f32 %v1592, %v1633
      %v1706 = vadd.f32 %v1593, %v1637
      %v1707 = vadd.f32 %v1594, %v1641
      %v1708 = vadd.f32 %v1595, %v1633
      %v1709 = vadd.f32 %v1596, %v1637
      %v1710 = vadd.f32 %v1597, %v1641
      %v1711 = vadd.f32 %v1598, %v1633
      %v1712 = vadd.f32 %v1599, %v1637
      %v1713 = vadd.f32 %v1600, %v1641
      %v1714 = vadd.f32 %v1601, %v1633
      %v1715 = vadd.f32 %v1602, %v1637
      %v1716 = vadd.f32 %v1603, %v1641
      %v1717 = vadd.f32 %v1604, %v1633
      %v1718 = vadd.f32 %v1605, %v1637
      %v1719 = vadd.f32 %v1606, %v1641
      %v1720 = vadd.f32 %v1607, %v1633
      %v1721 = vadd.f32 %v1608, %v1637
      %v1722 = vadd.f32 %v1609, %v1641
      %v1723 = vadd.f32 %v1610, %v1633
      %v1724 = vadd.f32 %v1611, %v1637
      %v1725 = vadd.f32 %v1612, %v1641
      %v1726 = vadd.f32 %v1613, %v1633
      %v1727 = vadd.f32 %v1614, %v1637
      %v1728 = vadd.f32 %v1615, %v1641
      %v1729 = vadd.f32 %v1616, %v1633
      %v1730 = vadd.f32 %v1617, %v1637
      %v1731 = vadd.f32 %v1618, %v1641
      %v1732 = vadd.f32 %v1619, %v1633
      %v1733 = vadd.f32 %v1620, %v1637
      %v1734 = vadd.f32 %v1621, %v1641
      %v1735 = vadd.f32 %v1622, %v1633
      %v1736 = vadd.f32 %v1623, %v1637
      %v1737 = vadd.f32 %v1624, %v1641
      %v1738 = vadd.f32 %v1625, %v1633
      %v1739 = vadd.f32 %v1626, %v1637
      %v1740 = vadd.f32 %v1627, %v1641
      %v1741 = vmax.f32 %v1645, 0.0
      %v1742 = vmax.f32 %v1646, 0.0
      %v1743 = vmax.f32 %v1647, 0.0
      %v1744 = vmax.f32 %v1648, 0.0
      %v1745 = vmax.f32 %v1649, 0.0
      %v1746 = vmax.f32 %v1650, 0.0
      %v1747 = vmax.f32 %v1651, 0.0
      %v1748 = vmax.f32 %v1652, 0.0
      %v1749 = vmax.f32 %v1653, 0.0
      %v1750 = vmax.f32 %v1654, 0.0
      %v1751 = vmax.f32 %v1655, 0.0
      %v1752 = vmax.f32 %v1656, 0.0
      %v1753 = vmax.f32 %v1657, 0.0
      %v1754 = vmax.f32 %v1658, 0.0
      %v1755 = vmax.f32 %v1659, 0.0
      %v1756 = vmax.f32 %v1660, 0.0
      %v1757 = vmax.f32 %v1661, 0.0
      %v1758 = vmax.f32 %v1662, 0.0
      %v1759 = vmax.f32 %v1663, 0.0
      %v1760 = vmax.f32 %v1664, 0.0
      %v1761 = vmax.f32 %v1665, 0.0
      %v1762 = vmax.f32 %v1666, 0.0
      %v1763 = vmax.f32 %v1667, 0.0
      %v1764 = vmax.f32 %v1668, 0.0
      %v1765 = vmax.f32 %v1669, 0.0
      %v1766 = vmax.f32 %v1670, 0.0
      %v1767 = vmax.f32 %v1671, 0.0
      %v1768 = vmax.f32 %v1672, 0.0
      %v1769 = vmax.f32 %v1673, 0.0
      %v1770 = vmax.f32 %v1674, 0.0
      %v1771 = vmax.f32 %v1675, 0.0
      %v1772 = vmax.f32 %v1676, 0.0
      %v1773 = vmax.f32 %v1677, 0.0
      %v1774 = vmax.f32 %v1678, 0.0
      %v1775 = vmax.f32 %v1679, 0.0
      %v1776 = vmax.f32 %v1680, 0.0
      %v1777 = vmax.f32 %v1681, 0.0
      %v1778 = vmax.f32 %v1682, 0.0
      %v1779 = vmax.f32 %v1683, 0.0
      %v1780 = vmax.f32 %v1684, 0.0
      %v1781 = vmax.f32 %v1685, 0.0
      %v1782 = vmax.f32 %v1686, 0.0
      %v1783 = vmax.f32 %v1687, 0.0
      %v1784 = vmax.f32 %v1688, 0.0
      %v1785 = vmax.f32 %v1689, 0.0
      %v1786 = vmax.f32 %v1690, 0.0
      %v1787 = vmax.f32 %v1691, 0.0
      %v1788 = vmax.f32 %v1692, 0.0
      %v1789 = vmax.f32 %v1693, 0.0
      %v1790 = vmax.f32 %v1694, 0.0
      %v1791 = vmax.f32 %v1695, 0.0
      %v1792 = vmax.f32 %v1696, 0.0
      %v1793 = vmax.f32 %v1697, 0.0
      %v1794 = vmax.f32 %v1698, 0.0
      %v1795 = vmax.f32 %v1699, 0.0
      %v1796 = vmax.f32 %v1700, 0.0
      %v1797 = vmax.f32 %v1701, 0.0
      %v1798 = vmax.f32 %v1702, 0.0
      %v1799 = vmax.f32 %v1703, 0.0
      %v1800 = vmax.f32 %v1704, 0.0
      %v1801 = vmax.f32 %v1705, 0.0
      %v1802 = vmax.f32 %v1706, 0.0
      %v1803 = vmax.f32 %v1707, 0.0
      %v1804 = vmax.f32 %v1708, 0.0
      %v1805 = vmax.f32 %v1709, 0.0
      %v1806 = vmax.f32 %v1710, 0.0
      %v1807 = vmax.f32 %v1711, 0.0
      %v1808 = vmax.f32 %v1712, 0.0
      %v1809 = vmax.f32 %v1713, 0.0
      %v1810 = vmax.f32 %v1714, 0.0
      %v1811 = vmax.f32 %v1715, 0.0
      %v1812 = vmax.f32 %v1716, 0.0
      %v1813 = vmax.f32 %v1717, 0.0
      %v1814 = vmax.f32 %v1718, 0.0
      %v1815 = vmax.f32 %v1719, 0.0
      %v1816 = vmax.f32 %v1720, 0.0
      %v1817 = vmax.f32 %v1721, 0.0
      %v1818 = vmax.f32 %v1722, 0.0
      %v1819 = vmax.f32 %v1723, 0.0
      %v1820 = vmax.f32 %v1724, 0.0
      %v1821 = vmax.f32 %v1725, 0.0
      %v1822 = vmax.f32 %v1726, 0.0
      %v1823 = vmax.f32 %v1727, 0.0
      %v1824 = vmax.f32 %v1728, 0.0
      %v1825 = vmax.f32 %v1729, 0.0
      %v1826 = vmax.f32 %v1730, 0.0
      %v1827 = vmax.f32 %v1731, 0.0
      %v1828 = vmax.f32 %v1732, 0.0
      %v1829 = vmax.f32 %v1733, 0.0
      %v1830 = vmax.f32 %v1734, 0.0
      %v1831 = vmax.f32 %v1735, 0.0
      %v1832 = vmax.f32 %v1736, 0.0
      %v1833 = vmax.f32 %v1737, 0.0
      %v1834 = vmax.f32 %v1738, 0.0
      %v1835 = vmax.f32 %v1739, 0.0
      %v1836 = vmax.f32 %v1740, 0.0
      %v1837 = vadd.f32 %v1741, %v1742
      %v1838 = vadd.f32 %v1837, %v1743
      %1839 = vadd.xlane.f32.xlu0 %v1838
      %v1840 = vpop.xlane.xlu0 %1839
      %v1841 = vadd.f32 %v1744, %v1745
      %v1842 = vadd.f32 %v1841, %v1746
      %1843 = vadd.xlane.f32.xlu0 %v1842
      %v1844 = vpop.xlane.xlu0 %1843
      %v1845 = vadd.f32 %v1747, %v1748
      %v1846 = vadd.f32 %v1845, %v1749
      %1847 = vadd.xlane.f32.xlu0 %v1846
      %v1848 = vpop.xlane.xlu0 %1847
      %v1849 = vadd.f32 %v1750, %v1751
      %v1850 = vadd.f32 %v1849, %v1752
      %1851 = vadd.xlane.f32.xlu0 %v1850
      %v1852 = vpop.xlane.xlu0 %1851
      %v1853 = vadd.f32 %v1753, %v1754
      %v1854 = vadd.f32 %v1853, %v1755
      %1855 = vadd.xlane.f32.xlu0 %v1854
      %v1856 = vpop.xlane.xlu0 %1855
      %v1857 = vadd.f32 %v1756, %v1757
      %v1858 = vadd.f32 %v1857, %v1758
      %1859 = vadd.xlane.f32.xlu0 %v1858
      %v1860 = vpop.xlane.xlu0 %1859
      %v1861 = vadd.f32 %v1759, %v1760
      %v1862 = vadd.f32 %v1861, %v1761
      %1863 = vadd.xlane.f32.xlu0 %v1862
      %v1864 = vpop.xlane.xlu0 %1863
      %v1865 = vadd.f32 %v1762, %v1763
      %v1866 = vadd.f32 %v1865, %v1764
      %1867 = vadd.xlane.f32.xlu0 %v1866
      %v1868 = vpop.xlane.xlu0 %1867
      %v1869 = vadd.f32 %v1765, %v1766
      %v1870 = vadd.f32 %v1869, %v1767
      %1871 = vadd.xlane.f32.xlu0 %v1870
      %v1872 = vpop.xlane.xlu0 %1871
      %v1873 = vadd.f32 %v1768, %v1769
      %v1874 = vadd.f32 %v1873, %v1770
      %1875 = vadd.xlane.f32.xlu0 %v1874
      %v1876 = vpop.xlane.xlu0 %1875
      %v1877 = vadd.f32 %v1771, %v1772
      %v1878 = vadd.f32 %v1877, %v1773
      %1879 = vadd.xlane.f32.xlu0 %v1878
      %v1880 = vpop.xlane.xlu0 %1879
      %v1881 = vadd.f32 %v1774, %v1775
      %v1882 = vadd.f32 %v1881, %v1776
      %1883 = vadd.xlane.f32.xlu0 %v1882
      %v1884 = vpop.xlane.xlu0 %1883
      %v1885 = vadd.f32 %v1777, %v1778
      %v1886 = vadd.f32 %v1885, %v1779
      %1887 = vadd.xlane.f32.xlu0 %v1886
      %v1888 = vpop.xlane.xlu0 %1887
      %v1889 = vadd.f32 %v1780, %v1781
      %v1890 = vadd.f32 %v1889, %v1782
      %1891 = vadd.xlane.f32.xlu0 %v1890
      %v1892 = vpop.xlane.xlu0 %1891
      %v1893 = vadd.f32 %v1783, %v1784
      %v1894 = vadd.f32 %v1893, %v1785
      %1895 = vadd.xlane.f32.xlu0 %v1894
      %v1896 = vpop.xlane.xlu0 %1895
      %v1897 = vadd.f32 %v1786, %v1787
      %v1898 = vadd.f32 %v1897, %v1788
      %1899 = vadd.xlane.f32.xlu0 %v1898
      %v1900 = vpop.xlane.xlu0 %1899
      %v1901 = vadd.f32 %v1789, %v1790
      %v1902 = vadd.f32 %v1901, %v1791
      %1903 = vadd.xlane.f32.xlu0 %v1902
      %v1904 = vpop.xlane.xlu0 %1903
      %v1905 = vadd.f32 %v1792, %v1793
      %v1906 = vadd.f32 %v1905, %v1794
      %1907 = vadd.xlane.f32.xlu0 %v1906
      %v1908 = vpop.xlane.xlu0 %1907
      %v1909 = vadd.f32 %v1795, %v1796
      %v1910 = vadd.f32 %v1909, %v1797
      %1911 = vadd.xlane.f32.xlu0 %v1910
      %v1912 = vpop.xlane.xlu0 %1911
      %v1913 = vadd.f32 %v1798, %v1799
      %v1914 = vadd.f32 %v1913, %v1800
      %1915 = vadd.xlane.f32.xlu0 %v1914
      %v1916 = vpop.xlane.xlu0 %1915
      %v1917 = vadd.f32 %v1801, %v1802
      %v1918 = vadd.f32 %v1917, %v1803
      %1919 = vadd.xlane.f32.xlu0 %v1918
      %v1920 = vpop.xlane.xlu0 %1919
      %v1921 = vadd.f32 %v1804, %v1805
      %v1922 = vadd.f32 %v1921, %v1806
      %1923 = vadd.xlane.f32.xlu0 %v1922
      %v1924 = vpop.xlane.xlu0 %1923
      %v1925 = vadd.f32 %v1807, %v1808
      %v1926 = vadd.f32 %v1925, %v1809
      %1927 = vadd.xlane.f32.xlu0 %v1926
      %v1928 = vpop.xlane.xlu0 %1927
      %v1929 = vadd.f32 %v1810, %v1811
      %v1930 = vadd.f32 %v1929, %v1812
      %1931 = vadd.xlane.f32.xlu0 %v1930
      %v1932 = vpop.xlane.xlu0 %1931
      %v1933 = vadd.f32 %v1813, %v1814
      %v1934 = vadd.f32 %v1933, %v1815
      %1935 = vadd.xlane.f32.xlu0 %v1934
      %v1936 = vpop.xlane.xlu0 %1935
      %v1937 = vadd.f32 %v1816, %v1817
      %v1938 = vadd.f32 %v1937, %v1818
      %1939 = vadd.xlane.f32.xlu0 %v1938
      %v1940 = vpop.xlane.xlu0 %1939
      %v1941 = vadd.f32 %v1819, %v1820
      %v1942 = vadd.f32 %v1941, %v1821
      %1943 = vadd.xlane.f32.xlu0 %v1942
      %v1944 = vpop.xlane.xlu0 %1943
      %v1945 = vadd.f32 %v1822, %v1823
      %v1946 = vadd.f32 %v1945, %v1824
      %1947 = vadd.xlane.f32.xlu0 %v1946
      %v1948 = vpop.xlane.xlu0 %1947
      %v1949 = vadd.f32 %v1825, %v1826
      %v1950 = vadd.f32 %v1949, %v1827
      %1951 = vadd.xlane.f32.xlu0 %v1950
      %v1952 = vpop.xlane.xlu0 %1951
      %v1953 = vadd.f32 %v1828, %v1829
      %v1954 = vadd.f32 %v1953, %v1830
      %1955 = vadd.xlane.f32.xlu0 %v1954
      %v1956 = vpop.xlane.xlu0 %1955
      %v1957 = vadd.f32 %v1831, %v1832
      %v1958 = vadd.f32 %v1957, %v1833
      %1959 = vadd.xlane.f32.xlu0 %v1958
      %v1960 = vpop.xlane.xlu0 %1959
      %v1961 = vadd.f32 %v1834, %v1835
      %v1962 = vadd.f32 %v1961, %v1836
      %1963 = vadd.xlane.f32.xlu0 %v1962
      %v1964 = vpop.xlane.xlu0 %1963
      %v1965 = vmul.f32 %v1840, 0.0033333334
      %v1966 = vmul.f32 %v1844, 0.0033333334
      %v1967 = vmul.f32 %v1848, 0.0033333334
      %v1968 = vmul.f32 %v1852, 0.0033333334
      %v1969 = vmul.f32 %v1856, 0.0033333334
      %v1970 = vmul.f32 %v1860, 0.0033333334
      %v1971 = vmul.f32 %v1864, 0.0033333334
      %v1972 = vmul.f32 %v1868, 0.0033333334
      %v1973 = vmul.f32 %v1872, 0.0033333334
      %v1974 = vmul.f32 %v1876, 0.0033333334
      %v1975 = vmul.f32 %v1880, 0.0033333334
      %v1976 = vmul.f32 %v1884, 0.0033333334
      %v1977 = vmul.f32 %v1888, 0.0033333334
      %v1978 = vmul.f32 %v1892, 0.0033333334
      %v1979 = vmul.f32 %v1896, 0.0033333334
      %v1980 = vmul.f32 %v1900, 0.0033333334
      %v1981 = vmul.f32 %v1904, 0.0033333334
      %v1982 = vmul.f32 %v1908, 0.0033333334
      %v1983 = vmul.f32 %v1912, 0.0033333334
      %v1984 = vmul.f32 %v1916, 0.0033333334
      %v1985 = vmul.f32 %v1920, 0.0033333334
      %v1986 = vmul.f32 %v1924, 0.0033333334
      %v1987 = vmul.f32 %v1928, 0.0033333334
      %v1988 = vmul.f32 %v1932, 0.0033333334
      %v1989 = vmul.f32 %v1936, 0.0033333334
      %v1990 = vmul.f32 %v1940, 0.0033333334
      %v1991 = vmul.f32 %v1944, 0.0033333334
      %v1992 = vmul.f32 %v1948, 0.0033333334
      %v1993 = vmul.f32 %v1952, 0.0033333334
      %v1994 = vmul.f32 %v1956, 0.0033333334
      %v1995 = vmul.f32 %v1960, 0.0033333334
      %v1996 = vmul.f32 %v1964, 0.0033333334
      %v1997 = vsub.f32 %v1741, %v1965
      %v1998 = vsub.f32 %v1742, %v1965
      %v1999 = vsub.f32 %v1743, %v1965
      %v2000 = vsub.f32 %v1744, %v1966
      %v2001 = vsub.f32 %v1745, %v1966
      %v2002 = vsub.f32 %v1746, %v1966
      %v2003 = vsub.f32 %v1747, %v1967
      %v2004 = vsub.f32 %v1748, %v1967
      %v2005 = vsub.f32 %v1749, %v1967
      %v2006 = vsub.f32 %v1750, %v1968
      %v2007 = vsub.f32 %v1751, %v1968
      %v2008 = vsub.f32 %v1752, %v1968
      %v2009 = vsub.f32 %v1753, %v1969
      %v2010 = vsub.f32 %v1754, %v1969
      %v2011 = vsub.f32 %v1755, %v1969
      %v2012 = vsub.f32 %v1756, %v1970
      %v2013 = vsub.f32 %v1757, %v1970
      %v2014 = vsub.f32 %v1758, %v1970
      %v2015 = vsub.f32 %v1759, %v1971
      %v2016 = vsub.f32 %v1760, %v1971
      %v2017 = vsub.f32 %v1761, %v1971
      %v2018 = vsub.f32 %v1762, %v1972
      %v2019 = vsub.f32 %v1763, %v1972
      %v2020 = vsub.f32 %v1764, %v1972
      %v2021 = vsub.f32 %v1765, %v1973
      %v2022 = vsub.f32 %v1766, %v1973
      %v2023 = vsub.f32 %v1767, %v1973
      %v2024 = vsub.f32 %v1768, %v1974
      %v2025 = vsub.f32 %v1769, %v1974
      %v2026 = vsub.f32 %v1770, %v1974
      %v2027 = vsub.f32 %v1771, %v1975
      %v2028 = vsub.f32 %v1772, %v1975
      %v2029 = vsub.f32 %v1773, %v1975
      %v2030 = vsub.f32 %v1774, %v1976
      %v2031 = vsub.f32 %v1775, %v1976
      %v2032 = vsub.f32 %v1776, %v1976
      %v2033 = vsub.f32 %v1777, %v1977
      %v2034 = vsub.f32 %v1778, %v1977
      %v2035 = vsub.f32 %v1779, %v1977
      %v2036 = vsub.f32 %v1780, %v1978
      %v2037 = vsub.f32 %v1781, %v1978
      %v2038 = vsub.f32 %v1782, %v1978
      %v2039 = vsub.f32 %v1783, %v1979
      %v2040 = vsub.f32 %v1784, %v1979
      %v2041 = vsub.f32 %v1785, %v1979
      %v2042 = vsub.f32 %v1786, %v1980
      %v2043 = vsub.f32 %v1787, %v1980
      %v2044 = vsub.f32 %v1788, %v1980
      %v2045 = vsub.f32 %v1789, %v1981
      %v2046 = vsub.f32 %v1790, %v1981
      %v2047 = vsub.f32 %v1791, %v1981
      %v2048 = vsub.f32 %v1792, %v1982
      %v2049 = vsub.f32 %v1793, %v1982
      %v2050 = vsub.f32 %v1794, %v1982
      %v2051 = vsub.f32 %v1795, %v1983
      %v2052 = vsub.f32 %v1796, %v1983
      %v2053 = vsub.f32 %v1797, %v1983
      %v2054 = vsub.f32 %v1798, %v1984
      %v2055 = vsub.f32 %v1799, %v1984
      %v2056 = vsub.f32 %v1800, %v1984
      %v2057 = vsub.f32 %v1801, %v1985
      %v2058 = vsub.f32 %v1802, %v1985
      %v2059 = vsub.f32 %v1803, %v1985
      %v2060 = vsub.f32 %v1804, %v1986
      %v2061 = vsub.f32 %v1805, %v1986
      %v2062 = vsub.f32 %v1806, %v1986
      %v2063 = vsub.f32 %v1807, %v1987
      %v2064 = vsub.f32 %v1808, %v1987
      %v2065 = vsub.f32 %v1809, %v1987
      %v2066 = vsub.f32 %v1810, %v1988
      %v2067 = vsub.f32 %v1811, %v1988
      %v2068 = vsub.f32 %v1812, %v1988
      %v2069 = vsub.f32 %v1813, %v1989
      %v2070 = vsub.f32 %v1814, %v1989
      %v2071 = vsub.f32 %v1815, %v1989
      %v2072 = vsub.f32 %v1816, %v1990
      %v2073 = vsub.f32 %v1817, %v1990
      %v2074 = vsub.f32 %v1818, %v1990
      %v2075 = vsub.f32 %v1819, %v1991
      %v2076 = vsub.f32 %v1820, %v1991
      %v2077 = vsub.f32 %v1821, %v1991
      %v2078 = vsub.f32 %v1822, %v1992
      %v2079 = vsub.f32 %v1823, %v1992
      %v2080 = vsub.f32 %v1824, %v1992
      %v2081 = vsub.f32 %v1825, %v1993
      %v2082 = vsub.f32 %v1826, %v1993
      %v2083 = vsub.f32 %v1827, %v1993
      %v2084 = vsub.f32 %v1828, %v1994
      %v2085 = vsub.f32 %v1829, %v1994
      %v2086 = vsub.f32 %v1830, %v1994
      %v2087 = vsub.f32 %v1831, %v1995
      %v2088 = vsub.f32 %v1832, %v1995
      %v2089 = vsub.f32 %v1833, %v1995
      %v2090 = vsub.f32 %v1834, %v1996
      %v2091 = vsub.f32 %v1835, %v1996
      %v2092 = vsub.f32 %v1836, %v1996
      %v2093 = vld [vmem:[%s5] sm:$0x7]
      %v2095 = vlaneseq
      %v2096 = vshrl.u32 %v2095, 7
      %v2097 = vsub.s32 0, %v2096
      %v2098 = vrot.slane %v2093, %v2097
      %v2099 = vlaneseq
      %v2100 = vshrl.u32 %v2099, 7
      %v2101 = vsub.s32 1, %v2100
      %v2102 = vrot.slane %v2093, %v2101
      %v2103 = vlaneseq
      %v2104 = vshrl.u32 %v2103, 7
      %v2105 = vsub.s32 2, %v2104
      %v2106 = vrot.slane %v2093, %v2105
      %v2110 = vmul.f32 %v1997, %v2098
      %v2111 = vmul.f32 %v1998, %v2102
      %v2112 = vmul.f32 %v1999, %v2106
      %v2113 = vmul.f32 %v2000, %v2098
      %v2114 = vmul.f32 %v2001, %v2102
      %v2115 = vmul.f32 %v2002, %v2106
      %v2116 = vmul.f32 %v2003, %v2098
      %v2117 = vmul.f32 %v2004, %v2102
      %v2118 = vmul.f32 %v2005, %v2106
      %v2119 = vmul.f32 %v2006, %v2098
      %v2120 = vmul.f32 %v2007, %v2102
      %v2121 = vmul.f32 %v2008, %v2106
      %v2122 = vmul.f32 %v2009, %v2098
      %v2123 = vmul.f32 %v2010, %v2102
      %v2124 = vmul.f32 %v2011, %v2106
      %v2125 = vmul.f32 %v2012, %v2098
      %v2126 = vmul.f32 %v2013, %v2102
      %v2127 = vmul.f32 %v2014, %v2106
      %v2128 = vmul.f32 %v2015, %v2098
      %v2129 = vmul.f32 %v2016, %v2102
      %v2130 = vmul.f32 %v2017, %v2106
      %v2131 = vmul.f32 %v2018, %v2098
      %v2132 = vmul.f32 %v2019, %v2102
      %v2133 = vmul.f32 %v2020, %v2106
      %v2134 = vmul.f32 %v2021, %v2098
      %v2135 = vmul.f32 %v2022, %v2102
      %v2136 = vmul.f32 %v2023, %v2106
      %v2137 = vmul.f32 %v2024, %v2098
      %v2138 = vmul.f32 %v2025, %v2102
      %v2139 = vmul.f32 %v2026, %v2106
      %v2140 = vmul.f32 %v2027, %v2098
      %v2141 = vmul.f32 %v2028, %v2102
      %v2142 = vmul.f32 %v2029, %v2106
      %v2143 = vmul.f32 %v2030, %v2098
      %v2144 = vmul.f32 %v2031, %v2102
      %v2145 = vmul.f32 %v2032, %v2106
      %v2146 = vmul.f32 %v2033, %v2098
      %v2147 = vmul.f32 %v2034, %v2102
      %v2148 = vmul.f32 %v2035, %v2106
      %v2149 = vmul.f32 %v2036, %v2098
      %v2150 = vmul.f32 %v2037, %v2102
      %v2151 = vmul.f32 %v2038, %v2106
      %v2152 = vmul.f32 %v2039, %v2098
      %v2153 = vmul.f32 %v2040, %v2102
      %v2154 = vmul.f32 %v2041, %v2106
      %v2155 = vmul.f32 %v2042, %v2098
      %v2156 = vmul.f32 %v2043, %v2102
      %v2157 = vmul.f32 %v2044, %v2106
      %v2158 = vmul.f32 %v2045, %v2098
      %v2159 = vmul.f32 %v2046, %v2102
      %v2160 = vmul.f32 %v2047, %v2106
      %v2161 = vmul.f32 %v2048, %v2098
      %v2162 = vmul.f32 %v2049, %v2102
      %v2163 = vmul.f32 %v2050, %v2106
      %v2164 = vmul.f32 %v2051, %v2098
      %v2165 = vmul.f32 %v2052, %v2102
      %v2166 = vmul.f32 %v2053, %v2106
      %v2167 = vmul.f32 %v2054, %v2098
      %v2168 = vmul.f32 %v2055, %v2102
      %v2169 = vmul.f32 %v2056, %v2106
      %v2170 = vmul.f32 %v2057, %v2098
      %v2171 = vmul.f32 %v2058, %v2102
      %v2172 = vmul.f32 %v2059, %v2106
      %v2173 = vmul.f32 %v2060, %v2098
      %v2174 = vmul.f32 %v2061, %v2102
      %v2175 = vmul.f32 %v2062, %v2106
      %v2176 = vmul.f32 %v2063, %v2098
      %v2177 = vmul.f32 %v2064, %v2102
      %v2178 = vmul.f32 %v2065, %v2106
      %v2179 = vmul.f32 %v2066, %v2098
      %v2180 = vmul.f32 %v2067, %v2102
      %v2181 = vmul.f32 %v2068, %v2106
      %v2182 = vmul.f32 %v2069, %v2098
      %v2183 = vmul.f32 %v2070, %v2102
      %v2184 = vmul.f32 %v2071, %v2106
      %v2185 = vmul.f32 %v2072, %v2098
      %v2186 = vmul.f32 %v2073, %v2102
      %v2187 = vmul.f32 %v2074, %v2106
      %v2188 = vmul.f32 %v2075, %v2098
      %v2189 = vmul.f32 %v2076, %v2102
      %v2190 = vmul.f32 %v2077, %v2106
      %v2191 = vmul.f32 %v2078, %v2098
      %v2192 = vmul.f32 %v2079, %v2102
      %v2193 = vmul.f32 %v2080, %v2106
      %v2194 = vmul.f32 %v2081, %v2098
      %v2195 = vmul.f32 %v2082, %v2102
      %v2196 = vmul.f32 %v2083, %v2106
      %v2197 = vmul.f32 %v2084, %v2098
      %v2198 = vmul.f32 %v2085, %v2102
      %v2199 = vmul.f32 %v2086, %v2106
      %v2200 = vmul.f32 %v2087, %v2098
      %v2201 = vmul.f32 %v2088, %v2102
      %v2202 = vmul.f32 %v2089, %v2106
      %v2203 = vmul.f32 %v2090, %v2098
      %v2204 = vmul.f32 %v2091, %v2102
      %v2205 = vmul.f32 %v2092, %v2106
      %v2206 = vmul.f32 %v2110, %v2110
      %v2207 = vmul.f32 %v2111, %v2111
      %v2208 = vmul.f32 %v2112, %v2112
      %v2209 = vmul.f32 %v2113, %v2113
      %v2210 = vmul.f32 %v2114, %v2114
      %v2211 = vmul.f32 %v2115, %v2115
      %v2212 = vmul.f32 %v2116, %v2116
      %v2213 = vmul.f32 %v2117, %v2117
      %v2214 = vmul.f32 %v2118, %v2118
      %v2215 = vmul.f32 %v2119, %v2119
      %v2216 = vmul.f32 %v2120, %v2120
      %v2217 = vmul.f32 %v2121, %v2121
      %v2218 = vmul.f32 %v2122, %v2122
      %v2219 = vmul.f32 %v2123, %v2123
      %v2220 = vmul.f32 %v2124, %v2124
      %v2221 = vmul.f32 %v2125, %v2125
      %v2222 = vmul.f32 %v2126, %v2126
      %v2223 = vmul.f32 %v2127, %v2127
      %v2224 = vmul.f32 %v2128, %v2128
      %v2225 = vmul.f32 %v2129, %v2129
      %v2226 = vmul.f32 %v2130, %v2130
      %v2227 = vmul.f32 %v2131, %v2131
      %v2228 = vmul.f32 %v2132, %v2132
      %v2229 = vmul.f32 %v2133, %v2133
      %v2230 = vmul.f32 %v2134, %v2134
      %v2231 = vmul.f32 %v2135, %v2135
      %v2232 = vmul.f32 %v2136, %v2136
      %v2233 = vmul.f32 %v2137, %v2137
      %v2234 = vmul.f32 %v2138, %v2138
      %v2235 = vmul.f32 %v2139, %v2139
      %v2236 = vmul.f32 %v2140, %v2140
      %v2237 = vmul.f32 %v2141, %v2141
      %v2238 = vmul.f32 %v2142, %v2142
      %v2239 = vmul.f32 %v2143, %v2143
      %v2240 = vmul.f32 %v2144, %v2144
      %v2241 = vmul.f32 %v2145, %v2145
      %v2242 = vmul.f32 %v2146, %v2146
      %v2243 = vmul.f32 %v2147, %v2147
      %v2244 = vmul.f32 %v2148, %v2148
      %v2245 = vmul.f32 %v2149, %v2149
      %v2246 = vmul.f32 %v2150, %v2150
      %v2247 = vmul.f32 %v2151, %v2151
      %v2248 = vmul.f32 %v2152, %v2152
      %v2249 = vmul.f32 %v2153, %v2153
      %v2250 = vmul.f32 %v2154, %v2154
      %v2251 = vmul.f32 %v2155, %v2155
      %v2252 = vmul.f32 %v2156, %v2156
      %v2253 = vmul.f32 %v2157, %v2157
      %v2254 = vmul.f32 %v2158, %v2158
      %v2255 = vmul.f32 %v2159, %v2159
      %v2256 = vmul.f32 %v2160, %v2160
      %v2257 = vmul.f32 %v2161, %v2161
      %v2258 = vmul.f32 %v2162, %v2162
      %v2259 = vmul.f32 %v2163, %v2163
      %v2260 = vmul.f32 %v2164, %v2164
      %v2261 = vmul.f32 %v2165, %v2165
      %v2262 = vmul.f32 %v2166, %v2166
      %v2263 = vmul.f32 %v2167, %v2167
      %v2264 = vmul.f32 %v2168, %v2168
      %v2265 = vmul.f32 %v2169, %v2169
      %v2266 = vmul.f32 %v2170, %v2170
      %v2267 = vmul.f32 %v2171, %v2171
      %v2268 = vmul.f32 %v2172, %v2172
      %v2269 = vmul.f32 %v2173, %v2173
      %v2270 = vmul.f32 %v2174, %v2174
      %v2271 = vmul.f32 %v2175, %v2175
      %v2272 = vmul.f32 %v2176, %v2176
      %v2273 = vmul.f32 %v2177, %v2177
      %v2274 = vmul.f32 %v2178, %v2178
      %v2275 = vmul.f32 %v2179, %v2179
      %v2276 = vmul.f32 %v2180, %v2180
      %v2277 = vmul.f32 %v2181, %v2181
      %v2278 = vmul.f32 %v2182, %v2182
      %v2279 = vmul.f32 %v2183, %v2183
      %v2280 = vmul.f32 %v2184, %v2184
      %v2281 = vmul.f32 %v2185, %v2185
      %v2282 = vmul.f32 %v2186, %v2186
      %v2283 = vmul.f32 %v2187, %v2187
      %v2284 = vmul.f32 %v2188, %v2188
      %v2285 = vmul.f32 %v2189, %v2189
      %v2286 = vmul.f32 %v2190, %v2190
      %v2287 = vmul.f32 %v2191, %v2191
      %v2288 = vmul.f32 %v2192, %v2192
      %v2289 = vmul.f32 %v2193, %v2193
      %v2290 = vmul.f32 %v2194, %v2194
      %v2291 = vmul.f32 %v2195, %v2195
      %v2292 = vmul.f32 %v2196, %v2196
      %v2293 = vmul.f32 %v2197, %v2197
      %v2294 = vmul.f32 %v2198, %v2198
      %v2295 = vmul.f32 %v2199, %v2199
      %v2296 = vmul.f32 %v2200, %v2200
      %v2297 = vmul.f32 %v2201, %v2201
      %v2298 = vmul.f32 %v2202, %v2202
      %v2299 = vmul.f32 %v2203, %v2203
      %v2300 = vmul.f32 %v2204, %v2204
      %v2301 = vmul.f32 %v2205, %v2205
      %v2302 = vadd.f32 %v2206, %v2207
      %v2303 = vadd.f32 %v2302, %v2208
      %2304 = vadd.xlane.f32.xlu0 %v2303
      %v2305 = vpop.xlane.xlu0 %2304
      %v2306 = vadd.f32 %v2209, %v2210
      %v2307 = vadd.f32 %v2306, %v2211
      %2308 = vadd.xlane.f32.xlu0 %v2307
      %v2309 = vpop.xlane.xlu0 %2308
      %v2310 = vadd.f32 %v2212, %v2213
      %v2311 = vadd.f32 %v2310, %v2214
      %2312 = vadd.xlane.f32.xlu0 %v2311
      %v2313 = vpop.xlane.xlu0 %2312
      %v2314 = vadd.f32 %v2215, %v2216
      %v2315 = vadd.f32 %v2314, %v2217
      %2316 = vadd.xlane.f32.xlu0 %v2315
      %v2317 = vpop.xlane.xlu0 %2316
      %v2318 = vadd.f32 %v2218, %v2219
      %v2319 = vadd.f32 %v2318, %v2220
      %2320 = vadd.xlane.f32.xlu0 %v2319
      %v2321 = vpop.xlane.xlu0 %2320
      %v2322 = vadd.f32 %v2221, %v2222
      %v2323 = vadd.f32 %v2322, %v2223
      %2324 = vadd.xlane.f32.xlu0 %v2323
      %v2325 = vpop.xlane.xlu0 %2324
      %v2326 = vadd.f32 %v2224, %v2225
      %v2327 = vadd.f32 %v2326, %v2226
      %2328 = vadd.xlane.f32.xlu0 %v2327
      %v2329 = vpop.xlane.xlu0 %2328
      %v2330 = vadd.f32 %v2227, %v2228
      %v2331 = vadd.f32 %v2330, %v2229
      %2332 = vadd.xlane.f32.xlu0 %v2331
      %v2333 = vpop.xlane.xlu0 %2332
      %v2334 = vadd.f32 %v2230, %v2231
      %v2335 = vadd.f32 %v2334, %v2232
      %2336 = vadd.xlane.f32.xlu0 %v2335
      %v2337 = vpop.xlane.xlu0 %2336
      %v2338 = vadd.f32 %v2233, %v2234
      %v2339 = vadd.f32 %v2338, %v2235
      %2340 = vadd.xlane.f32.xlu0 %v2339
      %v2341 = vpop.xlane.xlu0 %2340
      %v2342 = vadd.f32 %v2236, %v2237
      %v2343 = vadd.f32 %v2342, %v2238
      %2344 = vadd.xlane.f32.xlu0 %v2343
      %v2345 = vpop.xlane.xlu0 %2344
      %v2346 = vadd.f32 %v2239, %v2240
      %v2347 = vadd.f32 %v2346, %v2241
      %2348 = vadd.xlane.f32.xlu0 %v2347
      %v2349 = vpop.xlane.xlu0 %2348
      %v2350 = vadd.f32 %v2242, %v2243
      %v2351 = vadd.f32 %v2350, %v2244
      %2352 = vadd.xlane.f32.xlu0 %v2351
      %v2353 = vpop.xlane.xlu0 %2352
      %v2354 = vadd.f32 %v2245, %v2246
      %v2355 = vadd.f32 %v2354, %v2247
      %2356 = vadd.xlane.f32.xlu0 %v2355
      %v2357 = vpop.xlane.xlu0 %2356
      %v2358 = vadd.f32 %v2248, %v2249
      %v2359 = vadd.f32 %v2358, %v2250
      %2360 = vadd.xlane.f32.xlu0 %v2359
      %v2361 = vpop.xlane.xlu0 %2360
      %v2362 = vadd.f32 %v2251, %v2252
      %v2363 = vadd.f32 %v2362, %v2253
      %2364 = vadd.xlane.f32.xlu0 %v2363
      %v2365 = vpop.xlane.xlu0 %2364
      %v2366 = vadd.f32 %v2254, %v2255
      %v2367 = vadd.f32 %v2366, %v2256
      %2368 = vadd.xlane.f32.xlu0 %v2367
      %v2369 = vpop.xlane.xlu0 %2368
      %v2370 = vadd.f32 %v2257, %v2258
      %v2371 = vadd.f32 %v2370, %v2259
      %2372 = vadd.xlane.f32.xlu0 %v2371
      %v2373 = vpop.xlane.xlu0 %2372
      %v2374 = vadd.f32 %v2260, %v2261
      %v2375 = vadd.f32 %v2374, %v2262
      %2376 = vadd.xlane.f32.xlu0 %v2375
      %v2377 = vpop.xlane.xlu0 %2376
      %v2378 = vadd.f32 %v2263, %v2264
      %v2379 = vadd.f32 %v2378, %v2265
      %2380 = vadd.xlane.f32.xlu0 %v2379
      %v2381 = vpop.xlane.xlu0 %2380
      %v2382 = vadd.f32 %v2266, %v2267
      %v2383 = vadd.f32 %v2382, %v2268
      %2384 = vadd.xlane.f32.xlu0 %v2383
      %v2385 = vpop.xlane.xlu0 %2384
      %v2386 = vadd.f32 %v2269, %v2270
      %v2387 = vadd.f32 %v2386, %v2271
      %2388 = vadd.xlane.f32.xlu0 %v2387
      %v2389 = vpop.xlane.xlu0 %2388
      %v2390 = vadd.f32 %v2272, %v2273
      %v2391 = vadd.f32 %v2390, %v2274
      %2392 = vadd.xlane.f32.xlu0 %v2391
      %v2393 = vpop.xlane.xlu0 %2392
      %v2394 = vadd.f32 %v2275, %v2276
      %v2395 = vadd.f32 %v2394, %v2277
      %2396 = vadd.xlane.f32.xlu0 %v2395
      %v2397 = vpop.xlane.xlu0 %2396
      %v2398 = vadd.f32 %v2278, %v2279
      %v2399 = vadd.f32 %v2398, %v2280
      %2400 = vadd.xlane.f32.xlu0 %v2399
      %v2401 = vpop.xlane.xlu0 %2400
      %v2402 = vadd.f32 %v2281, %v2282
      %v2403 = vadd.f32 %v2402, %v2283
      %2404 = vadd.xlane.f32.xlu0 %v2403
      %v2405 = vpop.xlane.xlu0 %2404
      %v2406 = vadd.f32 %v2284, %v2285
      %v2407 = vadd.f32 %v2406, %v2286
      %2408 = vadd.xlane.f32.xlu0 %v2407
      %v2409 = vpop.xlane.xlu0 %2408
      %v2410 = vadd.f32 %v2287, %v2288
      %v2411 = vadd.f32 %v2410, %v2289
      %2412 = vadd.xlane.f32.xlu0 %v2411
      %v2413 = vpop.xlane.xlu0 %2412
      %v2414 = vadd.f32 %v2290, %v2291
      %v2415 = vadd.f32 %v2414, %v2292
      %2416 = vadd.xlane.f32.xlu0 %v2415
      %v2417 = vpop.xlane.xlu0 %2416
      %v2418 = vadd.f32 %v2293, %v2294
      %v2419 = vadd.f32 %v2418, %v2295
      %2420 = vadd.xlane.f32.xlu0 %v2419
      %v2421 = vpop.xlane.xlu0 %2420
      %v2422 = vadd.f32 %v2296, %v2297
      %v2423 = vadd.f32 %v2422, %v2298
      %2424 = vadd.xlane.f32.xlu0 %v2423
      %v2425 = vpop.xlane.xlu0 %2424
      %v2426 = vadd.f32 %v2299, %v2300
      %v2427 = vadd.f32 %v2426, %v2301
      %2428 = vadd.xlane.f32.xlu0 %v2427
      %v2429 = vpop.xlane.xlu0 %2428
      %v2430 = vmul.f32 %v2305, 0.0033333334
      %v2431 = vmul.f32 %v2309, 0.0033333334
      %v2432 = vmul.f32 %v2313, 0.0033333334
      %v2433 = vmul.f32 %v2317, 0.0033333334
      %v2434 = vmul.f32 %v2321, 0.0033333334
      %v2435 = vmul.f32 %v2325, 0.0033333334
      %v2436 = vmul.f32 %v2329, 0.0033333334
      %v2437 = vmul.f32 %v2333, 0.0033333334
      %v2438 = vmul.f32 %v2337, 0.0033333334
      %v2439 = vmul.f32 %v2341, 0.0033333334
      %v2440 = vmul.f32 %v2345, 0.0033333334
      %v2441 = vmul.f32 %v2349, 0.0033333334
      %v2442 = vmul.f32 %v2353, 0.0033333334
      %v2443 = vmul.f32 %v2357, 0.0033333334
      %v2444 = vmul.f32 %v2361, 0.0033333334
      %v2445 = vmul.f32 %v2365, 0.0033333334
      %v2446 = vmul.f32 %v2369, 0.0033333334
      %v2447 = vmul.f32 %v2373, 0.0033333334
      %v2448 = vmul.f32 %v2377, 0.0033333334
      %v2449 = vmul.f32 %v2381, 0.0033333334
      %v2450 = vmul.f32 %v2385, 0.0033333334
      %v2451 = vmul.f32 %v2389, 0.0033333334
      %v2452 = vmul.f32 %v2393, 0.0033333334
      %v2453 = vmul.f32 %v2397, 0.0033333334
      %v2454 = vmul.f32 %v2401, 0.0033333334
      %v2455 = vmul.f32 %v2405, 0.0033333334
      %v2456 = vmul.f32 %v2409, 0.0033333334
      %v2457 = vmul.f32 %v2413, 0.0033333334
      %v2458 = vmul.f32 %v2417, 0.0033333334
      %v2459 = vmul.f32 %v2421, 0.0033333334
      %v2460 = vmul.f32 %v2425, 0.0033333334
      %v2461 = vmul.f32 %v2429, 0.0033333334
      %v2462 = vadd.f32 %v2430, 1e-05
      %v2463 = vadd.f32 %v2431, 1e-05
      %v2464 = vadd.f32 %v2432, 1e-05
      %v2465 = vadd.f32 %v2433, 1e-05
      %v2466 = vadd.f32 %v2434, 1e-05
      %v2467 = vadd.f32 %v2435, 1e-05
      %v2468 = vadd.f32 %v2436, 1e-05
      %v2469 = vadd.f32 %v2437, 1e-05
      %v2470 = vadd.f32 %v2438, 1e-05
      %v2471 = vadd.f32 %v2439, 1e-05
      %v2472 = vadd.f32 %v2440, 1e-05
      %v2473 = vadd.f32 %v2441, 1e-05
      %v2474 = vadd.f32 %v2442, 1e-05
      %v2475 = vadd.f32 %v2443, 1e-05
      %v2476 = vadd.f32 %v2444, 1e-05
      %v2477 = vadd.f32 %v2445, 1e-05
      %v2478 = vadd.f32 %v2446, 1e-05
      %v2479 = vadd.f32 %v2447, 1e-05
      %v2480 = vadd.f32 %v2448, 1e-05
      %v2481 = vadd.f32 %v2449, 1e-05
      %v2482 = vadd.f32 %v2450, 1e-05
      %v2483 = vadd.f32 %v2451, 1e-05
      %v2484 = vadd.f32 %v2452, 1e-05
      %v2485 = vadd.f32 %v2453, 1e-05
      %v2486 = vadd.f32 %v2454, 1e-05
      %v2487 = vadd.f32 %v2455, 1e-05
      %v2488 = vadd.f32 %v2456, 1e-05
      %v2489 = vadd.f32 %v2457, 1e-05
      %v2490 = vadd.f32 %v2458, 1e-05
      %v2491 = vadd.f32 %v2459, 1e-05
      %v2492 = vadd.f32 %v2460, 1e-05
      %v2493 = vadd.f32 %v2461, 1e-05
      %v2494 = vrsqrt.pop %v2462
      %v2495 = vrsqrt.pop %v2463
      %v2496 = vrsqrt.pop %v2464
      %v2497 = vrsqrt.pop %v2465
      %v2498 = vrsqrt.pop %v2466
      %v2499 = vrsqrt.pop %v2467
      %v2500 = vrsqrt.pop %v2468
      %v2501 = vrsqrt.pop %v2469
      %v2502 = vrsqrt.pop %v2470
      %v2503 = vrsqrt.pop %v2471
      %v2504 = vrsqrt.pop %v2472
      %v2505 = vrsqrt.pop %v2473
      %v2506 = vrsqrt.pop %v2474
      %v2507 = vrsqrt.pop %v2475
      %v2508 = vrsqrt.pop %v2476
      %v2509 = vrsqrt.pop %v2477
      %v2510 = vrsqrt.pop %v2478
      %v2511 = vrsqrt.pop %v2479
      %v2512 = vrsqrt.pop %v2480
      %v2513 = vrsqrt.pop %v2481
      %v2514 = vrsqrt.pop %v2482
      %v2515 = vrsqrt.pop %v2483
      %v2516 = vrsqrt.pop %v2484
      %v2517 = vrsqrt.pop %v2485
      %v2518 = vrsqrt.pop %v2486
      %v2519 = vrsqrt.pop %v2487
      %v2520 = vrsqrt.pop %v2488
      %v2521 = vrsqrt.pop %v2489
      %v2522 = vrsqrt.pop %v2490
      %v2523 = vrsqrt.pop %v2491
      %v2524 = vrsqrt.pop %v2492
      %v2525 = vrsqrt.pop %v2493
      %v2526 = vmul.f32 %v2110, %v2494
      %v2527 = vmul.f32 %v2111, %v2494
      %v2528 = vmul.f32 %v2112, %v2494
      %v2529 = vmul.f32 %v2113, %v2495
      %v2530 = vmul.f32 %v2114, %v2495
      %v2531 = vmul.f32 %v2115, %v2495
      %v2532 = vmul.f32 %v2116, %v2496
      %v2533 = vmul.f32 %v2117, %v2496
      %v2534 = vmul.f32 %v2118, %v2496
      %v2535 = vmul.f32 %v2119, %v2497
      %v2536 = vmul.f32 %v2120, %v2497
      %v2537 = vmul.f32 %v2121, %v2497
      %v2538 = vmul.f32 %v2122, %v2498
      %v2539 = vmul.f32 %v2123, %v2498
      %v2540 = vmul.f32 %v2124, %v2498
      %v2541 = vmul.f32 %v2125, %v2499
      %v2542 = vmul.f32 %v2126, %v2499
      %v2543 = vmul.f32 %v2127, %v2499
      %v2544 = vmul.f32 %v2128, %v2500
      %v2545 = vmul.f32 %v2129, %v2500
      %v2546 = vmul.f32 %v2130, %v2500
      %v2547 = vmul.f32 %v2131, %v2501
      %v2548 = vmul.f32 %v2132, %v2501
      %v2549 = vmul.f32 %v2133, %v2501
      %v2550 = vmul.f32 %v2134, %v2502
      %v2551 = vmul.f32 %v2135, %v2502
      %v2552 = vmul.f32 %v2136, %v2502
      %v2553 = vmul.f32 %v2137, %v2503
      %v2554 = vmul.f32 %v2138, %v2503
      %v2555 = vmul.f32 %v2139, %v2503
      %v2556 = vmul.f32 %v2140, %v2504
      %v2557 = vmul.f32 %v2141, %v2504
      %v2558 = vmul.f32 %v2142, %v2504
      %v2559 = vmul.f32 %v2143, %v2505
      %v2560 = vmul.f32 %v2144, %v2505
      %v2561 = vmul.f32 %v2145, %v2505
      %v2562 = vmul.f32 %v2146, %v2506
      %v2563 = vmul.f32 %v2147, %v2506
      %v2564 = vmul.f32 %v2148, %v2506
      %v2565 = vmul.f32 %v2149, %v2507
      %v2566 = vmul.f32 %v2150, %v2507
      %v2567 = vmul.f32 %v2151, %v2507
      %v2568 = vmul.f32 %v2152, %v2508
      %v2569 = vmul.f32 %v2153, %v2508
      %v2570 = vmul.f32 %v2154, %v2508
      %v2571 = vmul.f32 %v2155, %v2509
      %v2572 = vmul.f32 %v2156, %v2509
      %v2573 = vmul.f32 %v2157, %v2509
      %v2574 = vmul.f32 %v2158, %v2510
      %v2575 = vmul.f32 %v2159, %v2510
      %v2576 = vmul.f32 %v2160, %v2510
      %v2577 = vmul.f32 %v2161, %v2511
      %v2578 = vmul.f32 %v2162, %v2511
      %v2579 = vmul.f32 %v2163, %v2511
      %v2580 = vmul.f32 %v2164, %v2512
      %v2581 = vmul.f32 %v2165, %v2512
      %v2582 = vmul.f32 %v2166, %v2512
      %v2583 = vmul.f32 %v2167, %v2513
      %v2584 = vmul.f32 %v2168, %v2513
      %v2585 = vmul.f32 %v2169, %v2513
      %v2586 = vmul.f32 %v2170, %v2514
      %v2587 = vmul.f32 %v2171, %v2514
      %v2588 = vmul.f32 %v2172, %v2514
      %v2589 = vmul.f32 %v2173, %v2515
      %v2590 = vmul.f32 %v2174, %v2515
      %v2591 = vmul.f32 %v2175, %v2515
      %v2592 = vmul.f32 %v2176, %v2516
      %v2593 = vmul.f32 %v2177, %v2516
      %v2594 = vmul.f32 %v2178, %v2516
      %v2595 = vmul.f32 %v2179, %v2517
      %v2596 = vmul.f32 %v2180, %v2517
      %v2597 = vmul.f32 %v2181, %v2517
      %v2598 = vmul.f32 %v2182, %v2518
      %v2599 = vmul.f32 %v2183, %v2518
      %v2600 = vmul.f32 %v2184, %v2518
      %v2601 = vmul.f32 %v2185, %v2519
      %v2602 = vmul.f32 %v2186, %v2519
      %v2603 = vmul.f32 %v2187, %v2519
      %v2604 = vmul.f32 %v2188, %v2520
      %v2605 = vmul.f32 %v2189, %v2520
      %v2606 = vmul.f32 %v2190, %v2520
      %v2607 = vmul.f32 %v2191, %v2521
      %v2608 = vmul.f32 %v2192, %v2521
      %v2609 = vmul.f32 %v2193, %v2521
      %v2610 = vmul.f32 %v2194, %v2522
      %v2611 = vmul.f32 %v2195, %v2522
      %v2612 = vmul.f32 %v2196, %v2522
      %v2613 = vmul.f32 %v2197, %v2523
      %v2614 = vmul.f32 %v2198, %v2523
      %v2615 = vmul.f32 %v2199, %v2523
      %v2616 = vmul.f32 %v2200, %v2524
      %v2617 = vmul.f32 %v2201, %v2524
      %v2618 = vmul.f32 %v2202, %v2524
      %v2619 = vmul.f32 %v2203, %v2525
      %v2620 = vmul.f32 %v2204, %v2525
      %v2621 = vmul.f32 %v2205, %v2525
      %v2622 = vld [vmem:[%s3] sm:$0x7]
      %v2624 = vlaneseq
      %v2625 = vshrl.u32 %v2624, 7
      %v2626 = vsub.s32 0, %v2625
      %v2627 = vrot.slane %v2622, %v2626
      %v2628 = vlaneseq
      %v2629 = vshrl.u32 %v2628, 7
      %v2630 = vsub.s32 1, %v2629
      %v2631 = vrot.slane %v2622, %v2630
      %v2632 = vlaneseq
      %v2633 = vshrl.u32 %v2632, 7
      %v2634 = vsub.s32 2, %v2633
      %v2635 = vrot.slane %v2622, %v2634
      %v2639 = vmul.f32 %v2526, %v2627
      %v2640 = vmul.f32 %v2527, %v2631
      %v2641 = vmul.f32 %v2528, %v2635
      %v2642 = vmul.f32 %v2529, %v2627
      %v2643 = vmul.f32 %v2530, %v2631
      %v2644 = vmul.f32 %v2531, %v2635
      %v2645 = vmul.f32 %v2532, %v2627
      %v2646 = vmul.f32 %v2533, %v2631
      %v2647 = vmul.f32 %v2534, %v2635
      %v2648 = vmul.f32 %v2535, %v2627
      %v2649 = vmul.f32 %v2536, %v2631
      %v2650 = vmul.f32 %v2537, %v2635
      %v2651 = vmul.f32 %v2538, %v2627
      %v2652 = vmul.f32 %v2539, %v2631
      %v2653 = vmul.f32 %v2540, %v2635
      %v2654 = vmul.f32 %v2541, %v2627
      %v2655 = vmul.f32 %v2542, %v2631
      %v2656 = vmul.f32 %v2543, %v2635
      %v2657 = vmul.f32 %v2544, %v2627
      %v2658 = vmul.f32 %v2545, %v2631
      %v2659 = vmul.f32 %v2546, %v2635
      %v2660 = vmul.f32 %v2547, %v2627
      %v2661 = vmul.f32 %v2548, %v2631
      %v2662 = vmul.f32 %v2549, %v2635
      %v2663 = vmul.f32 %v2550, %v2627
      %v2664 = vmul.f32 %v2551, %v2631
      %v2665 = vmul.f32 %v2552, %v2635
      %v2666 = vmul.f32 %v2553, %v2627
      %v2667 = vmul.f32 %v2554, %v2631
      %v2668 = vmul.f32 %v2555, %v2635
      %v2669 = vmul.f32 %v2556, %v2627
      %v2670 = vmul.f32 %v2557, %v2631
      %v2671 = vmul.f32 %v2558, %v2635
      %v2672 = vmul.f32 %v2559, %v2627
      %v2673 = vmul.f32 %v2560, %v2631
      %v2674 = vmul.f32 %v2561, %v2635
      %v2675 = vmul.f32 %v2562, %v2627
      %v2676 = vmul.f32 %v2563, %v2631
      %v2677 = vmul.f32 %v2564, %v2635
      %v2678 = vmul.f32 %v2565, %v2627
      %v2679 = vmul.f32 %v2566, %v2631
      %v2680 = vmul.f32 %v2567, %v2635
      %v2681 = vmul.f32 %v2568, %v2627
      %v2682 = vmul.f32 %v2569, %v2631
      %v2683 = vmul.f32 %v2570, %v2635
      %v2684 = vmul.f32 %v2571, %v2627
      %v2685 = vmul.f32 %v2572, %v2631
      %v2686 = vmul.f32 %v2573, %v2635
      %v2687 = vmul.f32 %v2574, %v2627
      %v2688 = vmul.f32 %v2575, %v2631
      %v2689 = vmul.f32 %v2576, %v2635
      %v2690 = vmul.f32 %v2577, %v2627
      %v2691 = vmul.f32 %v2578, %v2631
      %v2692 = vmul.f32 %v2579, %v2635
      %v2693 = vmul.f32 %v2580, %v2627
      %v2694 = vmul.f32 %v2581, %v2631
      %v2695 = vmul.f32 %v2582, %v2635
      %v2696 = vmul.f32 %v2583, %v2627
      %v2697 = vmul.f32 %v2584, %v2631
      %v2698 = vmul.f32 %v2585, %v2635
      %v2699 = vmul.f32 %v2586, %v2627
      %v2700 = vmul.f32 %v2587, %v2631
      %v2701 = vmul.f32 %v2588, %v2635
      %v2702 = vmul.f32 %v2589, %v2627
      %v2703 = vmul.f32 %v2590, %v2631
      %v2704 = vmul.f32 %v2591, %v2635
      %v2705 = vmul.f32 %v2592, %v2627
      %v2706 = vmul.f32 %v2593, %v2631
      %v2707 = vmul.f32 %v2594, %v2635
      %v2708 = vmul.f32 %v2595, %v2627
      %v2709 = vmul.f32 %v2596, %v2631
      %v2710 = vmul.f32 %v2597, %v2635
      %v2711 = vmul.f32 %v2598, %v2627
      %v2712 = vmul.f32 %v2599, %v2631
      %v2713 = vmul.f32 %v2600, %v2635
      %v2714 = vmul.f32 %v2601, %v2627
      %v2715 = vmul.f32 %v2602, %v2631
      %v2716 = vmul.f32 %v2603, %v2635
      %v2717 = vmul.f32 %v2604, %v2627
      %v2718 = vmul.f32 %v2605, %v2631
      %v2719 = vmul.f32 %v2606, %v2635
      %v2720 = vmul.f32 %v2607, %v2627
      %v2721 = vmul.f32 %v2608, %v2631
      %v2722 = vmul.f32 %v2609, %v2635
      %v2723 = vmul.f32 %v2610, %v2627
      %v2724 = vmul.f32 %v2611, %v2631
      %v2725 = vmul.f32 %v2612, %v2635
      %v2726 = vmul.f32 %v2613, %v2627
      %v2727 = vmul.f32 %v2614, %v2631
      %v2728 = vmul.f32 %v2615, %v2635
      %v2729 = vmul.f32 %v2616, %v2627
      %v2730 = vmul.f32 %v2617, %v2631
      %v2731 = vmul.f32 %v2618, %v2635
      %v2732 = vmul.f32 %v2619, %v2627
      %v2733 = vmul.f32 %v2620, %v2631
      %v2734 = vmul.f32 %v2621, %v2635
      %v2735 = vld [vmem:[%s4] sm:$0x7]
      %v2737 = vlaneseq
      %v2738 = vshrl.u32 %v2737, 7
      %v2739 = vsub.s32 0, %v2738
      %v2740 = vrot.slane %v2735, %v2739
      %v2741 = vlaneseq
      %v2742 = vshrl.u32 %v2741, 7
      %v2743 = vsub.s32 1, %v2742
      %v2744 = vrot.slane %v2735, %v2743
      %v2745 = vlaneseq
      %v2746 = vshrl.u32 %v2745, 7
      %v2747 = vsub.s32 2, %v2746
      %v2748 = vrot.slane %v2735, %v2747
      %v2752 = vadd.f32 %v2639, %v2740
      %v2753 = vadd.f32 %v2640, %v2744
      %v2754 = vadd.f32 %v2641, %v2748
      %v2755 = vadd.f32 %v2642, %v2740
      %v2756 = vadd.f32 %v2643, %v2744
      %v2757 = vadd.f32 %v2644, %v2748
      %v2758 = vadd.f32 %v2645, %v2740
      %v2759 = vadd.f32 %v2646, %v2744
      %v2760 = vadd.f32 %v2647, %v2748
      %v2761 = vadd.f32 %v2648, %v2740
      %v2762 = vadd.f32 %v2649, %v2744
      %v2763 = vadd.f32 %v2650, %v2748
      %v2764 = vadd.f32 %v2651, %v2740
      %v2765 = vadd.f32 %v2652, %v2744
      %v2766 = vadd.f32 %v2653, %v2748
      %v2767 = vadd.f32 %v2654, %v2740
      %v2768 = vadd.f32 %v2655, %v2744
      %v2769 = vadd.f32 %v2656, %v2748
      %v2770 = vadd.f32 %v2657, %v2740
      %v2771 = vadd.f32 %v2658, %v2744
      %v2772 = vadd.f32 %v2659, %v2748
      %v2773 = vadd.f32 %v2660, %v2740
      %v2774 = vadd.f32 %v2661, %v2744
      %v2775 = vadd.f32 %v2662, %v2748
      %v2776 = vadd.f32 %v2663, %v2740
      %v2777 = vadd.f32 %v2664, %v2744
      %v2778 = vadd.f32 %v2665, %v2748
      %v2779 = vadd.f32 %v2666, %v2740
      %v2780 = vadd.f32 %v2667, %v2744
      %v2781 = vadd.f32 %v2668, %v2748
      %v2782 = vadd.f32 %v2669, %v2740
      %v2783 = vadd.f32 %v2670, %v2744
      %v2784 = vadd.f32 %v2671, %v2748
      %v2785 = vadd.f32 %v2672, %v2740
      %v2786 = vadd.f32 %v2673, %v2744
      %v2787 = vadd.f32 %v2674, %v2748
      %v2788 = vadd.f32 %v2675, %v2740
      %v2789 = vadd.f32 %v2676, %v2744
      %v2790 = vadd.f32 %v2677, %v2748
      %v2791 = vadd.f32 %v2678, %v2740
      %v2792 = vadd.f32 %v2679, %v2744
      %v2793 = vadd.f32 %v2680, %v2748
      %v2794 = vadd.f32 %v2681, %v2740
      %v2795 = vadd.f32 %v2682, %v2744
      %v2796 = vadd.f32 %v2683, %v2748
      %v2797 = vadd.f32 %v2684, %v2740
      %v2798 = vadd.f32 %v2685, %v2744
      %v2799 = vadd.f32 %v2686, %v2748
      %v2800 = vadd.f32 %v2687, %v2740
      %v2801 = vadd.f32 %v2688, %v2744
      %v2802 = vadd.f32 %v2689, %v2748
      %v2803 = vadd.f32 %v2690, %v2740
      %v2804 = vadd.f32 %v2691, %v2744
      %v2805 = vadd.f32 %v2692, %v2748
      %v2806 = vadd.f32 %v2693, %v2740
      %v2807 = vadd.f32 %v2694, %v2744
      %v2808 = vadd.f32 %v2695, %v2748
      %v2809 = vadd.f32 %v2696, %v2740
      %v2810 = vadd.f32 %v2697, %v2744
      %v2811 = vadd.f32 %v2698, %v2748
      %v2812 = vadd.f32 %v2699, %v2740
      %v2813 = vadd.f32 %v2700, %v2744
      %v2814 = vadd.f32 %v2701, %v2748
      %v2815 = vadd.f32 %v2702, %v2740
      %v2816 = vadd.f32 %v2703, %v2744
      %v2817 = vadd.f32 %v2704, %v2748
      %v2818 = vadd.f32 %v2705, %v2740
      %v2819 = vadd.f32 %v2706, %v2744
      %v2820 = vadd.f32 %v2707, %v2748
      %v2821 = vadd.f32 %v2708, %v2740
      %v2822 = vadd.f32 %v2709, %v2744
      %v2823 = vadd.f32 %v2710, %v2748
      %v2824 = vadd.f32 %v2711, %v2740
      %v2825 = vadd.f32 %v2712, %v2744
      %v2826 = vadd.f32 %v2713, %v2748
      %v2827 = vadd.f32 %v2714, %v2740
      %v2828 = vadd.f32 %v2715, %v2744
      %v2829 = vadd.f32 %v2716, %v2748
      %v2830 = vadd.f32 %v2717, %v2740
      %v2831 = vadd.f32 %v2718, %v2744
      %v2832 = vadd.f32 %v2719, %v2748
      %v2833 = vadd.f32 %v2720, %v2740
      %v2834 = vadd.f32 %v2721, %v2744
      %v2835 = vadd.f32 %v2722, %v2748
      %v2836 = vadd.f32 %v2723, %v2740
      %v2837 = vadd.f32 %v2724, %v2744
      %v2838 = vadd.f32 %v2725, %v2748
      %v2839 = vadd.f32 %v2726, %v2740
      %v2840 = vadd.f32 %v2727, %v2744
      %v2841 = vadd.f32 %v2728, %v2748
      %v2842 = vadd.f32 %v2729, %v2740
      %v2843 = vadd.f32 %v2730, %v2744
      %v2844 = vadd.f32 %v2731, %v2748
      %v2845 = vadd.f32 %v2732, %v2740
      %v2846 = vadd.f32 %v2733, %v2744
      %v2847 = vadd.f32 %v2734, %v2748
      %v2848 = vld [vmem:[%s6] ss:$2 sm:$0x7]
      %v2850 = vlaneseq
      %v2851 = vshrl.u32 %v2850, 7
      %v2852 = vsub.s32 0, %v2851
      %v2853 = vrot.slane %v2848, %v2852
      %v2854 = vlaneseq
      %v2855 = vshrl.u32 %v2854, 7
      %v2856 = vsub.s32 1, %v2855
      %v2857 = vrot.slane %v2848, %v2856
      %v2858 = vlaneseq
      %v2859 = vshrl.u32 %v2858, 7
      %v2860 = vsub.s32 2, %v2859
      %v2861 = vrot.slane %v2848, %v2860
      %v2865 = vmul.f32 %v2752, %v2853
      %v2866 = vmul.f32 %v2753, %v2857
      %v2867 = vmul.f32 %v2754, %v2861
      %v2868 = vmul.f32 %v2755, %v2853
      %v2869 = vmul.f32 %v2756, %v2857
      %v2870 = vmul.f32 %v2757, %v2861
      %v2871 = vmul.f32 %v2758, %v2853
      %v2872 = vmul.f32 %v2759, %v2857
      %v2873 = vmul.f32 %v2760, %v2861
      %v2874 = vmul.f32 %v2761, %v2853
      %v2875 = vmul.f32 %v2762, %v2857
      %v2876 = vmul.f32 %v2763, %v2861
      %v2877 = vmul.f32 %v2764, %v2853
      %v2878 = vmul.f32 %v2765, %v2857
      %v2879 = vmul.f32 %v2766, %v2861
      %v2880 = vmul.f32 %v2767, %v2853
      %v2881 = vmul.f32 %v2768, %v2857
      %v2882 = vmul.f32 %v2769, %v2861
      %v2883 = vmul.f32 %v2770, %v2853
      %v2884 = vmul.f32 %v2771, %v2857
      %v2885 = vmul.f32 %v2772, %v2861
      %v2886 = vmul.f32 %v2773, %v2853
      %v2887 = vmul.f32 %v2774, %v2857
      %v2888 = vmul.f32 %v2775, %v2861
      %v2889 = vmul.f32 %v2776, %v2853
      %v2890 = vmul.f32 %v2777, %v2857
      %v2891 = vmul.f32 %v2778, %v2861
      %v2892 = vmul.f32 %v2779, %v2853
      %v2893 = vmul.f32 %v2780, %v2857
      %v2894 = vmul.f32 %v2781, %v2861
      %v2895 = vmul.f32 %v2782, %v2853
      %v2896 = vmul.f32 %v2783, %v2857
      %v2897 = vmul.f32 %v2784, %v2861
      %v2898 = vmul.f32 %v2785, %v2853
      %v2899 = vmul.f32 %v2786, %v2857
      %v2900 = vmul.f32 %v2787, %v2861
      %v2901 = vmul.f32 %v2788, %v2853
      %v2902 = vmul.f32 %v2789, %v2857
      %v2903 = vmul.f32 %v2790, %v2861
      %v2904 = vmul.f32 %v2791, %v2853
      %v2905 = vmul.f32 %v2792, %v2857
      %v2906 = vmul.f32 %v2793, %v2861
      %v2907 = vmul.f32 %v2794, %v2853
      %v2908 = vmul.f32 %v2795, %v2857
      %v2909 = vmul.f32 %v2796, %v2861
      %v2910 = vmul.f32 %v2797, %v2853
      %v2911 = vmul.f32 %v2798, %v2857
      %v2912 = vmul.f32 %v2799, %v2861
      %v2913 = vmul.f32 %v2800, %v2853
      %v2914 = vmul.f32 %v2801, %v2857
      %v2915 = vmul.f32 %v2802, %v2861
      %v2916 = vmul.f32 %v2803, %v2853
      %v2917 = vmul.f32 %v2804, %v2857
      %v2918 = vmul.f32 %v2805, %v2861
      %v2919 = vmul.f32 %v2806, %v2853
      %v2920 = vmul.f32 %v2807, %v2857
      %v2921 = vmul.f32 %v2808, %v2861
      %v2922 = vmul.f32 %v2809, %v2853
      %v2923 = vmul.f32 %v2810, %v2857
      %v2924 = vmul.f32 %v2811, %v2861
      %v2925 = vmul.f32 %v2812, %v2853
      %v2926 = vmul.f32 %v2813, %v2857
      %v2927 = vmul.f32 %v2814, %v2861
      %v2928 = vmul.f32 %v2815, %v2853
      %v2929 = vmul.f32 %v2816, %v2857
      %v2930 = vmul.f32 %v2817, %v2861
      %v2931 = vmul.f32 %v2818, %v2853
      %v2932 = vmul.f32 %v2819, %v2857
      %v2933 = vmul.f32 %v2820, %v2861
      %v2934 = vmul.f32 %v2821, %v2853
      %v2935 = vmul.f32 %v2822, %v2857
      %v2936 = vmul.f32 %v2823, %v2861
      %v2937 = vmul.f32 %v2824, %v2853
      %v2938 = vmul.f32 %v2825, %v2857
      %v2939 = vmul.f32 %v2826, %v2861
      %v2940 = vmul.f32 %v2827, %v2853
      %v2941 = vmul.f32 %v2828, %v2857
      %v2942 = vmul.f32 %v2829, %v2861
      %v2943 = vmul.f32 %v2830, %v2853
      %v2944 = vmul.f32 %v2831, %v2857
      %v2945 = vmul.f32 %v2832, %v2861
      %v2946 = vmul.f32 %v2833, %v2853
      %v2947 = vmul.f32 %v2834, %v2857
      %v2948 = vmul.f32 %v2835, %v2861
      %v2949 = vmul.f32 %v2836, %v2853
      %v2950 = vmul.f32 %v2837, %v2857
      %v2951 = vmul.f32 %v2838, %v2861
      %v2952 = vmul.f32 %v2839, %v2853
      %v2953 = vmul.f32 %v2840, %v2857
      %v2954 = vmul.f32 %v2841, %v2861
      %v2955 = vmul.f32 %v2842, %v2853
      %v2956 = vmul.f32 %v2843, %v2857
      %v2957 = vmul.f32 %v2844, %v2861
      %v2958 = vmul.f32 %v2845, %v2853
      %v2959 = vmul.f32 %v2846, %v2857
      %v2960 = vmul.f32 %v2847, %v2861
      %v2961 = vadd.f32 %v2865, %v2866
      %v2962 = vadd.f32 %v2961, %v2867
      %2963 = vadd.xlane.f32.xlu0 %v2962
      %v2964 = vpop.xlane.xlu0 %2963
      %v2965 = vadd.f32 %v2868, %v2869
      %v2966 = vadd.f32 %v2965, %v2870
      %2967 = vadd.xlane.f32.xlu0 %v2966
      %v2968 = vpop.xlane.xlu0 %2967
      %v2969 = vadd.f32 %v2871, %v2872
      %v2970 = vadd.f32 %v2969, %v2873
      %2971 = vadd.xlane.f32.xlu0 %v2970
      %v2972 = vpop.xlane.xlu0 %2971
      %v2973 = vadd.f32 %v2874, %v2875
      %v2974 = vadd.f32 %v2973, %v2876
      %2975 = vadd.xlane.f32.xlu0 %v2974
      %v2976 = vpop.xlane.xlu0 %2975
      %v2977 = vadd.f32 %v2877, %v2878
      %v2978 = vadd.f32 %v2977, %v2879
      %2979 = vadd.xlane.f32.xlu0 %v2978
      %v2980 = vpop.xlane.xlu0 %2979
      %v2981 = vadd.f32 %v2880, %v2881
      %v2982 = vadd.f32 %v2981, %v2882
      %2983 = vadd.xlane.f32.xlu0 %v2982
      %v2984 = vpop.xlane.xlu0 %2983
      %v2985 = vadd.f32 %v2883, %v2884
      %v2986 = vadd.f32 %v2985, %v2885
      %2987 = vadd.xlane.f32.xlu0 %v2986
      %v2988 = vpop.xlane.xlu0 %2987
      %v2989 = vadd.f32 %v2886, %v2887
      %v2990 = vadd.f32 %v2989, %v2888
      %2991 = vadd.xlane.f32.xlu0 %v2990
      %v2992 = vpop.xlane.xlu0 %2991
      %v2993 = vadd.f32 %v2889, %v2890
      %v2994 = vadd.f32 %v2993, %v2891
      %2995 = vadd.xlane.f32.xlu0 %v2994
      %v2996 = vpop.xlane.xlu0 %2995
      %v2997 = vadd.f32 %v2892, %v2893
      %v2998 = vadd.f32 %v2997, %v2894
      %2999 = vadd.xlane.f32.xlu0 %v2998
      %v3000 = vpop.xlane.xlu0 %2999
      %v3001 = vadd.f32 %v2895, %v2896
      %v3002 = vadd.f32 %v3001, %v2897
      %3003 = vadd.xlane.f32.xlu0 %v3002
      %v3004 = vpop.xlane.xlu0 %3003
      %v3005 = vadd.f32 %v2898, %v2899
      %v3006 = vadd.f32 %v3005, %v2900
      %3007 = vadd.xlane.f32.xlu0 %v3006
      %v3008 = vpop.xlane.xlu0 %3007
      %v3009 = vadd.f32 %v2901, %v2902
      %v3010 = vadd.f32 %v3009, %v2903
      %3011 = vadd.xlane.f32.xlu0 %v3010
      %v3012 = vpop.xlane.xlu0 %3011
      %v3013 = vadd.f32 %v2904, %v2905
      %v3014 = vadd.f32 %v3013, %v2906
      %3015 = vadd.xlane.f32.xlu0 %v3014
      %v3016 = vpop.xlane.xlu0 %3015
      %v3017 = vadd.f32 %v2907, %v2908
      %v3018 = vadd.f32 %v3017, %v2909
      %3019 = vadd.xlane.f32.xlu0 %v3018
      %v3020 = vpop.xlane.xlu0 %3019
      %v3021 = vadd.f32 %v2910, %v2911
      %v3022 = vadd.f32 %v3021, %v2912
      %3023 = vadd.xlane.f32.xlu0 %v3022
      %v3024 = vpop.xlane.xlu0 %3023
      %v3025 = vadd.f32 %v2913, %v2914
      %v3026 = vadd.f32 %v3025, %v2915
      %3027 = vadd.xlane.f32.xlu0 %v3026
      %v3028 = vpop.xlane.xlu0 %3027
      %v3029 = vadd.f32 %v2916, %v2917
      %v3030 = vadd.f32 %v3029, %v2918
      %3031 = vadd.xlane.f32.xlu0 %v3030
      %v3032 = vpop.xlane.xlu0 %3031
      %v3033 = vadd.f32 %v2919, %v2920
      %v3034 = vadd.f32 %v3033, %v2921
      %3035 = vadd.xlane.f32.xlu0 %v3034
      %v3036 = vpop.xlane.xlu0 %3035
      %v3037 = vadd.f32 %v2922, %v2923
      %v3038 = vadd.f32 %v3037, %v2924
      %3039 = vadd.xlane.f32.xlu0 %v3038
      %v3040 = vpop.xlane.xlu0 %3039
      %v3041 = vadd.f32 %v2925, %v2926
      %v3042 = vadd.f32 %v3041, %v2927
      %3043 = vadd.xlane.f32.xlu0 %v3042
      %v3044 = vpop.xlane.xlu0 %3043
      %v3045 = vadd.f32 %v2928, %v2929
      %v3046 = vadd.f32 %v3045, %v2930
      %3047 = vadd.xlane.f32.xlu0 %v3046
      %v3048 = vpop.xlane.xlu0 %3047
      %v3049 = vadd.f32 %v2931, %v2932
      %v3050 = vadd.f32 %v3049, %v2933
      %3051 = vadd.xlane.f32.xlu0 %v3050
      %v3052 = vpop.xlane.xlu0 %3051
      %v3053 = vadd.f32 %v2934, %v2935
      %v3054 = vadd.f32 %v3053, %v2936
      %3055 = vadd.xlane.f32.xlu0 %v3054
      %v3056 = vpop.xlane.xlu0 %3055
      %v3057 = vadd.f32 %v2937, %v2938
      %v3058 = vadd.f32 %v3057, %v2939
      %3059 = vadd.xlane.f32.xlu0 %v3058
      %v3060 = vpop.xlane.xlu0 %3059
      %v3061 = vadd.f32 %v2940, %v2941
      %v3062 = vadd.f32 %v3061, %v2942
      %3063 = vadd.xlane.f32.xlu0 %v3062
      %v3064 = vpop.xlane.xlu0 %3063
      %v3065 = vadd.f32 %v2943, %v2944
      %v3066 = vadd.f32 %v3065, %v2945
      %3067 = vadd.xlane.f32.xlu0 %v3066
      %v3068 = vpop.xlane.xlu0 %3067
      %v3069 = vadd.f32 %v2946, %v2947
      %v3070 = vadd.f32 %v3069, %v2948
      %3071 = vadd.xlane.f32.xlu0 %v3070
      %v3072 = vpop.xlane.xlu0 %3071
      %v3073 = vadd.f32 %v2949, %v2950
      %v3074 = vadd.f32 %v3073, %v2951
      %3075 = vadd.xlane.f32.xlu0 %v3074
      %v3076 = vpop.xlane.xlu0 %3075
      %v3077 = vadd.f32 %v2952, %v2953
      %v3078 = vadd.f32 %v3077, %v2954
      %3079 = vadd.xlane.f32.xlu0 %v3078
      %v3080 = vpop.xlane.xlu0 %3079
      %v3081 = vadd.f32 %v2955, %v2956
      %v3082 = vadd.f32 %v3081, %v2957
      %3083 = vadd.xlane.f32.xlu0 %v3082
      %v3084 = vpop.xlane.xlu0 %3083
      %v3085 = vadd.f32 %v2958, %v2959
      %v3086 = vadd.f32 %v3085, %v2960
      %3087 = vadd.xlane.f32.xlu0 %v3086
      %v3088 = vpop.xlane.xlu0 %3087
      %v3089 = vld [vmem:[%s7] sm:$0x1]
      %v3091 = vlaneseq
      %v3092 = vshrl.u32 %v3091, 7
      %v3093 = vsub.s32 0, %v3092
      %v3094 = vrot.slane %v3089, %v3093
      %v3096 = vadd.f32 %v2964, %v3094
      %v3097 = vadd.f32 %v2968, %v3094
      %v3098 = vadd.f32 %v2972, %v3094
      %v3099 = vadd.f32 %v2976, %v3094
      %v3100 = vadd.f32 %v2980, %v3094
      %v3101 = vadd.f32 %v2984, %v3094
      %v3102 = vadd.f32 %v2988, %v3094
      %v3103 = vadd.f32 %v2992, %v3094
      %v3104 = vadd.f32 %v2996, %v3094
      %v3105 = vadd.f32 %v3000, %v3094
      %v3106 = vadd.f32 %v3004, %v3094
      %v3107 = vadd.f32 %v3008, %v3094
      %v3108 = vadd.f32 %v3012, %v3094
      %v3109 = vadd.f32 %v3016, %v3094
      %v3110 = vadd.f32 %v3020, %v3094
      %v3111 = vadd.f32 %v3024, %v3094
      %v3112 = vadd.f32 %v3028, %v3094
      %v3113 = vadd.f32 %v3032, %v3094
      %v3114 = vadd.f32 %v3036, %v3094
      %v3115 = vadd.f32 %v3040, %v3094
      %v3116 = vadd.f32 %v3044, %v3094
      %v3117 = vadd.f32 %v3048, %v3094
      %v3118 = vadd.f32 %v3052, %v3094
      %v3119 = vadd.f32 %v3056, %v3094
      %v3120 = vadd.f32 %v3060, %v3094
      %v3121 = vadd.f32 %v3064, %v3094
      %v3122 = vadd.f32 %v3068, %v3094
      %v3123 = vadd.f32 %v3072, %v3094
      %v3124 = vadd.f32 %v3076, %v3094
      %v3125 = vadd.f32 %v3080, %v3094
      %v3126 = vadd.f32 %v3084, %v3094
      %v3127 = vadd.f32 %v3088, %v3094
      %s3128 = scalar_lea.vmem %s6, 1
      %v3129 = vld [vmem:[%s3128] ss:$2 sm:$0x7]
      %v3131 = vlaneseq
      %v3132 = vshrl.u32 %v3131, 7
      %v3133 = vsub.s32 0, %v3132
      %v3134 = vrot.slane %v3129, %v3133
      %v3135 = vlaneseq
      %v3136 = vshrl.u32 %v3135, 7
      %v3137 = vsub.s32 1, %v3136
      %v3138 = vrot.slane %v3129, %v3137
      %v3139 = vlaneseq
      %v3140 = vshrl.u32 %v3139, 7
      %v3141 = vsub.s32 2, %v3140
      %v3142 = vrot.slane %v3129, %v3141
      %v3146 = vmul.f32 %v2752, %v3134
      %v3147 = vmul.f32 %v2753, %v3138
      %v3148 = vmul.f32 %v2754, %v3142
      %v3149 = vmul.f32 %v2755, %v3134
      %v3150 = vmul.f32 %v2756, %v3138
      %v3151 = vmul.f32 %v2757, %v3142
      %v3152 = vmul.f32 %v2758, %v3134
      %v3153 = vmul.f32 %v2759, %v3138
      %v3154 = vmul.f32 %v2760, %v3142
      %v3155 = vmul.f32 %v2761, %v3134
      %v3156 = vmul.f32 %v2762, %v3138
      %v3157 = vmul.f32 %v2763, %v3142
      %v3158 = vmul.f32 %v2764, %v3134
      %v3159 = vmul.f32 %v2765, %v3138
      %v3160 = vmul.f32 %v2766, %v3142
      %v3161 = vmul.f32 %v2767, %v3134
      %v3162 = vmul.f32 %v2768, %v3138
      %v3163 = vmul.f32 %v2769, %v3142
      %v3164 = vmul.f32 %v2770, %v3134
      %v3165 = vmul.f32 %v2771, %v3138
      %v3166 = vmul.f32 %v2772, %v3142
      %v3167 = vmul.f32 %v2773, %v3134
      %v3168 = vmul.f32 %v2774, %v3138
      %v3169 = vmul.f32 %v2775, %v3142
      %v3170 = vmul.f32 %v2776, %v3134
      %v3171 = vmul.f32 %v2777, %v3138
      %v3172 = vmul.f32 %v2778, %v3142
      %v3173 = vmul.f32 %v2779, %v3134
      %v3174 = vmul.f32 %v2780, %v3138
      %v3175 = vmul.f32 %v2781, %v3142
      %v3176 = vmul.f32 %v2782, %v3134
      %v3177 = vmul.f32 %v2783, %v3138
      %v3178 = vmul.f32 %v2784, %v3142
      %v3179 = vmul.f32 %v2785, %v3134
      %v3180 = vmul.f32 %v2786, %v3138
      %v3181 = vmul.f32 %v2787, %v3142
      %v3182 = vmul.f32 %v2788, %v3134
      %v3183 = vmul.f32 %v2789, %v3138
      %v3184 = vmul.f32 %v2790, %v3142
      %v3185 = vmul.f32 %v2791, %v3134
      %v3186 = vmul.f32 %v2792, %v3138
      %v3187 = vmul.f32 %v2793, %v3142
      %v3188 = vmul.f32 %v2794, %v3134
      %v3189 = vmul.f32 %v2795, %v3138
      %v3190 = vmul.f32 %v2796, %v3142
      %v3191 = vmul.f32 %v2797, %v3134
      %v3192 = vmul.f32 %v2798, %v3138
      %v3193 = vmul.f32 %v2799, %v3142
      %v3194 = vmul.f32 %v2800, %v3134
      %v3195 = vmul.f32 %v2801, %v3138
      %v3196 = vmul.f32 %v2802, %v3142
      %v3197 = vmul.f32 %v2803, %v3134
      %v3198 = vmul.f32 %v2804, %v3138
      %v3199 = vmul.f32 %v2805, %v3142
      %v3200 = vmul.f32 %v2806, %v3134
      %v3201 = vmul.f32 %v2807, %v3138
      %v3202 = vmul.f32 %v2808, %v3142
      %v3203 = vmul.f32 %v2809, %v3134
      %v3204 = vmul.f32 %v2810, %v3138
      %v3205 = vmul.f32 %v2811, %v3142
      %v3206 = vmul.f32 %v2812, %v3134
      %v3207 = vmul.f32 %v2813, %v3138
      %v3208 = vmul.f32 %v2814, %v3142
      %v3209 = vmul.f32 %v2815, %v3134
      %v3210 = vmul.f32 %v2816, %v3138
      %v3211 = vmul.f32 %v2817, %v3142
      %v3212 = vmul.f32 %v2818, %v3134
      %v3213 = vmul.f32 %v2819, %v3138
      %v3214 = vmul.f32 %v2820, %v3142
      %v3215 = vmul.f32 %v2821, %v3134
      %v3216 = vmul.f32 %v2822, %v3138
      %v3217 = vmul.f32 %v2823, %v3142
      %v3218 = vmul.f32 %v2824, %v3134
      %v3219 = vmul.f32 %v2825, %v3138
      %v3220 = vmul.f32 %v2826, %v3142
      %v3221 = vmul.f32 %v2827, %v3134
      %v3222 = vmul.f32 %v2828, %v3138
      %v3223 = vmul.f32 %v2829, %v3142
      %v3224 = vmul.f32 %v2830, %v3134
      %v3225 = vmul.f32 %v2831, %v3138
      %v3226 = vmul.f32 %v2832, %v3142
      %v3227 = vmul.f32 %v2833, %v3134
      %v3228 = vmul.f32 %v2834, %v3138
      %v3229 = vmul.f32 %v2835, %v3142
      %v3230 = vmul.f32 %v2836, %v3134
      %v3231 = vmul.f32 %v2837, %v3138
      %v3232 = vmul.f32 %v2838, %v3142
      %v3233 = vmul.f32 %v2839, %v3134
      %v3234 = vmul.f32 %v2840, %v3138
      %v3235 = vmul.f32 %v2841, %v3142
      %v3236 = vmul.f32 %v2842, %v3134
      %v3237 = vmul.f32 %v2843, %v3138
      %v3238 = vmul.f32 %v2844, %v3142
      %v3239 = vmul.f32 %v2845, %v3134
      %v3240 = vmul.f32 %v2846, %v3138
      %v3241 = vmul.f32 %v2847, %v3142
      %v3242 = vadd.f32 %v3146, %v3147
      %v3243 = vadd.f32 %v3242, %v3148
      %3244 = vadd.xlane.f32.xlu0 %v3243
      %v3245 = vpop.xlane.xlu0 %3244
      %v3246 = vadd.f32 %v3149, %v3150
      %v3247 = vadd.f32 %v3246, %v3151
      %3248 = vadd.xlane.f32.xlu0 %v3247
      %v3249 = vpop.xlane.xlu0 %3248
      %v3250 = vadd.f32 %v3152, %v3153
      %v3251 = vadd.f32 %v3250, %v3154
      %3252 = vadd.xlane.f32.xlu0 %v3251
      %v3253 = vpop.xlane.xlu0 %3252
      %v3254 = vadd.f32 %v3155, %v3156
      %v3255 = vadd.f32 %v3254, %v3157
      %3256 = vadd.xlane.f32.xlu0 %v3255
      %v3257 = vpop.xlane.xlu0 %3256
      %v3258 = vadd.f32 %v3158, %v3159
      %v3259 = vadd.f32 %v3258, %v3160
      %3260 = vadd.xlane.f32.xlu0 %v3259
      %v3261 = vpop.xlane.xlu0 %3260
      %v3262 = vadd.f32 %v3161, %v3162
      %v3263 = vadd.f32 %v3262, %v3163
      %3264 = vadd.xlane.f32.xlu0 %v3263
      %v3265 = vpop.xlane.xlu0 %3264
      %v3266 = vadd.f32 %v3164, %v3165
      %v3267 = vadd.f32 %v3266, %v3166
      %3268 = vadd.xlane.f32.xlu0 %v3267
      %v3269 = vpop.xlane.xlu0 %3268
      %v3270 = vadd.f32 %v3167, %v3168
      %v3271 = vadd.f32 %v3270, %v3169
      %3272 = vadd.xlane.f32.xlu0 %v3271
      %v3273 = vpop.xlane.xlu0 %3272
      %v3274 = vadd.f32 %v3170, %v3171
      %v3275 = vadd.f32 %v3274, %v3172
      %3276 = vadd.xlane.f32.xlu0 %v3275
      %v3277 = vpop.xlane.xlu0 %3276
      %v3278 = vadd.f32 %v3173, %v3174
      %v3279 = vadd.f32 %v3278, %v3175
      %3280 = vadd.xlane.f32.xlu0 %v3279
      %v3281 = vpop.xlane.xlu0 %3280
      %v3282 = vadd.f32 %v3176, %v3177
      %v3283 = vadd.f32 %v3282, %v3178
      %3284 = vadd.xlane.f32.xlu0 %v3283
      %v3285 = vpop.xlane.xlu0 %3284
      %v3286 = vadd.f32 %v3179, %v3180
      %v3287 = vadd.f32 %v3286, %v3181
      %3288 = vadd.xlane.f32.xlu0 %v3287
      %v3289 = vpop.xlane.xlu0 %3288
      %v3290 = vadd.f32 %v3182, %v3183
      %v3291 = vadd.f32 %v3290, %v3184
      %3292 = vadd.xlane.f32.xlu0 %v3291
      %v3293 = vpop.xlane.xlu0 %3292
      %v3294 = vadd.f32 %v3185, %v3186
      %v3295 = vadd.f32 %v3294, %v3187
      %3296 = vadd.xlane.f32.xlu0 %v3295
      %v3297 = vpop.xlane.xlu0 %3296
      %v3298 = vadd.f32 %v3188, %v3189
      %v3299 = vadd.f32 %v3298, %v3190
      %3300 = vadd.xlane.f32.xlu0 %v3299
      %v3301 = vpop.xlane.xlu0 %3300
      %v3302 = vadd.f32 %v3191, %v3192
      %v3303 = vadd.f32 %v3302, %v3193
      %3304 = vadd.xlane.f32.xlu0 %v3303
      %v3305 = vpop.xlane.xlu0 %3304
      %v3306 = vadd.f32 %v3194, %v3195
      %v3307 = vadd.f32 %v3306, %v3196
      %3308 = vadd.xlane.f32.xlu0 %v3307
      %v3309 = vpop.xlane.xlu0 %3308
      %v3310 = vadd.f32 %v3197, %v3198
      %v3311 = vadd.f32 %v3310, %v3199
      %3312 = vadd.xlane.f32.xlu0 %v3311
      %v3313 = vpop.xlane.xlu0 %3312
      %v3314 = vadd.f32 %v3200, %v3201
      %v3315 = vadd.f32 %v3314, %v3202
      %3316 = vadd.xlane.f32.xlu0 %v3315
      %v3317 = vpop.xlane.xlu0 %3316
      %v3318 = vadd.f32 %v3203, %v3204
      %v3319 = vadd.f32 %v3318, %v3205
      %3320 = vadd.xlane.f32.xlu0 %v3319
      %v3321 = vpop.xlane.xlu0 %3320
      %v3322 = vadd.f32 %v3206, %v3207
      %v3323 = vadd.f32 %v3322, %v3208
      %3324 = vadd.xlane.f32.xlu0 %v3323
      %v3325 = vpop.xlane.xlu0 %3324
      %v3326 = vadd.f32 %v3209, %v3210
      %v3327 = vadd.f32 %v3326, %v3211
      %3328 = vadd.xlane.f32.xlu0 %v3327
      %v3329 = vpop.xlane.xlu0 %3328
      %v3330 = vadd.f32 %v3212, %v3213
      %v3331 = vadd.f32 %v3330, %v3214
      %3332 = vadd.xlane.f32.xlu0 %v3331
      %v3333 = vpop.xlane.xlu0 %3332
      %v3334 = vadd.f32 %v3215, %v3216
      %v3335 = vadd.f32 %v3334, %v3217
      %3336 = vadd.xlane.f32.xlu0 %v3335
      %v3337 = vpop.xlane.xlu0 %3336
      %v3338 = vadd.f32 %v3218, %v3219
      %v3339 = vadd.f32 %v3338, %v3220
      %3340 = vadd.xlane.f32.xlu0 %v3339
      %v3341 = vpop.xlane.xlu0 %3340
      %v3342 = vadd.f32 %v3221, %v3222
      %v3343 = vadd.f32 %v3342, %v3223
      %3344 = vadd.xlane.f32.xlu0 %v3343
      %v3345 = vpop.xlane.xlu0 %3344
      %v3346 = vadd.f32 %v3224, %v3225
      %v3347 = vadd.f32 %v3346, %v3226
      %3348 = vadd.xlane.f32.xlu0 %v3347
      %v3349 = vpop.xlane.xlu0 %3348
      %v3350 = vadd.f32 %v3227, %v3228
      %v3351 = vadd.f32 %v3350, %v3229
      %3352 = vadd.xlane.f32.xlu0 %v3351
      %v3353 = vpop.xlane.xlu0 %3352
      %v3354 = vadd.f32 %v3230, %v3231
      %v3355 = vadd.f32 %v3354, %v3232
      %3356 = vadd.xlane.f32.xlu0 %v3355
      %v3357 = vpop.xlane.xlu0 %3356
      %v3358 = vadd.f32 %v3233, %v3234
      %v3359 = vadd.f32 %v3358, %v3235
      %3360 = vadd.xlane.f32.xlu0 %v3359
      %v3361 = vpop.xlane.xlu0 %3360
      %v3362 = vadd.f32 %v3236, %v3237
      %v3363 = vadd.f32 %v3362, %v3238
      %3364 = vadd.xlane.f32.xlu0 %v3363
      %v3365 = vpop.xlane.xlu0 %3364
      %v3366 = vadd.f32 %v3239, %v3240
      %v3367 = vadd.f32 %v3366, %v3241
      %3368 = vadd.xlane.f32.xlu0 %v3367
      %v3369 = vpop.xlane.xlu0 %3368
      %v3370 = vadd.f32 %v3245, %v3094
      %v3371 = vadd.f32 %v3249, %v3094
      %v3372 = vadd.f32 %v3253, %v3094
      %v3373 = vadd.f32 %v3257, %v3094
      %v3374 = vadd.f32 %v3261, %v3094
      %v3375 = vadd.f32 %v3265, %v3094
      %v3376 = vadd.f32 %v3269, %v3094
      %v3377 = vadd.f32 %v3273, %v3094
      %v3378 = vadd.f32 %v3277, %v3094
      %v3379 = vadd.f32 %v3281, %v3094
      %v3380 = vadd.f32 %v3285, %v3094
      %v3381 = vadd.f32 %v3289, %v3094
      %v3382 = vadd.f32 %v3293, %v3094
      %v3383 = vadd.f32 %v3297, %v3094
      %v3384 = vadd.f32 %v3301, %v3094
      %v3385 = vadd.f32 %v3305, %v3094
      %v3386 = vadd.f32 %v3309, %v3094
      %v3387 = vadd.f32 %v3313, %v3094
      %v3388 = vadd.f32 %v3317, %v3094
      %v3389 = vadd.f32 %v3321, %v3094
      %v3390 = vadd.f32 %v3325, %v3094
      %v3391 = vadd.f32 %v3329, %v3094
      %v3392 = vadd.f32 %v3333, %v3094
      %v3393 = vadd.f32 %v3337, %v3094
      %v3394 = vadd.f32 %v3341, %v3094
      %v3395 = vadd.f32 %v3345, %v3094
      %v3396 = vadd.f32 %v3349, %v3094
      %v3397 = vadd.f32 %v3353, %v3094
      %v3398 = vadd.f32 %v3357, %v3094
      %v3399 = vadd.f32 %v3361, %v3094
      %v3400 = vadd.f32 %v3365, %v3094
      %v3401 = vadd.f32 %v3369, %v3094
      %3434 = vrot.lane.b32.xlu0 %v3096, 1
      %v3435 = vpop.permute.xlu0 %3434
      %3436 = vrot.lane.b32.xlu0 %v3097, 1
      %v3437 = vpop.permute.xlu0 %3436
      %3438 = vrot.lane.b32.xlu0 %v3098, 1
      %v3439 = vpop.permute.xlu0 %3438
      %3440 = vrot.lane.b32.xlu0 %v3099, 1
      %v3441 = vpop.permute.xlu0 %3440
      %3442 = vrot.lane.b32.xlu0 %v3100, 1
      %v3443 = vpop.permute.xlu0 %3442
      %3444 = vrot.lane.b32.xlu0 %v3101, 1
      %v3445 = vpop.permute.xlu0 %3444
      %3446 = vrot.lane.b32.xlu0 %v3102, 1
      %v3447 = vpop.permute.xlu0 %3446
      %3448 = vrot.lane.b32.xlu0 %v3103, 1
      %v3449 = vpop.permute.xlu0 %3448
      %3450 = vrot.lane.b32.xlu0 %v3104, 1
      %v3451 = vpop.permute.xlu0 %3450
      %3452 = vrot.lane.b32.xlu0 %v3105, 1
      %v3453 = vpop.permute.xlu0 %3452
      %3454 = vrot.lane.b32.xlu0 %v3106, 1
      %v3455 = vpop.permute.xlu0 %3454
      %3456 = vrot.lane.b32.xlu0 %v3107, 1
      %v3457 = vpop.permute.xlu0 %3456
      %3458 = vrot.lane.b32.xlu0 %v3108, 1
      %v3459 = vpop.permute.xlu0 %3458
      %3460 = vrot.lane.b32.xlu0 %v3109, 1
      %v3461 = vpop.permute.xlu0 %3460
      %3462 = vrot.lane.b32.xlu0 %v3110, 1
      %v3463 = vpop.permute.xlu0 %3462
      %3464 = vrot.lane.b32.xlu0 %v3111, 1
      %v3465 = vpop.permute.xlu0 %3464
      %3466 = vrot.lane.b32.xlu0 %v3112, 1
      %v3467 = vpop.permute.xlu0 %3466
      %3468 = vrot.lane.b32.xlu0 %v3113, 1
      %v3469 = vpop.permute.xlu0 %3468
      %3470 = vrot.lane.b32.xlu0 %v3114, 1
      %v3471 = vpop.permute.xlu0 %3470
      %3472 = vrot.lane.b32.xlu0 %v3115, 1
      %v3473 = vpop.permute.xlu0 %3472
      %3474 = vrot.lane.b32.xlu0 %v3116, 1
      %v3475 = vpop.permute.xlu0 %3474
      %3476 = vrot.lane.b32.xlu0 %v3117, 1
      %v3477 = vpop.permute.xlu0 %3476
      %3478 = vrot.lane.b32.xlu0 %v3118, 1
      %v3479 = vpop.permute.xlu0 %3478
      %3480 = vrot.lane.b32.xlu0 %v3119, 1
      %v3481 = vpop.permute.xlu0 %3480
      %3482 = vrot.lane.b32.xlu0 %v3120, 1
      %v3483 = vpop.permute.xlu0 %3482
      %3484 = vrot.lane.b32.xlu0 %v3121, 1
      %v3485 = vpop.permute.xlu0 %3484
      %3486 = vrot.lane.b32.xlu0 %v3122, 1
      %v3487 = vpop.permute.xlu0 %3486
      %3488 = vrot.lane.b32.xlu0 %v3123, 1
      %v3489 = vpop.permute.xlu0 %3488
      %3490 = vrot.lane.b32.xlu0 %v3124, 1
      %v3491 = vpop.permute.xlu0 %3490
      %3492 = vrot.lane.b32.xlu0 %v3125, 1
      %v3493 = vpop.permute.xlu0 %3492
      %3494 = vrot.lane.b32.xlu0 %v3126, 1
      %v3495 = vpop.permute.xlu0 %3494
      %3496 = vrot.lane.b32.xlu0 %v3127, 1
      %v3497 = vpop.permute.xlu0 %3496
      %v3530 = vsub.f32 %v3370, %v3435
      %v3531 = vsub.f32 %v3371, %v3437
      %v3532 = vsub.f32 %v3372, %v3439
      %v3533 = vsub.f32 %v3373, %v3441
      %v3534 = vsub.f32 %v3374, %v3443
      %v3535 = vsub.f32 %v3375, %v3445
      %v3536 = vsub.f32 %v3376, %v3447
      %v3537 = vsub.f32 %v3377, %v3449
      %v3538 = vsub.f32 %v3378, %v3451
      %v3539 = vsub.f32 %v3379, %v3453
      %v3540 = vsub.f32 %v3380, %v3455
      %v3541 = vsub.f32 %v3381, %v3457
      %v3542 = vsub.f32 %v3382, %v3459
      %v3543 = vsub.f32 %v3383, %v3461
      %v3544 = vsub.f32 %v3384, %v3463
      %v3545 = vsub.f32 %v3385, %v3465
      %v3546 = vsub.f32 %v3386, %v3467
      %v3547 = vsub.f32 %v3387, %v3469
      %v3548 = vsub.f32 %v3388, %v3471
      %v3549 = vsub.f32 %v3389, %v3473
      %v3550 = vsub.f32 %v3390, %v3475
      %v3551 = vsub.f32 %v3391, %v3477
      %v3552 = vsub.f32 %v3392, %v3479
      %v3553 = vsub.f32 %v3393, %v3481
      %v3554 = vsub.f32 %v3394, %v3483
      %v3555 = vsub.f32 %v3395, %v3485
      %v3556 = vsub.f32 %v3396, %v3487
      %v3557 = vsub.f32 %v3397, %v3489
      %v3558 = vsub.f32 %v3398, %v3491
      %v3559 = vsub.f32 %v3399, %v3493
      %v3560 = vsub.f32 %v3400, %v3495
      %v3561 = vsub.f32 %v3401, %v3497
      %v3562 = vmul.f32 %v3530, 1.442695
      %v3563 = vpow.pop %v3562
      %v3564 = vmul.f32 %v3531, 1.442695
      %v3565 = vpow.pop %v3564
      %v3566 = vmul.f32 %v3532, 1.442695
      %v3567 = vpow.pop %v3566
      %v3568 = vmul.f32 %v3533, 1.442695
      %v3569 = vpow.pop %v3568
      %v3570 = vmul.f32 %v3534, 1.442695
      %v3571 = vpow.pop %v3570
      %v3572 = vmul.f32 %v3535, 1.442695
      %v3573 = vpow.pop %v3572
      %v3574 = vmul.f32 %v3536, 1.442695
      %v3575 = vpow.pop %v3574
      %v3576 = vmul.f32 %v3537, 1.442695
      %v3577 = vpow.pop %v3576
      %v3578 = vmul.f32 %v3538, 1.442695
      %v3579 = vpow.pop %v3578
      %v3580 = vmul.f32 %v3539, 1.442695
      %v3581 = vpow.pop %v3580
      %v3582 = vmul.f32 %v3540, 1.442695
      %v3583 = vpow.pop %v3582
      %v3584 = vmul.f32 %v3541, 1.442695
      %v3585 = vpow.pop %v3584
      %v3586 = vmul.f32 %v3542, 1.442695
      %v3587 = vpow.pop %v3586
      %v3588 = vmul.f32 %v3543, 1.442695
      %v3589 = vpow.pop %v3588
      %v3590 = vmul.f32 %v3544, 1.442695
      %v3591 = vpow.pop %v3590
      %v3592 = vmul.f32 %v3545, 1.442695
      %v3593 = vpow.pop %v3592
      %v3594 = vmul.f32 %v3546, 1.442695
      %v3595 = vpow.pop %v3594
      %v3596 = vmul.f32 %v3547, 1.442695
      %v3597 = vpow.pop %v3596
      %v3598 = vmul.f32 %v3548, 1.442695
      %v3599 = vpow.pop %v3598
      %v3600 = vmul.f32 %v3549, 1.442695
      %v3601 = vpow.pop %v3600
      %v3602 = vmul.f32 %v3550, 1.442695
      %v3603 = vpow.pop %v3602
      %v3604 = vmul.f32 %v3551, 1.442695
      %v3605 = vpow.pop %v3604
      %v3606 = vmul.f32 %v3552, 1.442695
      %v3607 = vpow.pop %v3606
      %v3608 = vmul.f32 %v3553, 1.442695
      %v3609 = vpow.pop %v3608
      %v3610 = vmul.f32 %v3554, 1.442695
      %v3611 = vpow.pop %v3610
      %v3612 = vmul.f32 %v3555, 1.442695
      %v3613 = vpow.pop %v3612
      %v3614 = vmul.f32 %v3556, 1.442695
      %v3615 = vpow.pop %v3614
      %v3616 = vmul.f32 %v3557, 1.442695
      %v3617 = vpow.pop %v3616
      %v3618 = vmul.f32 %v3558, 1.442695
      %v3619 = vpow.pop %v3618
      %v3620 = vmul.f32 %v3559, 1.442695
      %v3621 = vpow.pop %v3620
      %v3622 = vmul.f32 %v3560, 1.442695
      %v3623 = vpow.pop %v3622
      %v3624 = vmul.f32 %v3561, 1.442695
      %v3625 = vpow.pop %v3624
      %v3626 = vadd.f32 %v3563, 1.0
      %v3627 = vadd.f32 %v3565, 1.0
      %v3628 = vadd.f32 %v3567, 1.0
      %v3629 = vadd.f32 %v3569, 1.0
      %v3630 = vadd.f32 %v3571, 1.0
      %v3631 = vadd.f32 %v3573, 1.0
      %v3632 = vadd.f32 %v3575, 1.0
      %v3633 = vadd.f32 %v3577, 1.0
      %v3634 = vadd.f32 %v3579, 1.0
      %v3635 = vadd.f32 %v3581, 1.0
      %v3636 = vadd.f32 %v3583, 1.0
      %v3637 = vadd.f32 %v3585, 1.0
      %v3638 = vadd.f32 %v3587, 1.0
      %v3639 = vadd.f32 %v3589, 1.0
      %v3640 = vadd.f32 %v3591, 1.0
      %v3641 = vadd.f32 %v3593, 1.0
      %v3642 = vadd.f32 %v3595, 1.0
      %v3643 = vadd.f32 %v3597, 1.0
      %v3644 = vadd.f32 %v3599, 1.0
      %v3645 = vadd.f32 %v3601, 1.0
      %v3646 = vadd.f32 %v3603, 1.0
      %v3647 = vadd.f32 %v3605, 1.0
      %v3648 = vadd.f32 %v3607, 1.0
      %v3649 = vadd.f32 %v3609, 1.0
      %v3650 = vadd.f32 %v3611, 1.0
      %v3651 = vadd.f32 %v3613, 1.0
      %v3652 = vadd.f32 %v3615, 1.0
      %v3653 = vadd.f32 %v3617, 1.0
      %v3654 = vadd.f32 %v3619, 1.0
      %v3655 = vadd.f32 %v3621, 1.0
      %v3656 = vadd.f32 %v3623, 1.0
      %v3657 = vadd.f32 %v3625, 1.0
      %v3658 = vrcp.pop %v3626
      %v3659 = vmul.f32 1.0, %v3658
      %v3660 = vrcp.pop %v3627
      %v3661 = vmul.f32 1.0, %v3660
      %v3662 = vrcp.pop %v3628
      %v3663 = vmul.f32 1.0, %v3662
      %v3664 = vrcp.pop %v3629
      %v3665 = vmul.f32 1.0, %v3664
      %v3666 = vrcp.pop %v3630
      %v3667 = vmul.f32 1.0, %v3666
      %v3668 = vrcp.pop %v3631
      %v3669 = vmul.f32 1.0, %v3668
      %v3670 = vrcp.pop %v3632
      %v3671 = vmul.f32 1.0, %v3670
      %v3672 = vrcp.pop %v3633
      %v3673 = vmul.f32 1.0, %v3672
      %v3674 = vrcp.pop %v3634
      %v3675 = vmul.f32 1.0, %v3674
      %v3676 = vrcp.pop %v3635
      %v3677 = vmul.f32 1.0, %v3676
      %v3678 = vrcp.pop %v3636
      %v3679 = vmul.f32 1.0, %v3678
      %v3680 = vrcp.pop %v3637
      %v3681 = vmul.f32 1.0, %v3680
      %v3682 = vrcp.pop %v3638
      %v3683 = vmul.f32 1.0, %v3682
      %v3684 = vrcp.pop %v3639
      %v3685 = vmul.f32 1.0, %v3684
      %v3686 = vrcp.pop %v3640
      %v3687 = vmul.f32 1.0, %v3686
      %v3688 = vrcp.pop %v3641
      %v3689 = vmul.f32 1.0, %v3688
      %v3690 = vrcp.pop %v3642
      %v3691 = vmul.f32 1.0, %v3690
      %v3692 = vrcp.pop %v3643
      %v3693 = vmul.f32 1.0, %v3692
      %v3694 = vrcp.pop %v3644
      %v3695 = vmul.f32 1.0, %v3694
      %v3696 = vrcp.pop %v3645
      %v3697 = vmul.f32 1.0, %v3696
      %v3698 = vrcp.pop %v3646
      %v3699 = vmul.f32 1.0, %v3698
      %v3700 = vrcp.pop %v3647
      %v3701 = vmul.f32 1.0, %v3700
      %v3702 = vrcp.pop %v3648
      %v3703 = vmul.f32 1.0, %v3702
      %v3704 = vrcp.pop %v3649
      %v3705 = vmul.f32 1.0, %v3704
      %v3706 = vrcp.pop %v3650
      %v3707 = vmul.f32 1.0, %v3706
      %v3708 = vrcp.pop %v3651
      %v3709 = vmul.f32 1.0, %v3708
      %v3710 = vrcp.pop %v3652
      %v3711 = vmul.f32 1.0, %v3710
      %v3712 = vrcp.pop %v3653
      %v3713 = vmul.f32 1.0, %v3712
      %v3714 = vrcp.pop %v3654
      %v3715 = vmul.f32 1.0, %v3714
      %v3716 = vrcp.pop %v3655
      %v3717 = vmul.f32 1.0, %v3716
      %v3718 = vrcp.pop %v3656
      %v3719 = vmul.f32 1.0, %v3718
      %v3720 = vrcp.pop %v3657
      %v3721 = vmul.f32 1.0, %v3720
      %v3722 = vsub.f32 1.0, %v3659
      %v3723 = vsub.f32 1.0, %v3661
      %v3724 = vsub.f32 1.0, %v3663
      %v3725 = vsub.f32 1.0, %v3665
      %v3726 = vsub.f32 1.0, %v3667
      %v3727 = vsub.f32 1.0, %v3669
      %v3728 = vsub.f32 1.0, %v3671
      %v3729 = vsub.f32 1.0, %v3673
      %v3730 = vsub.f32 1.0, %v3675
      %v3731 = vsub.f32 1.0, %v3677
      %v3732 = vsub.f32 1.0, %v3679
      %v3733 = vsub.f32 1.0, %v3681
      %v3734 = vsub.f32 1.0, %v3683
      %v3735 = vsub.f32 1.0, %v3685
      %v3736 = vsub.f32 1.0, %v3687
      %v3737 = vsub.f32 1.0, %v3689
      %v3738 = vsub.f32 1.0, %v3691
      %v3739 = vsub.f32 1.0, %v3693
      %v3740 = vsub.f32 1.0, %v3695
      %v3741 = vsub.f32 1.0, %v3697
      %v3742 = vsub.f32 1.0, %v3699
      %v3743 = vsub.f32 1.0, %v3701
      %v3744 = vsub.f32 1.0, %v3703
      %v3745 = vsub.f32 1.0, %v3705
      %v3746 = vsub.f32 1.0, %v3707
      %v3747 = vsub.f32 1.0, %v3709
      %v3748 = vsub.f32 1.0, %v3711
      %v3749 = vsub.f32 1.0, %v3713
      %v3750 = vsub.f32 1.0, %v3715
      %v3751 = vsub.f32 1.0, %v3717
      %v3752 = vsub.f32 1.0, %v3719
      %v3753 = vsub.f32 1.0, %v3721
      %3786 = vrot.lane.b32.xlu0 %v3659, 127
      %v3787 = vpop.permute.xlu0 %3786
      %3788 = vrot.lane.b32.xlu0 %v3661, 127
      %v3789 = vpop.permute.xlu0 %3788
      %3790 = vrot.lane.b32.xlu0 %v3663, 127
      %v3791 = vpop.permute.xlu0 %3790
      %3792 = vrot.lane.b32.xlu0 %v3665, 127
      %v3793 = vpop.permute.xlu0 %3792
      %3794 = vrot.lane.b32.xlu0 %v3667, 127
      %v3795 = vpop.permute.xlu0 %3794
      %3796 = vrot.lane.b32.xlu0 %v3669, 127
      %v3797 = vpop.permute.xlu0 %3796
      %3798 = vrot.lane.b32.xlu0 %v3671, 127
      %v3799 = vpop.permute.xlu0 %3798
      %3800 = vrot.lane.b32.xlu0 %v3673, 127
      %v3801 = vpop.permute.xlu0 %3800
      %3802 = vrot.lane.b32.xlu0 %v3675, 127
      %v3803 = vpop.permute.xlu0 %3802
      %3804 = vrot.lane.b32.xlu0 %v3677, 127
      %v3805 = vpop.permute.xlu0 %3804
      %3806 = vrot.lane.b32.xlu0 %v3679, 127
      %v3807 = vpop.permute.xlu0 %3806
      %3808 = vrot.lane.b32.xlu0 %v3681, 127
      %v3809 = vpop.permute.xlu0 %3808
      %3810 = vrot.lane.b32.xlu0 %v3683, 127
      %v3811 = vpop.permute.xlu0 %3810
      %3812 = vrot.lane.b32.xlu0 %v3685, 127
      %v3813 = vpop.permute.xlu0 %3812
      %3814 = vrot.lane.b32.xlu0 %v3687, 127
      %v3815 = vpop.permute.xlu0 %3814
      %3816 = vrot.lane.b32.xlu0 %v3689, 127
      %v3817 = vpop.permute.xlu0 %3816
      %3818 = vrot.lane.b32.xlu0 %v3691, 127
      %v3819 = vpop.permute.xlu0 %3818
      %3820 = vrot.lane.b32.xlu0 %v3693, 127
      %v3821 = vpop.permute.xlu0 %3820
      %3822 = vrot.lane.b32.xlu0 %v3695, 127
      %v3823 = vpop.permute.xlu0 %3822
      %3824 = vrot.lane.b32.xlu0 %v3697, 127
      %v3825 = vpop.permute.xlu0 %3824
      %3826 = vrot.lane.b32.xlu0 %v3699, 127
      %v3827 = vpop.permute.xlu0 %3826
      %3828 = vrot.lane.b32.xlu0 %v3701, 127
      %v3829 = vpop.permute.xlu0 %3828
      %3830 = vrot.lane.b32.xlu0 %v3703, 127
      %v3831 = vpop.permute.xlu0 %3830
      %3832 = vrot.lane.b32.xlu0 %v3705, 127
      %v3833 = vpop.permute.xlu0 %3832
      %3834 = vrot.lane.b32.xlu0 %v3707, 127
      %v3835 = vpop.permute.xlu0 %3834
      %3836 = vrot.lane.b32.xlu0 %v3709, 127
      %v3837 = vpop.permute.xlu0 %3836
      %3838 = vrot.lane.b32.xlu0 %v3711, 127
      %v3839 = vpop.permute.xlu0 %3838
      %3840 = vrot.lane.b32.xlu0 %v3713, 127
      %v3841 = vpop.permute.xlu0 %3840
      %3842 = vrot.lane.b32.xlu0 %v3715, 127
      %v3843 = vpop.permute.xlu0 %3842
      %3844 = vrot.lane.b32.xlu0 %v3717, 127
      %v3845 = vpop.permute.xlu0 %3844
      %3846 = vrot.lane.b32.xlu0 %v3719, 127
      %v3847 = vpop.permute.xlu0 %3846
      %3848 = vrot.lane.b32.xlu0 %v3721, 127
      %v3849 = vpop.permute.xlu0 %3848
      %vm3882 = vcmask 7168
      %v3883 = vsel %vm3882, %v3787, %v3722
      %v3884 = vsel %vm3882, %v3789, %v3723
      %v3885 = vsel %vm3882, %v3791, %v3724
      %v3886 = vsel %vm3882, %v3793, %v3725
      %v3887 = vsel %vm3882, %v3795, %v3726
      %v3888 = vsel %vm3882, %v3797, %v3727
      %v3889 = vsel %vm3882, %v3799, %v3728
      %v3890 = vsel %vm3882, %v3801, %v3729
      %v3891 = vsel %vm3882, %v3803, %v3730
      %v3892 = vsel %vm3882, %v3805, %v3731
      %v3893 = vsel %vm3882, %v3807, %v3732
      %v3894 = vsel %vm3882, %v3809, %v3733
      %v3895 = vsel %vm3882, %v3811, %v3734
      %v3896 = vsel %vm3882, %v3813, %v3735
      %v3897 = vsel %vm3882, %v3815, %v3736
      %v3898 = vsel %vm3882, %v3817, %v3737
      %v3899 = vsel %vm3882, %v3819, %v3738
      %v3900 = vsel %vm3882, %v3821, %v3739
      %v3901 = vsel %vm3882, %v3823, %v3740
      %v3902 = vsel %vm3882, %v3825, %v3741
      %v3903 = vsel %vm3882, %v3827, %v3742
      %v3904 = vsel %vm3882, %v3829, %v3743
      %v3905 = vsel %vm3882, %v3831, %v3744
      %v3906 = vsel %vm3882, %v3833, %v3745
      %v3907 = vsel %vm3882, %v3835, %v3746
      %v3908 = vsel %vm3882, %v3837, %v3747
      %v3909 = vsel %vm3882, %v3839, %v3748
      %v3910 = vsel %vm3882, %v3841, %v3749
      %v3911 = vsel %vm3882, %v3843, %v3750
      %v3912 = vsel %vm3882, %v3845, %v3751
      %v3913 = vsel %vm3882, %v3847, %v3752
      %v3914 = vsel %vm3882, %v3849, %v3753
      %vm3915 = vcmask 15360
      %3916 = vst.msk [vmem:[%s307] sm:$0xff] %vm3915, %v3883
      %3917 = vst.msk [vmem:[%s307 + $0x8] sm:$0xff] %vm3915, %v3884
      %3918 = vst.msk [vmem:[%s307 + $0x10] sm:$0xff] %vm3915, %v3885
      %3919 = vst.msk [vmem:[%s307 + $0x18] sm:$0xff] %vm3915, %v3886
      %3920 = vst.msk [vmem:[%s307 + $0x20] sm:$0xff] %vm3915, %v3887
      %3921 = vst.msk [vmem:[%s307 + $0x28] sm:$0xff] %vm3915, %v3888
      %3922 = vst.msk [vmem:[%s307 + $0x30] sm:$0xff] %vm3915, %v3889
      %3923 = vst.msk [vmem:[%s307 + $0x38] sm:$0xff] %vm3915, %v3890
      %3924 = vst.msk [vmem:[%s307 + $0x40] sm:$0xff] %vm3915, %v3891
      %3925 = vst.msk [vmem:[%s307 + $0x48] sm:$0xff] %vm3915, %v3892
      %3926 = vst.msk [vmem:[%s307 + $0x50] sm:$0xff] %vm3915, %v3893
      %3927 = vst.msk [vmem:[%s307 + $0x58] sm:$0xff] %vm3915, %v3894
      %3928 = vst.msk [vmem:[%s307 + $0x60] sm:$0xff] %vm3915, %v3895
      %3929 = vst.msk [vmem:[%s307 + $0x68] sm:$0xff] %vm3915, %v3896
      %3930 = vst.msk [vmem:[%s307 + $0x70] sm:$0xff] %vm3915, %v3897
      %3931 = vst.msk [vmem:[%s307 + $0x78] sm:$0xff] %vm3915, %v3898
      %3932 = vst.msk [vmem:[%s307 + $0x80] sm:$0xff] %vm3915, %v3899
      %3933 = vst.msk [vmem:[%s307 + $0x88] sm:$0xff] %vm3915, %v3900
      %3934 = vst.msk [vmem:[%s307 + $0x90] sm:$0xff] %vm3915, %v3901
      %3935 = vst.msk [vmem:[%s307 + $0x98] sm:$0xff] %vm3915, %v3902
      %3936 = vst.msk [vmem:[%s307 + $0xa0] sm:$0xff] %vm3915, %v3903
      %3937 = vst.msk [vmem:[%s307 + $0xa8] sm:$0xff] %vm3915, %v3904
      %3938 = vst.msk [vmem:[%s307 + $0xb0] sm:$0xff] %vm3915, %v3905
      %3939 = vst.msk [vmem:[%s307 + $0xb8] sm:$0xff] %vm3915, %v3906
      %3940 = vst.msk [vmem:[%s307 + $0xc0] sm:$0xff] %vm3915, %v3907
      %3941 = vst.msk [vmem:[%s307 + $0xc8] sm:$0xff] %vm3915, %v3908
      %3942 = vst.msk [vmem:[%s307 + $0xd0] sm:$0xff] %vm3915, %v3909
      %3943 = vst.msk [vmem:[%s307 + $0xd8] sm:$0xff] %vm3915, %v3910
      %3944 = vst.msk [vmem:[%s307 + $0xe0] sm:$0xff] %vm3915, %v3911
      %3945 = vst.msk [vmem:[%s307 + $0xe8] sm:$0xff] %vm3915, %v3912
      %3946 = vst.msk [vmem:[%s307 + $0xf0] sm:$0xff] %vm3915, %v3913
      %3947 = vst.msk [vmem:[%s307 + $0xf8] sm:$0xff] %vm3915, %v3914
      %s3948 = smul.u32 32, %s19
      %p3949 = scmp.lt.s32.totalorder %s3948, 63
      %s3950 = scalar_select %p3949, %s3948, 63
      %s3951 = smul.addr %s3950, 8
      %s3952 = scalar_lea.vmem %s8, %s3951
      // Predicated region
      $region53: #{tpu_custom_call.1} parent=51 // pred_check
        %p3953 = pneg %p210
      $region54: #{tpu_custom_call.1} parent=51 // pred_check_branch
        %3955 = sbr.rel (%p3953) target = $region56
      $region55: #{tpu_custom_call.1} parent=51 // pred_region
        %s3956 = smul.u32 32, %s19
      $region56: #{tpu_custom_call.1} parent=51 // pred_fallthru
        _
    $region52: #{tpu_custom_call.1} parent=5 // pred_fallthru
      _
    %p3957 = scmp.le.s32.totalorder 2, %s14
    // Predicated region
    $region57: #{tpu_custom_call.1} parent=5 // pred_check
      %p3958 = pneg %p3957
    $region58: #{tpu_custom_call.1} parent=5 // pred_check_branch
      %3960 = sbr.rel (%p3958) target = $region60
    $region59: #{tpu_custom_call.1} parent=5 // pred_region
      %s3961 = ssub.s32 %s14, 2
      // Predicated region
      $region61: #{tpu_custom_call.1} parent=59 // pred_check
        %p3962 = pneg %p216
      $region62: #{tpu_custom_call.1} parent=59 // pred_check_branch
        %3964 = sbr.rel (%p3962) target = $region64
      $region63: #{tpu_custom_call.1} parent=59 // pred_region
        %s3965 = smul.u32 32, %s20
        %p3966 = scmp.lt.s32.totalorder %s3965, 63
        %s3967 = scalar_select %p3966, %s3965, 63
        %s3968 = smul.addr %s3967, 8
        %s3969 = scalar_lea.vmem %s8, %s3968
      $region64: #{tpu_custom_call.1} parent=59 // pred_fallthru
        _
    $region60: #{tpu_custom_call.1} parent=5 // pred_fallthru
      _
  $region6: #{tpu_custom_call.1} parent=0 // loop_footer
    %s18 = sadd.s32 1, %s14
  $region7: #{tpu_custom_call.1} parent=0 // loop_footer_branch
    %13 = sbr.rel target = $region3
  $region8: #{tpu_custom_call.1} parent=0 // loop_exit
    _

</llo_original>
